<compile_context>
chip_gen: v7x
topology: tpu7x:2x2x1
jax: 0.10.0
libtpu: 0.0.40
codegen_flags: <defaults>
</compile_context>

<pallas_src>
import functools

import jax
import jax.numpy as jnp
import numpy as np
from jax.experimental import pallas as pl
from jax.experimental.pallas import tpu as pltpu

EPS = 1e-5
NEG_INF = -1e30


def _vmem_limit_bytes(frac=0.8, fallback=64 * 1024 * 1024):
    """Per-chip VMEM limit with headroom: ~102 MiB on v5e/v6e, ~51 MiB on v7x."""
    try:
        cap = getattr(pltpu.get_tpu_info(), "vmem_capacity_bytes", None) or fallback
    except Exception:
        cap = fallback
    return int(cap * frac)


# ---------------------------------------------------------------------------
# Shared numerics (used by kernels and the pure-JAX reference)
# ---------------------------------------------------------------------------
def _layernorm(x, scale, shift):
    mean = jnp.mean(x, axis=-1, keepdims=True)
    var = jnp.mean((x - mean) ** 2, axis=-1, keepdims=True)   # unbiased=False
    return scale * ((x - mean) / jnp.sqrt(var + EPS)) + shift


def _gelu(x):
    c = jnp.sqrt(jnp.float32(2.0 / jnp.pi))
    return 0.5 * x * (1.0 + jnp.tanh(c * (x + 0.044715 * (x * x * x))))


def _mm(a, b):
    """bf16 operands, f32 accumulation on the MXU."""
    return jnp.dot(a.astype(jnp.bfloat16), b.astype(jnp.bfloat16),
                   preferred_element_type=jnp.float32)


def _bmm(eq, a, b):
    """Batched bf16 einsum with f32 accumulation."""
    return jnp.einsum(eq, a.astype(jnp.bfloat16), b.astype(jnp.bfloat16),
                      preferred_element_type=jnp.float32)


# ---------------------------------------------------------------------------
# Pallas kernels
# ---------------------------------------------------------------------------
def gpt_blocks_kernel(x_ref, ln1s_ref, ln1b_ref, wqkv_ref, wo_ref, bo_ref,
                      ln2s_ref, ln2b_ref, w1_ref, b1_ref, w2_ref, b2_ref,
                      lnfs_ref, lnfb_ref,
                      xn_out_ref, resid_ref, bias_ref, *, num_heads):
    """All transformer layers + fused final LayerNorm.

    grid = (L,). The (B, T, D) residual stream lives in a VMEM scratch across
    the layer axis; each layer's weights are DMA'd exactly once and pipelined
    behind the previous layer's compute. The bf16 final-LN output is written
    only at the last layer."""
    layer = pl.program_id(0)
    n_layers = pl.num_programs(0)
    B, T, D = resid_ref.shape
    hd = D // num_heads

    @pl.when(layer == 0)
    def _():
        resid_ref[...] = x_ref[...]                 # load residual stream once
        row = jax.lax.broadcasted_iota(jnp.int32, (T, T), 0)
        col = jax.lax.broadcasted_iota(jnp.int32, (T, T), 1)
        bias_ref[...] = jnp.where(col > row, jnp.float32(NEG_INF),
                                  jnp.float32(0.0))  # additive causal bias

    x = resid_ref[...].reshape(B * T, D)            # batch folded into M

    # ---- attention sub-block (pre-norm) ----
    xn = _layernorm(x, ln1s_ref[0], ln1b_ref[0])
    qkv = _mm(xn, wqkv_ref[0])                      # fused QKV: (B*T, 3D)
    q = qkv[:, :D] * (hd ** -0.5)                   # fold 1/sqrt(hd) into q
    k = qkv[:, D:2 * D]
    v = qkv[:, 2 * D:]
    bias = bias_ref[...][None]                      # (1, T, T), hoisted

    ctx_rows = []
    for b in range(B):                              # B static & small
        sl = slice(b * T, (b + 1) * T)
        qb = q[sl].reshape(T, num_heads, hd).transpose(1, 0, 2)
        kb = k[sl].reshape(T, num_heads, hd).transpose(1, 0, 2)
        vb = v[sl].reshape(T, num_heads, hd).transpose(1, 0, 2)
        s = _bmm("htd,hsd->hts", qb, kb) + bias     # (H, T, T)
        s = s - jnp.max(s, axis=-1, keepdims=True)
        p = jnp.exp(s)                              # unnormalised probs
        denom = jnp.sum(p, axis=-1, keepdims=True)
        cb = _bmm("hts,hsd->htd", p, vb)
        cb = cb * pl.reciprocal(denom, approx=True)  # EUP reciprocal
        ctx_rows.append(cb.transpose(1, 0, 2).reshape(T, D))
    ctx = jnp.concatenate(ctx_rows, axis=0)         # (B*T, D)

    x = x + _mm(ctx, wo_ref[0]) + bo_ref[0]         # dropout identity

    # ---- feed-forward sub-block (pre-norm) ----
    xn2 = _layernorm(x, ln2s_ref[0], ln2b_ref[0])
    h1 = _gelu(_mm(xn2, w1_ref[0]) + b1_ref[0])
    x = x + _mm(h1, w2_ref[0]) + b2_ref[0]

    resid_ref[...] = x.reshape(B, T, D)

    @pl.when(layer == n_layers - 1)
    def _():
        xnf = _layernorm(x, lnfs_ref[...], lnfb_ref[...])   # fused final norm
        xn_out_ref[...] = xnf.reshape(B, T, D).astype(xn_out_ref.dtype)


def final_head_kernel(xn_ref, wh_ref, logits_ref):
    """out_head, tiled over the vocab. grid = (V // tile_v,). The bf16
    normalized activations (B*T, D) stay resident across all vocab tiles;
    w_head is streamed exactly once."""
    logits_ref[...] = jnp.dot(xn_ref[...], wh_ref[...],
                              preferred_element_type=jnp.float32)


# ---------------------------------------------------------------------------
# pallas_call wrappers
# ---------------------------------------------------------------------------
def run_transformer_stack(x, blk, lnf_s, lnf_b, num_heads):
    B, T, D = x.shape
    L = blk["wqkv"].shape[0]
    H4 = blk["w1"].shape[-1]

    def lvec(last):
        return pl.BlockSpec((1, 1, last), lambda l: (l, 0, 0))

    def lmat(r, c):
        return pl.BlockSpec((1, r, c), lambda l: (l, 0, 0))

    full = pl.BlockSpec((B, T, D), lambda l: (0, 0, 0))
    in_specs = [
        full,                                       # x (read at layer 0)
        lvec(D), lvec(D),                           # ln1 scale / shift
        lmat(D, 3 * D),                             # fused wqkv
        lmat(D, D), lvec(D),                        # wo, bo
        lvec(D), lvec(D),                           # ln2 scale / shift
        lmat(D, H4), lvec(H4),                      # w1, b1
        lmat(H4, D), lvec(D),                       # w2, b2
        pl.BlockSpec((1, D), lambda l: (0, 0)),     # final-norm scale
        pl.BlockSpec((1, D), lambda l: (0, 0)),     # final-norm shift
    ]
    return pl.pallas_call(
        functools.partial(gpt_blocks_kernel, num_heads=num_heads),
        out_shape=jax.ShapeDtypeStruct((B, T, D), jnp.bfloat16),
        grid=(L,),
        in_specs=in_specs,
        out_specs=full,
        scratch_shapes=[pltpu.VMEM((B, T, D), jnp.float32),   # residual stream
                        pltpu.VMEM((T, T), jnp.float32)],     # causal bias
        compiler_params=pltpu.CompilerParams(
            dimension_semantics=("arbitrary",),
            vmem_limit_bytes=_vmem_limit_bytes()),
    )(x, blk["ln1_s"], blk["ln1_b"], blk["wqkv"], blk["wo"], blk["bo"],
      blk["ln2_s"], blk["ln2_b"], blk["w1"], blk["b1"], blk["w2"], blk["b2"],
      lnf_s, lnf_b)


def _vocab_tile(V, cap=2048):
    """Largest lane-dense (multiple-of-128) tile <= cap dividing V."""
    if V % 128 != 0:
        return V
    t = min(cap, V)
    t -= t % 128
    while V % t:
        t -= 128
    return t


def run_final_head(xn2d, w_head):
    BT, D = xn2d.shape
    V = w_head.shape[1]
    tile_v = _vocab_tile(V)
    return pl.pallas_call(
        final_head_kernel,
        out_shape=jax.ShapeDtypeStruct((BT, V), jnp.float32),
        grid=(V // tile_v,),
        in_specs=[
            pl.BlockSpec((BT, D), lambda v: (0, 0)),       # xn resident
            pl.BlockSpec((D, tile_v), lambda v: (0, v)),   # w_head streamed once
        ],
        out_specs=pl.BlockSpec((BT, tile_v), lambda v: (0, v)),
        compiler_params=pltpu.CompilerParams(
            dimension_semantics=("parallel",),
            vmem_limit_bytes=_vmem_limit_bytes()),
    )(xn2d, w_head)


def gpt_forward(in_idx, params, num_heads):
    B, T = in_idx.shape
    D = params["tok_emb"].shape[1]
    assert D % num_heads == 0, "emb_dim must be divisible by n_heads"
    # TODO(synk): embedding gather left to XLA (data-dependent row gather).
    x = params["tok_emb"][in_idx] + params["pos_emb"][:T][None]
    xn = run_transformer_stack(x, params["blocks"], params["lnf_s"],
                               params["lnf_b"], num_heads)     # (B,T,D) bf16
    logits = run_final_head(xn.reshape(B * T, D), params["w_head"])
    return logits.reshape(B, T, -1)


# ---------------------------------------------------------------------------
# Parameters (layer-stacked, bf16 matmul weights) + pure-JAX reference
# ---------------------------------------------------------------------------
def init_params(key, cfg):
    D, V = cfg["emb_dim"], cfg["vocab_size"]
    C, L = cfg["context_length"], cfg["n_layers"]
    H = 4 * D

    def nrm(k, shape):
        return (0.02 * jax.random.normal(k, shape)).astype(jnp.float32)

    keys = jax.random.split(key, 7)
    return {
        "tok_emb": nrm(keys[0], (V, D)),
        "pos_emb": nrm(keys[1], (C, D)),
        "lnf_s": jnp.ones((1, D), jnp.float32),
        "lnf_b": jnp.zeros((1, D), jnp.float32),
        "w_head": nrm(keys[2], (D, V)).astype(jnp.bfloat16),
        "blocks": {
            "ln1_s": jnp.ones((L, 1, D), jnp.float32),
            "ln1_b": jnp.zeros((L, 1, D), jnp.float32),
            "wqkv": nrm(keys[3], (L, D, 3 * D)).astype(jnp.bfloat16),
            "wo": nrm(keys[4], (L, D, D)).astype(jnp.bfloat16),
            "bo": jnp.zeros((L, 1, D), jnp.float32),
            "ln2_s": jnp.ones((L, 1, D), jnp.float32),
            "ln2_b": jnp.zeros((L, 1, D), jnp.float32),
            "w1": nrm(keys[5], (L, D, H)).astype(jnp.bfloat16),
            "b1": jnp.zeros((L, 1, H), jnp.float32),
            "w2": nrm(keys[6], (L, H, D)).astype(jnp.bfloat16),
            "b2": jnp.zeros((L, 1, D), jnp.float32),
        },
    }


def gpt_reference(in_idx, params, num_heads):
    """Pure-JAX mirror of the PyTorch forward (bf16 matmuls, f32 accumulation,
    exact softmax normalisation)."""
    blk = params["blocks"]
    B, T = in_idx.shape
    x = params["tok_emb"][in_idx] + params["pos_emb"][:T][None]
    D = x.shape[-1]
    hd = D // num_heads
    L = blk["wqkv"].shape[0]
    mask = jnp.triu(jnp.ones((T, T), bool), k=1)
    for l in range(L):
        xn = _layernorm(x, blk["ln1_s"][l, 0], blk["ln1_b"][l, 0])
        qkv = _mm(xn, blk["wqkv"][l])
        q = (qkv[..., :D] * (hd ** -0.5)).reshape(B, T, num_heads, hd)
        k = qkv[..., D:2 * D].reshape(B, T, num_heads, hd)
        v = qkv[..., 2 * D:].reshape(B, T, num_heads, hd)
        q, k, v = (t.transpose(0, 2, 1, 3) for t in (q, k, v))
        s = _bmm("bhtd,bhsd->bhts", q, k)
        s = jnp.where(mask[None, None], NEG_INF, s)
        s = s - s.max(-1, keepdims=True)
        p = jnp.exp(s)
        w = p / p.sum(-1, keepdims=True)
        ctx = _bmm("bhts,bhsd->bhtd", w, v).transpose(0, 2, 1, 3).reshape(B, T, D)
        x = x + _mm(ctx, blk["wo"][l]) + blk["bo"][l, 0]
        xn2 = _layernorm(x, blk["ln2_s"][l, 0], blk["ln2_b"][l, 0])
        h1 = _gelu(_mm(xn2, blk["w1"][l]) + blk["b1"][l, 0])
        x = x + _mm(h1, blk["w2"][l]) + blk["b2"][l, 0]
    xn = _layernorm(x, params["lnf_s"][0], params["lnf_b"][0])
    return _mm(xn.astype(jnp.bfloat16).astype(jnp.float32), params["w_head"])


# ---------------------------------------------------------------------------
if __name__ == "__main__":
    cfg = {
        "vocab_size": 2048,
        "context_length": 8,
        "emb_dim": 32,
        "n_heads": 4,
        "n_layers": 2,
        "drop_rate": 0.0,   # dropout is identity
        "qkv_bias": False,
    }
    B, T = 2, cfg["context_length"]

    key = jax.random.PRNGKey(0)
    pkey, ikey = jax.random.split(key)
    params = init_params(pkey, cfg)
    in_idx = jax.random.randint(ikey, (B, T), 0, cfg["vocab_size"],
                                dtype=jnp.int32)

    logits = gpt_forward(in_idx, params, cfg["n_heads"])
    logits = jax.block_until_ready(logits)

    ref = gpt_reference(in_idx, params, cfg["n_heads"])
    np.testing.assert_allclose(np.asarray(logits), np.asarray(ref),
                               rtol=1e-2, atol=2e-3)
    assert logits.shape == (B, T, cfg["vocab_size"])
    print("KERNEL_OK")
</pallas_src>

<mosaic_0001>
module attributes {stable_mosaic.version = 11 : i64} {
  func.func @gpt_blocks_kernel(%arg0: i32, %arg1: memref<2x8x32xf32, #tpu.memory_space<vmem>>, %arg2: memref<1x1x32xf32, #tpu.memory_space<vmem>>, %arg3: memref<1x1x32xf32, #tpu.memory_space<vmem>>, %arg4: memref<1x32x96xbf16, #tpu.memory_space<vmem>>, %arg5: memref<1x32x32xbf16, #tpu.memory_space<vmem>>, %arg6: memref<1x1x32xf32, #tpu.memory_space<vmem>>, %arg7: memref<1x1x32xf32, #tpu.memory_space<vmem>>, %arg8: memref<1x1x32xf32, #tpu.memory_space<vmem>>, %arg9: memref<1x32x128xbf16, #tpu.memory_space<vmem>>, %arg10: memref<1x1x128xf32, #tpu.memory_space<vmem>>, %arg11: memref<1x128x32xbf16, #tpu.memory_space<vmem>>, %arg12: memref<1x1x32xf32, #tpu.memory_space<vmem>>, %arg13: memref<1x32xf32, #tpu.memory_space<vmem>>, %arg14: memref<1x32xf32, #tpu.memory_space<vmem>>, %arg15: memref<2x8x32xbf16, #tpu.memory_space<vmem>>, %arg16: memref<2x8x32xf32, #tpu.memory_space<vmem>>, %arg17: memref<8x8xf32, #tpu.memory_space<vmem>>) attributes {dimension_semantics = [#tpu.dimension_semantics<arbitrary>], iteration_bounds = array<i64: 2>, scalar_prefetch = 0 : i64, scratch_operands = 2 : i64, tpu.core_type = #tpu.core_type<tc>, window_params = [{pipeline_mode = #tpu.pipeline_mode<synchronous>, transform_indices = @transform_0, window_bounds = array<i64: 2, 8, 32>}, {transform_indices = @transform_1, window_bounds = array<i64: 1, 1, 32>}, {transform_indices = @transform_2, window_bounds = array<i64: 1, 1, 32>}, {transform_indices = @transform_3, window_bounds = array<i64: 1, 32, 96>}, {transform_indices = @transform_4, window_bounds = array<i64: 1, 32, 32>}, {transform_indices = @transform_5, window_bounds = array<i64: 1, 1, 32>}, {transform_indices = @transform_6, window_bounds = array<i64: 1, 1, 32>}, {transform_indices = @transform_7, window_bounds = array<i64: 1, 1, 32>}, {transform_indices = @transform_8, window_bounds = array<i64: 1, 32, 128>}, {transform_indices = @transform_9, window_bounds = array<i64: 1, 1, 128>}, {transform_indices = @transform_10, window_bounds = array<i64: 1, 128, 32>}, {transform_indices = @transform_11, window_bounds = array<i64: 1, 1, 32>}, {pipeline_mode = #tpu.pipeline_mode<synchronous>, transform_indices = @transform_12, window_bounds = array<i64: 1, 32>}, {pipeline_mode = #tpu.pipeline_mode<synchronous>, transform_indices = @transform_13, window_bounds = array<i64: 1, 32>}, {pipeline_mode = #tpu.pipeline_mode<synchronous>, transform_indices = @transform_14, window_bounds = array<i64: 2, 8, 32>}]} {
    %c0_i32 = arith.constant 0 : i32
    %0 = arith.cmpi eq, %arg0, %c0_i32 : i32
    %1 = arith.extui %0 : i1 to i32
    %c0_i32_0 = arith.constant 0 : i32
    %2 = arith.cmpi ne, %1, %c0_i32_0 : i32
    scf.if %2 {
      %c0_68 = arith.constant 0 : index
      %c0_69 = arith.constant 0 : index
      %c0_70 = arith.constant 0 : index
      %172 = vector.load %arg1[%c0_68, %c0_69, %c0_70] : memref<2x8x32xf32, #tpu.memory_space<vmem>>, vector<2x8x32xf32>
      %c0_71 = arith.constant 0 : index
      %c0_72 = arith.constant 0 : index
      %c0_73 = arith.constant 0 : index
      %173 = vector.load %arg16[%c0_71, %c0_72, %c0_73] : memref<2x8x32xf32, #tpu.memory_space<vmem>>, vector<2x8x32xf32>
      tpu.vector_store %arg16[%c0_71, %c0_72, %c0_73], %172 {strides = array<i32>} : memref<2x8x32xf32, #tpu.memory_space<vmem>>, vector<2x8x32xf32>,
      %174 = tpu.iota {dimensions = array<i32: 0>} : vector<8x8xi32>
      %175 = tpu.iota {dimensions = array<i32: 1>} : vector<8x8xi32>
      %176 = arith.cmpi sgt, %175, %174 : vector<8x8xi32>
      %cst_74 = arith.constant -1.000000e+30 : f32
      %cst_75 = arith.constant 0.000000e+00 : f32
      %177 = vector.broadcast %cst_74 : f32 to vector<8x8xf32>
      %178 = vector.broadcast %cst_75 : f32 to vector<8x8xf32>
      %179 = arith.select %176, %177, %178 : vector<8x8xi1>, vector<8x8xf32>
      %c0_76 = arith.constant 0 : index
      %c0_77 = arith.constant 0 : index
      %180 = vector.load %arg17[%c0_76, %c0_77] : memref<8x8xf32, #tpu.memory_space<vmem>>, vector<8x8xf32>
      tpu.vector_store %arg17[%c0_76, %c0_77], %179 {strides = array<i32>} : memref<8x8xf32, #tpu.memory_space<vmem>>, vector<8x8xf32>,
    } else {
    }
    %c0 = arith.constant 0 : index
    %c0_1 = arith.constant 0 : index
    %c0_2 = arith.constant 0 : index
    %3 = vector.load %arg16[%c0, %c0_1, %c0_2] : memref<2x8x32xf32, #tpu.memory_space<vmem>>, vector<2x8x32xf32>
    %4 = vector.shape_cast %3 : vector<2x8x32xf32> to vector<16x32xf32>
    %c0_3 = arith.constant 0 : index
    %c0_4 = arith.constant 0 : index
    %c0_5 = arith.constant 0 : index
    %5 = vector.load %arg2[%c0_3, %c0_4, %c0_5] : memref<1x1x32xf32, #tpu.memory_space<vmem>>, vector<1x1x32xf32>
    %6 = vector.shape_cast %5 : vector<1x1x32xf32> to vector<1x32xf32>
    %c0_6 = arith.constant 0 : index
    %c0_7 = arith.constant 0 : index
    %c0_8 = arith.constant 0 : index
    %7 = vector.load %arg3[%c0_6, %c0_7, %c0_8] : memref<1x1x32xf32, #tpu.memory_space<vmem>>, vector<1x1x32xf32>
    %8 = vector.shape_cast %7 : vector<1x1x32xf32> to vector<1x32xf32>
    %cst = arith.constant dense<0.000000e+00> : vector<16xf32>
    %9 = vector.multi_reduction <add>, %4, %cst [1] : vector<16x32xf32> to vector<16xf32>
    %10 = vector.shape_cast %9 : vector<16xf32> to vector<16x1xf32>
    %cst_9 = arith.constant 3.200000e+01 : f32
    %11 = vector.broadcast %cst_9 : f32 to vector<16x1xf32>
    %12 = arith.divf %10, %11 : vector<16x1xf32>
    %13 = vector.broadcast %12 : vector<16x1xf32> to vector<16x32xf32>
    %14 = arith.subf %4, %13 : vector<16x32xf32>
    %15 = arith.mulf %14, %14 : vector<16x32xf32>
    %cst_10 = arith.constant dense<0.000000e+00> : vector<16xf32>
    %16 = vector.multi_reduction <add>, %15, %cst_10 [1] : vector<16x32xf32> to vector<16xf32>
    %17 = vector.shape_cast %16 : vector<16xf32> to vector<16x1xf32>
    %cst_11 = arith.constant 3.200000e+01 : f32
    %18 = vector.broadcast %cst_11 : f32 to vector<16x1xf32>
    %19 = arith.divf %17, %18 : vector<16x1xf32>
    %20 = vector.broadcast %12 : vector<16x1xf32> to vector<16x32xf32>
    %21 = arith.subf %4, %20 : vector<16x32xf32>
    %cst_12 = arith.constant 9.99999974E-6 : f32
    %22 = vector.broadcast %cst_12 : f32 to vector<16x1xf32>
    %23 = arith.addf %19, %22 : vector<16x1xf32>
    %24 = math.sqrt %23 : vector<16x1xf32>
    %25 = vector.broadcast %24 : vector<16x1xf32> to vector<16x32xf32>
    %26 = arith.divf %21, %25 : vector<16x32xf32>
    %27 = vector.broadcast %6 : vector<1x32xf32> to vector<16x32xf32>
    %28 = arith.mulf %27, %26 : vector<16x32xf32>
    %29 = vector.broadcast %8 : vector<1x32xf32> to vector<16x32xf32>
    %30 = arith.addf %28, %29 : vector<16x32xf32>
    %c0_13 = arith.constant 0 : index
    %c0_14 = arith.constant 0 : index
    %c0_15 = arith.constant 0 : index
    %31 = vector.load %arg4[%c0_13, %c0_14, %c0_15] : memref<1x32x96xbf16, #tpu.memory_space<vmem>>, vector<1x32x96xbf16>
    %32 = vector.shape_cast %31 : vector<1x32x96xbf16> to vector<32x96xbf16>
    %33 = arith.truncf %30 : vector<16x32xf32> to vector<16x32xbf16>
    %cst_16 = arith.constant dense<0.000000e+00> : vector<16x96xf32>
    %34 = tpu.matmul %33, %32, %cst_16 {dimension_numbers = #tpu.dot_dimension_numbers<[1], [0], [0], [1], [0, 0, 1, 1], [], []>} : vector<16x32xbf16>, vector<32x96xbf16>, vector<16x96xf32> -> vector<16x96xf32>
    %35 = vector.extract_strided_slice %34 {offsets = [0, 0], sizes = [16, 32], strides = [1, 1]} : vector<16x96xf32> to vector<16x32xf32>
    %cst_17 = arith.constant 0.353553385 : f32
    %36 = vector.broadcast %cst_17 : f32 to vector<16x32xf32>
    %37 = arith.mulf %35, %36 : vector<16x32xf32>
    %38 = vector.extract_strided_slice %34 {offsets = [0, 32], sizes = [16, 32], strides = [1, 1]} : vector<16x96xf32> to vector<16x32xf32>
    %39 = vector.extract_strided_slice %34 {offsets = [0, 64], sizes = [16, 32], strides = [1, 1]} : vector<16x96xf32> to vector<16x32xf32>
    %c0_18 = arith.constant 0 : index
    %c0_19 = arith.constant 0 : index
    %40 = vector.load %arg17[%c0_18, %c0_19] : memref<8x8xf32, #tpu.memory_space<vmem>>, vector<8x8xf32>
    %41 = vector.shape_cast %40 : vector<8x8xf32> to vector<1x8x8xf32>
    %42 = vector.extract_strided_slice %37 {offsets = [0, 0], sizes = [8, 32], strides = [1, 1]} : vector<16x32xf32> to vector<8x32xf32>
    %43 = vector.shape_cast %42 : vector<8x32xf32> to vector<8x4x8xf32>
    %44 = tpu.transpose %43, [1, 0, 2] : vector<8x4x8xf32> -> vector<4x8x8xf32>
    %45 = vector.extract_strided_slice %38 {offsets = [0, 0], sizes = [8, 32], strides = [1, 1]} : vector<16x32xf32> to vector<8x32xf32>
    %46 = vector.shape_cast %45 : vector<8x32xf32> to vector<8x4x8xf32>
    %47 = tpu.transpose %46, [1, 0, 2] : vector<8x4x8xf32> -> vector<4x8x8xf32>
    %48 = vector.extract_strided_slice %39 {offsets = [0, 0], sizes = [8, 32], strides = [1, 1]} : vector<16x32xf32> to vector<8x32xf32>
    %49 = vector.shape_cast %48 : vector<8x32xf32> to vector<8x4x8xf32>
    %50 = tpu.transpose %49, [1, 0, 2] : vector<8x4x8xf32> -> vector<4x8x8xf32>
    %51 = arith.truncf %44 : vector<4x8x8xf32> to vector<4x8x8xbf16>
    %52 = arith.truncf %47 : vector<4x8x8xf32> to vector<4x8x8xbf16>
    "tpu.trace_start"() <{level = 10 : i32, message = "htd,hsd->hts"}> : () -> ()
    %cst_20 = arith.constant dense<0.000000e+00> : vector<4x8x8xf32>
    %53 = tpu.matmul %51, %52, %cst_20 {dimension_numbers = #tpu.dot_dimension_numbers<[2], [2], [1], [1], [0, 0, 0, 1, 1, 1], [0], [0]>} : vector<4x8x8xbf16>, vector<4x8x8xbf16>, vector<4x8x8xf32> -> vector<4x8x8xf32>
    "tpu.trace_stop"() : () -> ()
    %54 = vector.broadcast %41 : vector<1x8x8xf32> to vector<4x8x8xf32>
    %55 = arith.addf %53, %54 : vector<4x8x8xf32>
    %cst_21 = arith.constant dense<0xFF800000> : vector<4x8xf32>
    %56 = vector.multi_reduction <maximumf>, %55, %cst_21 [2] : vector<4x8x8xf32> to vector<4x8xf32>
    %57 = vector.shape_cast %56 : vector<4x8xf32> to vector<4x8x1xf32>
    %58 = vector.broadcast %57 : vector<4x8x1xf32> to vector<4x8x8xf32>
    %59 = arith.subf %55, %58 : vector<4x8x8xf32>
    %60 = math.exp %59 : vector<4x8x8xf32>
    %cst_22 = arith.constant dense<0.000000e+00> : vector<4x8xf32>
    %61 = vector.multi_reduction <add>, %60, %cst_22 [2] : vector<4x8x8xf32> to vector<4x8xf32>
    %62 = vector.shape_cast %61 : vector<4x8xf32> to vector<4x8x1xf32>
    %63 = arith.truncf %60 : vector<4x8x8xf32> to vector<4x8x8xbf16>
    %64 = arith.truncf %50 : vector<4x8x8xf32> to vector<4x8x8xbf16>
    "tpu.trace_start"() <{level = 10 : i32, message = "hts,hsd->htd"}> : () -> ()
    %cst_23 = arith.constant dense<0.000000e+00> : vector<4x8x8xf32>
    %65 = tpu.matmul %63, %64, %cst_23 {dimension_numbers = #tpu.dot_dimension_numbers<[2], [1], [1], [2], [0, 0, 0, 1, 1, 2], [0], [0]>} : vector<4x8x8xbf16>, vector<4x8x8xbf16>, vector<4x8x8xf32> -> vector<4x8x8xf32>
    "tpu.trace_stop"() : () -> ()
    %66 = tpu.reciprocal %62 {approx = true} : vector<4x8x1xf32> -> vector<4x8x1xf32>
    %67 = vector.broadcast %66 : vector<4x8x1xf32> to vector<4x8x8xf32>
    %68 = arith.mulf %65, %67 : vector<4x8x8xf32>
    %69 = tpu.transpose %68, [1, 0, 2] : vector<4x8x8xf32> -> vector<8x4x8xf32>
    %70 = vector.shape_cast %69 : vector<8x4x8xf32> to vector<8x32xf32>
    %71 = vector.extract_strided_slice %37 {offsets = [8, 0], sizes = [8, 32], strides = [1, 1]} : vector<16x32xf32> to vector<8x32xf32>
    %72 = vector.shape_cast %71 : vector<8x32xf32> to vector<8x4x8xf32>
    %73 = tpu.transpose %72, [1, 0, 2] : vector<8x4x8xf32> -> vector<4x8x8xf32>
    %74 = vector.extract_strided_slice %38 {offsets = [8, 0], sizes = [8, 32], strides = [1, 1]} : vector<16x32xf32> to vector<8x32xf32>
    %75 = vector.shape_cast %74 : vector<8x32xf32> to vector<8x4x8xf32>
    %76 = tpu.transpose %75, [1, 0, 2] : vector<8x4x8xf32> -> vector<4x8x8xf32>
    %77 = vector.extract_strided_slice %39 {offsets = [8, 0], sizes = [8, 32], strides = [1, 1]} : vector<16x32xf32> to vector<8x32xf32>
    %78 = vector.shape_cast %77 : vector<8x32xf32> to vector<8x4x8xf32>
    %79 = tpu.transpose %78, [1, 0, 2] : vector<8x4x8xf32> -> vector<4x8x8xf32>
    %80 = arith.truncf %73 : vector<4x8x8xf32> to vector<4x8x8xbf16>
    %81 = arith.truncf %76 : vector<4x8x8xf32> to vector<4x8x8xbf16>
    "tpu.trace_start"() <{level = 10 : i32, message = "htd,hsd->hts"}> : () -> ()
    %cst_24 = arith.constant dense<0.000000e+00> : vector<4x8x8xf32>
    %82 = tpu.matmul %80, %81, %cst_24 {dimension_numbers = #tpu.dot_dimension_numbers<[2], [2], [1], [1], [0, 0, 0, 1, 1, 1], [0], [0]>} : vector<4x8x8xbf16>, vector<4x8x8xbf16>, vector<4x8x8xf32> -> vector<4x8x8xf32>
    "tpu.trace_stop"() : () -> ()
    %83 = vector.broadcast %41 : vector<1x8x8xf32> to vector<4x8x8xf32>
    %84 = arith.addf %82, %83 : vector<4x8x8xf32>
    %cst_25 = arith.constant dense<0xFF800000> : vector<4x8xf32>
    %85 = vector.multi_reduction <maximumf>, %84, %cst_25 [2] : vector<4x8x8xf32> to vector<4x8xf32>
    %86 = vector.shape_cast %85 : vector<4x8xf32> to vector<4x8x1xf32>
    %87 = vector.broadcast %86 : vector<4x8x1xf32> to vector<4x8x8xf32>
    %88 = arith.subf %84, %87 : vector<4x8x8xf32>
    %89 = math.exp %88 : vector<4x8x8xf32>
    %cst_26 = arith.constant dense<0.000000e+00> : vector<4x8xf32>
    %90 = vector.multi_reduction <add>, %89, %cst_26 [2] : vector<4x8x8xf32> to vector<4x8xf32>
    %91 = vector.shape_cast %90 : vector<4x8xf32> to vector<4x8x1xf32>
    %92 = arith.truncf %89 : vector<4x8x8xf32> to vector<4x8x8xbf16>
    %93 = arith.truncf %79 : vector<4x8x8xf32> to vector<4x8x8xbf16>
    "tpu.trace_start"() <{level = 10 : i32, message = "hts,hsd->htd"}> : () -> ()
    %cst_27 = arith.constant dense<0.000000e+00> : vector<4x8x8xf32>
    %94 = tpu.matmul %92, %93, %cst_27 {dimension_numbers = #tpu.dot_dimension_numbers<[2], [1], [1], [2], [0, 0, 0, 1, 1, 2], [0], [0]>} : vector<4x8x8xbf16>, vector<4x8x8xbf16>, vector<4x8x8xf32> -> vector<4x8x8xf32>
    "tpu.trace_stop"() : () -> ()
    %95 = tpu.reciprocal %91 {approx = true} : vector<4x8x1xf32> -> vector<4x8x1xf32>
    %96 = vector.broadcast %95 : vector<4x8x1xf32> to vector<4x8x8xf32>
    %97 = arith.mulf %94, %96 : vector<4x8x8xf32>
    %98 = tpu.transpose %97, [1, 0, 2] : vector<4x8x8xf32> -> vector<8x4x8xf32>
    %99 = vector.shape_cast %98 : vector<8x4x8xf32> to vector<8x32xf32>
    %100 = tpu.concatenate %70, %99 in 0 : vector<8x32xf32>, vector<8x32xf32> -> vector<16x32xf32>
    %c0_28 = arith.constant 0 : index
    %c0_29 = arith.constant 0 : index
    %c0_30 = arith.constant 0 : index
    %101 = vector.load %arg5[%c0_28, %c0_29, %c0_30] : memref<1x32x32xbf16, #tpu.memory_space<vmem>>, vector<1x32x32xbf16>
    %102 = vector.shape_cast %101 : vector<1x32x32xbf16> to vector<32x32xbf16>
    %103 = arith.truncf %100 : vector<16x32xf32> to vector<16x32xbf16>
    %cst_31 = arith.constant dense<0.000000e+00> : vector<16x32xf32>
    %104 = tpu.matmul %103, %102, %cst_31 {dimension_numbers = #tpu.dot_dimension_numbers<[1], [0], [0], [1], [0, 0, 1, 1], [], []>} : vector<16x32xbf16>, vector<32x32xbf16>, vector<16x32xf32> -> vector<16x32xf32>
    %105 = arith.addf %4, %104 : vector<16x32xf32>
    %c0_32 = arith.constant 0 : index
    %c0_33 = arith.constant 0 : index
    %c0_34 = arith.constant 0 : index
    %106 = vector.load %arg6[%c0_32, %c0_33, %c0_34] : memref<1x1x32xf32, #tpu.memory_space<vmem>>, vector<1x1x32xf32>
    %107 = vector.shape_cast %106 : vector<1x1x32xf32> to vector<1x32xf32>
    %108 = vector.broadcast %107 : vector<1x32xf32> to vector<16x32xf32>
    %109 = arith.addf %105, %108 : vector<16x32xf32>
    %c0_35 = arith.constant 0 : index
    %c0_36 = arith.constant 0 : index
    %c0_37 = arith.constant 0 : index
    %110 = vector.load %arg7[%c0_35, %c0_36, %c0_37] : memref<1x1x32xf32, #tpu.memory_space<vmem>>, vector<1x1x32xf32>
    %111 = vector.shape_cast %110 : vector<1x1x32xf32> to vector<1x32xf32>
    %c0_38 = arith.constant 0 : index
    %c0_39 = arith.constant 0 : index
    %c0_40 = arith.constant 0 : index
    %112 = vector.load %arg8[%c0_38, %c0_39, %c0_40] : memref<1x1x32xf32, #tpu.memory_space<vmem>>, vector<1x1x32xf32>
    %113 = vector.shape_cast %112 : vector<1x1x32xf32> to vector<1x32xf32>
    %cst_41 = arith.constant dense<0.000000e+00> : vector<16xf32>
    %114 = vector.multi_reduction <add>, %109, %cst_41 [1] : vector<16x32xf32> to vector<16xf32>
    %115 = vector.shape_cast %114 : vector<16xf32> to vector<16x1xf32>
    %cst_42 = arith.constant 3.200000e+01 : f32
    %116 = vector.broadcast %cst_42 : f32 to vector<16x1xf32>
    %117 = arith.divf %115, %116 : vector<16x1xf32>
    %118 = vector.broadcast %117 : vector<16x1xf32> to vector<16x32xf32>
    %119 = arith.subf %109, %118 : vector<16x32xf32>
    %120 = arith.mulf %119, %119 : vector<16x32xf32>
    %cst_43 = arith.constant dense<0.000000e+00> : vector<16xf32>
    %121 = vector.multi_reduction <add>, %120, %cst_43 [1] : vector<16x32xf32> to vector<16xf32>
    %122 = vector.shape_cast %121 : vector<16xf32> to vector<16x1xf32>
    %cst_44 = arith.constant 3.200000e+01 : f32
    %123 = vector.broadcast %cst_44 : f32 to vector<16x1xf32>
    %124 = arith.divf %122, %123 : vector<16x1xf32>
    %125 = vector.broadcast %117 : vector<16x1xf32> to vector<16x32xf32>
    %126 = arith.subf %109, %125 : vector<16x32xf32>
    %cst_45 = arith.constant 9.99999974E-6 : f32
    %127 = vector.broadcast %cst_45 : f32 to vector<16x1xf32>
    %128 = arith.addf %124, %127 : vector<16x1xf32>
    %129 = math.sqrt %128 : vector<16x1xf32>
    %130 = vector.broadcast %129 : vector<16x1xf32> to vector<16x32xf32>
    %131 = arith.divf %126, %130 : vector<16x32xf32>
    %132 = vector.broadcast %111 : vector<1x32xf32> to vector<16x32xf32>
    %133 = arith.mulf %132, %131 : vector<16x32xf32>
    %134 = vector.broadcast %113 : vector<1x32xf32> to vector<16x32xf32>
    %135 = arith.addf %133, %134 : vector<16x32xf32>
    %c0_46 = arith.constant 0 : index
    %c0_47 = arith.constant 0 : index
    %c0_48 = arith.constant 0 : index
    %136 = vector.load %arg9[%c0_46, %c0_47, %c0_48] : memref<1x32x128xbf16, #tpu.memory_space<vmem>>, vector<1x32x128xbf16>
    %137 = vector.shape_cast %136 : vector<1x32x128xbf16> to vector<32x128xbf16>
    %138 = arith.truncf %135 : vector<16x32xf32> to vector<16x32xbf16>
    %cst_49 = arith.constant dense<0.000000e+00> : vector<16x128xf32>
    %139 = tpu.matmul %138, %137, %cst_49 {dimension_numbers = #tpu.dot_dimension_numbers<[1], [0], [0], [1], [0, 0, 1, 1], [], []>} : vector<16x32xbf16>, vector<32x128xbf16>, vector<16x128xf32> -> vector<16x128xf32>
    %c0_50 = arith.constant 0 : index
    %c0_51 = arith.constant 0 : index
    %c0_52 = arith.constant 0 : index
    %140 = vector.load %arg10[%c0_50, %c0_51, %c0_52] : memref<1x1x128xf32, #tpu.memory_space<vmem>>, vector<1x1x128xf32>
    %141 = vector.shape_cast %140 : vector<1x1x128xf32> to vector<1x128xf32>
    %142 = vector.broadcast %141 : vector<1x128xf32> to vector<16x128xf32>
    %143 = arith.addf %139, %142 : vector<16x128xf32>
    %cst_53 = arith.constant 0.636619746 : f32
    %144 = math.sqrt %cst_53 : f32
    %cst_54 = arith.constant 5.000000e-01 : f32
    %145 = vector.broadcast %cst_54 : f32 to vector<16x128xf32>
    %146 = arith.mulf %145, %143 : vector<16x128xf32>
    %147 = arith.mulf %143, %143 : vector<16x128xf32>
    %148 = arith.mulf %147, %143 : vector<16x128xf32>
    %cst_55 = arith.constant 4.471500e-02 : f32
    %149 = vector.broadcast %cst_55 : f32 to vector<16x128xf32>
    %150 = arith.mulf %149, %148 : vector<16x128xf32>
    %151 = arith.addf %143, %150 : vector<16x128xf32>
    %152 = vector.broadcast %144 : f32 to vector<16x128xf32>
    %153 = arith.mulf %152, %151 : vector<16x128xf32>
    %154 = math.tanh %153 : vector<16x128xf32>
    %cst_56 = arith.constant 1.000000e+00 : f32
    %155 = vector.broadcast %cst_56 : f32 to vector<16x128xf32>
    %156 = arith.addf %155, %154 : vector<16x128xf32>
    %157 = arith.mulf %146, %156 : vector<16x128xf32>
    %c0_57 = arith.constant 0 : index
    %c0_58 = arith.constant 0 : index
    %c0_59 = arith.constant 0 : index
    %158 = vector.load %arg11[%c0_57, %c0_58, %c0_59] : memref<1x128x32xbf16, #tpu.memory_space<vmem>>, vector<1x128x32xbf16>
    %159 = vector.shape_cast %158 : vector<1x128x32xbf16> to vector<128x32xbf16>
    %160 = arith.truncf %157 : vector<16x128xf32> to vector<16x128xbf16>
    %cst_60 = arith.constant dense<0.000000e+00> : vector<16x32xf32>
    %161 = tpu.matmul %160, %159, %cst_60 {dimension_numbers = #tpu.dot_dimension_numbers<[1], [0], [0], [1], [0, 0, 1, 1], [], []>} : vector<16x128xbf16>, vector<128x32xbf16>, vector<16x32xf32> -> vector<16x32xf32>
    %162 = arith.addf %109, %161 : vector<16x32xf32>
    %c0_61 = arith.constant 0 : index
    %c0_62 = arith.constant 0 : index
    %c0_63 = arith.constant 0 : index
    %163 = vector.load %arg12[%c0_61, %c0_62, %c0_63] : memref<1x1x32xf32, #tpu.memory_space<vmem>>, vector<1x1x32xf32>
    %164 = vector.shape_cast %163 : vector<1x1x32xf32> to vector<1x32xf32>
    %165 = vector.broadcast %164 : vector<1x32xf32> to vector<16x32xf32>
    %166 = arith.addf %162, %165 : vector<16x32xf32>
    %167 = vector.shape_cast %166 : vector<16x32xf32> to vector<2x8x32xf32>
    %c0_64 = arith.constant 0 : index
    %c0_65 = arith.constant 0 : index
    %c0_66 = arith.constant 0 : index
    %168 = vector.load %arg16[%c0_64, %c0_65, %c0_66] : memref<2x8x32xf32, #tpu.memory_space<vmem>>, vector<2x8x32xf32>
    tpu.vector_store %arg16[%c0_64, %c0_65, %c0_66], %167 {strides = array<i32>} : memref<2x8x32xf32, #tpu.memory_space<vmem>>, vector<2x8x32xf32>,
    %c1_i32 = arith.constant 1 : i32
    %169 = arith.cmpi eq, %arg0, %c1_i32 : i32
    %170 = arith.extui %169 : i1 to i32
    %c0_i32_67 = arith.constant 0 : i32
    %171 = arith.cmpi ne, %170, %c0_i32_67 : i32
    scf.if %171 {
      %c0_68 = arith.constant 0 : index
      %c0_69 = arith.constant 0 : index
      %172 = vector.load %arg13[%c0_68, %c0_69] : memref<1x32xf32, #tpu.memory_space<vmem>>, vector<1x32xf32>
      %c0_70 = arith.constant 0 : index
      %c0_71 = arith.constant 0 : index
      %173 = vector.load %arg14[%c0_70, %c0_71] : memref<1x32xf32, #tpu.memory_space<vmem>>, vector<1x32xf32>
      %cst_72 = arith.constant dense<0.000000e+00> : vector<16xf32>
      %174 = vector.multi_reduction <add>, %166, %cst_72 [1] : vector<16x32xf32> to vector<16xf32>
      %175 = vector.shape_cast %174 : vector<16xf32> to vector<16x1xf32>
      %cst_73 = arith.constant 3.200000e+01 : f32
      %176 = vector.broadcast %cst_73 : f32 to vector<16x1xf32>
      %177 = arith.divf %175, %176 : vector<16x1xf32>
      %178 = vector.broadcast %177 : vector<16x1xf32> to vector<16x32xf32>
      %179 = arith.subf %166, %178 : vector<16x32xf32>
      %180 = arith.mulf %179, %179 : vector<16x32xf32>
      %cst_74 = arith.constant dense<0.000000e+00> : vector<16xf32>
      %181 = vector.multi_reduction <add>, %180, %cst_74 [1] : vector<16x32xf32> to vector<16xf32>
      %182 = vector.shape_cast %181 : vector<16xf32> to vector<16x1xf32>
      %cst_75 = arith.constant 3.200000e+01 : f32
      %183 = vector.broadcast %cst_75 : f32 to vector<16x1xf32>
      %184 = arith.divf %182, %183 : vector<16x1xf32>
      %185 = vector.broadcast %177 : vector<16x1xf32> to vector<16x32xf32>
      %186 = arith.subf %166, %185 : vector<16x32xf32>
      %cst_76 = arith.constant 9.99999974E-6 : f32
      %187 = vector.broadcast %cst_76 : f32 to vector<16x1xf32>
      %188 = arith.addf %184, %187 : vector<16x1xf32>
      %189 = math.sqrt %188 : vector<16x1xf32>
      %190 = vector.broadcast %189 : vector<16x1xf32> to vector<16x32xf32>
      %191 = arith.divf %186, %190 : vector<16x32xf32>
      %192 = vector.broadcast %172 : vector<1x32xf32> to vector<16x32xf32>
      %193 = arith.mulf %192, %191 : vector<16x32xf32>
      %194 = vector.broadcast %173 : vector<1x32xf32> to vector<16x32xf32>
      %195 = arith.addf %193, %194 : vector<16x32xf32>
      %196 = vector.shape_cast %195 : vector<16x32xf32> to vector<2x8x32xf32>
      %197 = arith.truncf %196 : vector<2x8x32xf32> to vector<2x8x32xbf16>
      %c0_77 = arith.constant 0 : index
      %c0_78 = arith.constant 0 : index
      %c0_79 = arith.constant 0 : index
      %198 = vector.load %arg15[%c0_77, %c0_78, %c0_79] : memref<2x8x32xbf16, #tpu.memory_space<vmem>>, vector<2x8x32xbf16>
      tpu.vector_store %arg15[%c0_77, %c0_78, %c0_79], %197 {strides = array<i32>} : memref<2x8x32xbf16, #tpu.memory_space<vmem>>, vector<2x8x32xbf16>,
    } else {
    }
    return
  }
  func.func @transform_0(%arg0: i32) -> (i32, i32, i32) {
    %c0_i32 = arith.constant 0 : i32
    %c0_i32_0 = arith.constant 0 : i32
    %c0_i32_1 = arith.constant 0 : i32
    %c0_i32_2 = arith.constant 0 : i32
    return %c0_i32, %c0_i32_0, %c0_i32_1 : i32, i32, i32
  }
  func.func @transform_1(%arg0: i32) -> (i32, i32, i32) {
    %c0_i32 = arith.constant 0 : i32
    %c0_i32_0 = arith.constant 0 : i32
    %c0_i32_1 = arith.constant 0 : i32
    return %arg0, %c0_i32, %c0_i32_0 : i32, i32, i32
  }
  func.func @transform_2(%arg0: i32) -> (i32, i32, i32) {
    %c0_i32 = arith.constant 0 : i32
    %c0_i32_0 = arith.constant 0 : i32
    %c0_i32_1 = arith.constant 0 : i32
    return %arg0, %c0_i32, %c0_i32_0 : i32, i32, i32
  }
  func.func @transform_3(%arg0: i32) -> (i32, i32, i32) {
    %c0_i32 = arith.constant 0 : i32
    %c0_i32_0 = arith.constant 0 : i32
    %c0_i32_1 = arith.constant 0 : i32
    return %arg0, %c0_i32, %c0_i32_0 : i32, i32, i32
  }
  func.func @transform_4(%arg0: i32) -> (i32, i32, i32) {
    %c0_i32 = arith.constant 0 : i32
    %c0_i32_0 = arith.constant 0 : i32
    %c0_i32_1 = arith.constant 0 : i32
    return %arg0, %c0_i32, %c0_i32_0 : i32, i32, i32
  }
  func.func @transform_5(%arg0: i32) -> (i32, i32, i32) {
    %c0_i32 = arith.constant 0 : i32
    %c0_i32_0 = arith.constant 0 : i32
    %c0_i32_1 = arith.constant 0 : i32
    return %arg0, %c0_i32, %c0_i32_0 : i32, i32, i32
  }
  func.func @transform_6(%arg0: i32) -> (i32, i32, i32) {
    %c0_i32 = arith.constant 0 : i32
    %c0_i32_0 = arith.constant 0 : i32
    %c0_i32_1 = arith.constant 0 : i32
    return %arg0, %c0_i32, %c0_i32_0 : i32, i32, i32
  }
  func.func @transform_7(%arg0: i32) -> (i32, i32, i32) {
    %c0_i32 = arith.constant 0 : i32
    %c0_i32_0 = arith.constant 0 : i32
    %c0_i32_1 = arith.constant 0 : i32
    return %arg0, %c0_i32, %c0_i32_0 : i32, i32, i32
  }
  func.func @transform_8(%arg0: i32) -> (i32, i32, i32) {
    %c0_i32 = arith.constant 0 : i32
    %c0_i32_0 = arith.constant 0 : i32
    %c0_i32_1 = arith.constant 0 : i32
    return %arg0, %c0_i32, %c0_i32_0 : i32, i32, i32
  }
  func.func @transform_9(%arg0: i32) -> (i32, i32, i32) {
    %c0_i32 = arith.constant 0 : i32
    %c0_i32_0 = arith.constant 0 : i32
    %c0_i32_1 = arith.constant 0 : i32
    return %arg0, %c0_i32, %c0_i32_0 : i32, i32, i32
  }
  func.func @transform_10(%arg0: i32) -> (i32, i32, i32) {
    %c0_i32 = arith.constant 0 : i32
    %c0_i32_0 = arith.constant 0 : i32
    %c0_i32_1 = arith.constant 0 : i32
    return %arg0, %c0_i32, %c0_i32_0 : i32, i32, i32
  }
  func.func @transform_11(%arg0: i32) -> (i32, i32, i32) {
    %c0_i32 = arith.constant 0 : i32
    %c0_i32_0 = arith.constant 0 : i32
    %c0_i32_1 = arith.constant 0 : i32
    return %arg0, %c0_i32, %c0_i32_0 : i32, i32, i32
  }
  func.func @transform_12(%arg0: i32) -> (i32, i32) {
    %c0_i32 = arith.constant 0 : i32
    %c0_i32_0 = arith.constant 0 : i32
    %c0_i32_1 = arith.constant 0 : i32
    return %c0_i32, %c0_i32_0 : i32, i32
  }
  func.func @transform_13(%arg0: i32) -> (i32, i32) {
    %c0_i32 = arith.constant 0 : i32
    %c0_i32_0 = arith.constant 0 : i32
    %c0_i32_1 = arith.constant 0 : i32
    return %c0_i32, %c0_i32_0 : i32, i32
  }
  func.func @transform_14(%arg0: i32) -> (i32, i32, i32) {
    %c0_i32 = arith.constant 0 : i32
    %c0_i32_0 = arith.constant 0 : i32
    %c0_i32_1 = arith.constant 0 : i32
    %c0_i32_2 = arith.constant 0 : i32
    return %c0_i32, %c0_i32_0, %c0_i32_1 : i32, i32, i32
  }
}

</mosaic_0001>

<llo_original>
// kernel: tpu_custom_call.1
$region0: #{tpu_custom_call.1}
  #allocation0 [shape = 'u32[]', space=smem, size = 0x4, offset = 0x4, fixed_abs, tag = 'smem constant byte address 0x4 - core index']
  #allocation1 [shape = 'u32[144,128]{1,0:T(1,128)}', space=vmem, size = 0x12000, scoped, tag = 'internal scratch']
  #allocation2 [shape = 'f32[2,8,32]{2,1,0:T(8,128)}', space=vmem, size = 0x2000, scoped, tag = 'scratch operand']
  #allocation3 [shape = 'f32[8,8]{1,0:T(8,128)}', space=vmem, size = 0x1000, scoped, tag = 'scratch operand']
  %s0 = inlined_call_operand.vmem [shape: f32[2,8,32], index: 0, kind: input, shape index: {}]
  %s1 = inlined_call_operand.vmem [shape: f32[2,1,32], index: 1, kind: input, shape index: {}]
  %s2 = inlined_call_operand.vmem [shape: f32[2,1,32], index: 2, kind: input, shape index: {}]
  %s3 = inlined_call_operand.vmem [shape: bf16[2,32,96], index: 3, kind: input, shape index: {}]
  %s4 = inlined_call_operand.vmem [shape: bf16[2,32,32], index: 4, kind: input, shape index: {}]
  %s5 = inlined_call_operand.vmem [shape: f32[2,1,32], index: 5, kind: input, shape index: {}]
  %s6 = inlined_call_operand.vmem [shape: f32[2,1,32], index: 6, kind: input, shape index: {}]
  %s7 = inlined_call_operand.vmem [shape: f32[2,1,32], index: 7, kind: input, shape index: {}]
  %s8 = inlined_call_operand.vmem [shape: bf16[2,32,128], index: 8, kind: input, shape index: {}]
  %s9 = inlined_call_operand.vmem [shape: f32[2,1,128], index: 9, kind: input, shape index: {}]
  %s10 = inlined_call_operand.vmem [shape: bf16[2,128,32], index: 10, kind: input, shape index: {}]
  %s11 = inlined_call_operand.vmem [shape: f32[2,1,32], index: 11, kind: input, shape index: {}]
  %s12 = inlined_call_operand.vmem [shape: f32[1,32], index: 12, kind: input, shape index: {}]
  %s13 = inlined_call_operand.vmem [shape: f32[1,32], index: 13, kind: input, shape index: {}]
  %s14 = inlined_call_operand.hbm [shape: bf16[2,8,32], index: 14, kind: output, shape index: {}]
  %s15 = sld [smem:[#allocation0]]
  $region97: #{tpu_custom_call.1} parent=0
    _
  %s17 = ssub.s32 1, %s15
  %s18 = scalar_select 0, %s17, %s15
  $region1: #{tpu_custom_call.1} parent=0
    #allocation4 [shape = 'u8[4096]{0}', space=vmem, size = 0x1000, scoped, tag = 'output window, operand 0, single buffered']
    #allocation5 [shape = 's32[2]{0}', space=sflag, size = 0x8, scoped, tag = 'scoped memory for tpu_custom_call.1']
    %19 = vsyncpa [#allocation5], 0
    loop: start=0, step=1, limit=4
    $region2: #{tpu_custom_call.1} parent=1 // loop_pre_header
      _
    $region3: #{tpu_custom_call.1} parent=1 // loop_header
      %s21 = sphi 0, %s25
      %p22 = scmp.ge.s32.totalorder %s21, 4
      %s29 = sphi 0, %s29
      %s31 = sphi 0, %s29
      %s32 = sphi 0, %s31
      %s46 = sphi 0, %s32
      %s52 = sphi 0, %s54
      %s55 = sphi 0, %s52
      %s56 = sphi 0, %s55
      %s72 = sphi 0, %s56
      %s78 = sphi 0, %s80
      %s81 = sphi 0, %s78
      %s82 = sphi 0, %s81
      %s98 = sphi 0, %s82
      %s104 = sphi 0, %s106
      %s107 = sphi 0, %s104
      %s108 = sphi 0, %s107
      %s124 = sphi 0, %s108
      %s130 = sphi 0, %s132
      %s133 = sphi 0, %s130
      %s134 = sphi 0, %s133
      %s150 = sphi 0, %s134
      %s156 = sphi 0, %s158
      %s159 = sphi 0, %s156
      %s160 = sphi 0, %s159
      %s176 = sphi 0, %s160
      %s182 = sphi 0, %s184
      %s185 = sphi 0, %s182
      %s186 = sphi 0, %s185
      %s202 = sphi 0, %s186
      %s208 = sphi 0, %s210
      %s211 = sphi 0, %s208
      %s212 = sphi 0, %s211
      %s228 = sphi 0, %s212
      %s234 = sphi 0, %s236
      %s237 = sphi 0, %s234
      %s238 = sphi 0, %s237
      %s254 = sphi 0, %s238
      %s260 = sphi 0, %s262
      %s263 = sphi 0, %s260
      %s264 = sphi 0, %s263
      %s280 = sphi 0, %s264
      %s286 = sphi 0, %s288
      %s289 = sphi 0, %s286
      %s290 = sphi 0, %s289
      %s306 = sphi 0, %s290
      %s312 = sphi 0, %s314
      %s315 = sphi 0, %s312
      %s316 = sphi 0, %s315
      %s332 = sphi 0, %s316
      %s336 = sphi 0, %s336
      %s338 = sphi 0, %s336
      %s339 = sphi 0, %s338
      %s353 = sphi 0, %s339
      %s357 = sphi 0, %s357
      %s359 = sphi 0, %s357
      %s360 = sphi 0, %s359
      %s374 = sphi 0, %s360
      %s378 = sphi 0, %s378
      %s380 = sphi 0, %s378
      %s381 = sphi 0, %s380
      %s395 = sphi 0, %s381
    $region4: #{tpu_custom_call.1} parent=1 // loop_header_branch
      %24 = sbr.rel (%p22) target = $region8
    $region5: #{tpu_custom_call.1} parent=1 // loop_body
      %s26 = ssub.s32 %s21, 1
      %s27 = ssub.s32 %s21, 2
      %s28 = sadd.s32 %s21, 1
      %s30 = sadd.s32 %s29, 1
      %p33 = scmp.eq.s32.totalorder %s21, 1
      %p34 = scmp.ne.s32.totalorder %s29, %s31
      %p35 = scmp.eq.s32.totalorder %s21, 0
      %p36 = por %p34, %p35
      %p37 = scmp.ne.s32.totalorder %s29, %s31
      %p38 = scmp.eq.s32.totalorder %s26, 1
      %p39 = por %p37, %p38
      %p40 = scmp.ne.s32.totalorder %s31, %s32
      %p41 = scmp.eq.s32.totalorder %s26, 0
      %p42 = por %p40, %p41
      %p43 = scmp.ne.s32.totalorder %s31, %s32
      %p44 = scmp.eq.s32.totalorder %s27, 1
      %p45 = por %p43, %p44
      %p47 = scmp.ne.s32.totalorder %s32, %s46
      %p48 = scmp.eq.s32.totalorder %s27, 0
      %p49 = por %p47, %p48
      %s50 = ssub.s32 %s21, %s28
      %p51 = scmp.eq.s32.totalorder %s50, 0
      %s53 = sadd.s32 %s52, 1
      %s54 = scalar_select %p51, %s52, %s53
      %p57 = pneg %p51
      %p58 = scmp.eq.s32.totalorder %s21, 1
      %p59 = por %p57, %p58
      %p60 = scmp.ne.s32.totalorder %s52, %s55
      %p61 = scmp.eq.s32.totalorder %s21, 0
      %p62 = por %p60, %p61
      %p63 = scmp.ne.s32.totalorder %s52, %s55
      %p64 = scmp.eq.s32.totalorder %s26, 1
      %p65 = por %p63, %p64
      %p66 = scmp.ne.s32.totalorder %s55, %s56
      %p67 = scmp.eq.s32.totalorder %s26, 0
      %p68 = por %p66, %p67
      %p69 = scmp.ne.s32.totalorder %s55, %s56
      %p70 = scmp.eq.s32.totalorder %s27, 1
      %p71 = por %p69, %p70
      %p73 = scmp.ne.s32.totalorder %s56, %s72
      %p74 = scmp.eq.s32.totalorder %s27, 0
      %p75 = por %p73, %p74
      %s76 = ssub.s32 %s21, %s28
      %p77 = scmp.eq.s32.totalorder %s76, 0
      %s79 = sadd.s32 %s78, 1
      %s80 = scalar_select %p77, %s78, %s79
      %p83 = pneg %p77
      %p84 = scmp.eq.s32.totalorder %s21, 1
      %p85 = por %p83, %p84
      %p86 = scmp.ne.s32.totalorder %s78, %s81
      %p87 = scmp.eq.s32.totalorder %s21, 0
      %p88 = por %p86, %p87
      %p89 = scmp.ne.s32.totalorder %s78, %s81
      %p90 = scmp.eq.s32.totalorder %s26, 1
      %p91 = por %p89, %p90
      %p92 = scmp.ne.s32.totalorder %s81, %s82
      %p93 = scmp.eq.s32.totalorder %s26, 0
      %p94 = por %p92, %p93
      %p95 = scmp.ne.s32.totalorder %s81, %s82
      %p96 = scmp.eq.s32.totalorder %s27, 1
      %p97 = por %p95, %p96
      %p99 = scmp.ne.s32.totalorder %s82, %s98
      %p100 = scmp.eq.s32.totalorder %s27, 0
      %p101 = por %p99, %p100
      %s102 = ssub.s32 %s21, %s28
      %p103 = scmp.eq.s32.totalorder %s102, 0
      %s105 = sadd.s32 %s104, 1
      %s106 = scalar_select %p103, %s104, %s105
      %p109 = pneg %p103
      %p110 = scmp.eq.s32.totalorder %s21, 1
      %p111 = por %p109, %p110
      %p112 = scmp.ne.s32.totalorder %s104, %s107
      %p113 = scmp.eq.s32.totalorder %s21, 0
      %p114 = por %p112, %p113
      %p115 = scmp.ne.s32.totalorder %s104, %s107
      %p116 = scmp.eq.s32.totalorder %s26, 1
      %p117 = por %p115, %p116
      %p118 = scmp.ne.s32.totalorder %s107, %s108
      %p119 = scmp.eq.s32.totalorder %s26, 0
      %p120 = por %p118, %p119
      %p121 = scmp.ne.s32.totalorder %s107, %s108
      %p122 = scmp.eq.s32.totalorder %s27, 1
      %p123 = por %p121, %p122
      %p125 = scmp.ne.s32.totalorder %s108, %s124
      %p126 = scmp.eq.s32.totalorder %s27, 0
      %p127 = por %p125, %p126
      %s128 = ssub.s32 %s21, %s28
      %p129 = scmp.eq.s32.totalorder %s128, 0
      %s131 = sadd.s32 %s130, 1
      %s132 = scalar_select %p129, %s130, %s131
      %p135 = pneg %p129
      %p136 = scmp.eq.s32.totalorder %s21, 1
      %p137 = por %p135, %p136
      %p138 = scmp.ne.s32.totalorder %s130, %s133
      %p139 = scmp.eq.s32.totalorder %s21, 0
      %p140 = por %p138, %p139
      %p141 = scmp.ne.s32.totalorder %s130, %s133
      %p142 = scmp.eq.s32.totalorder %s26, 1
      %p143 = por %p141, %p142
      %p144 = scmp.ne.s32.totalorder %s133, %s134
      %p145 = scmp.eq.s32.totalorder %s26, 0
      %p146 = por %p144, %p145
      %p147 = scmp.ne.s32.totalorder %s133, %s134
      %p148 = scmp.eq.s32.totalorder %s27, 1
      %p149 = por %p147, %p148
      %p151 = scmp.ne.s32.totalorder %s134, %s150
      %p152 = scmp.eq.s32.totalorder %s27, 0
      %p153 = por %p151, %p152
      %s154 = ssub.s32 %s21, %s28
      %p155 = scmp.eq.s32.totalorder %s154, 0
      %s157 = sadd.s32 %s156, 1
      %s158 = scalar_select %p155, %s156, %s157
      %p161 = pneg %p155
      %p162 = scmp.eq.s32.totalorder %s21, 1
      %p163 = por %p161, %p162
      %p164 = scmp.ne.s32.totalorder %s156, %s159
      %p165 = scmp.eq.s32.totalorder %s21, 0
      %p166 = por %p164, %p165
      %p167 = scmp.ne.s32.totalorder %s156, %s159
      %p168 = scmp.eq.s32.totalorder %s26, 1
      %p169 = por %p167, %p168
      %p170 = scmp.ne.s32.totalorder %s159, %s160
      %p171 = scmp.eq.s32.totalorder %s26, 0
      %p172 = por %p170, %p171
      %p173 = scmp.ne.s32.totalorder %s159, %s160
      %p174 = scmp.eq.s32.totalorder %s27, 1
      %p175 = por %p173, %p174
      %p177 = scmp.ne.s32.totalorder %s160, %s176
      %p178 = scmp.eq.s32.totalorder %s27, 0
      %p179 = por %p177, %p178
      %s180 = ssub.s32 %s21, %s28
      %p181 = scmp.eq.s32.totalorder %s180, 0
      %s183 = sadd.s32 %s182, 1
      %s184 = scalar_select %p181, %s182, %s183
      %p187 = pneg %p181
      %p188 = scmp.eq.s32.totalorder %s21, 1
      %p189 = por %p187, %p188
      %p190 = scmp.ne.s32.totalorder %s182, %s185
      %p191 = scmp.eq.s32.totalorder %s21, 0
      %p192 = por %p190, %p191
      %p193 = scmp.ne.s32.totalorder %s182, %s185
      %p194 = scmp.eq.s32.totalorder %s26, 1
      %p195 = por %p193, %p194
      %p196 = scmp.ne.s32.totalorder %s185, %s186
      %p197 = scmp.eq.s32.totalorder %s26, 0
      %p198 = por %p196, %p197
      %p199 = scmp.ne.s32.totalorder %s185, %s186
      %p200 = scmp.eq.s32.totalorder %s27, 1
      %p201 = por %p199, %p200
      %p203 = scmp.ne.s32.totalorder %s186, %s202
      %p204 = scmp.eq.s32.totalorder %s27, 0
      %p205 = por %p203, %p204
      %s206 = ssub.s32 %s21, %s28
      %p207 = scmp.eq.s32.totalorder %s206, 0
      %s209 = sadd.s32 %s208, 1
      %s210 = scalar_select %p207, %s208, %s209
      %p213 = pneg %p207
      %p214 = scmp.eq.s32.totalorder %s21, 1
      %p215 = por %p213, %p214
      %p216 = scmp.ne.s32.totalorder %s208, %s211
      %p217 = scmp.eq.s32.totalorder %s21, 0
      %p218 = por %p216, %p217
      %p219 = scmp.ne.s32.totalorder %s208, %s211
      %p220 = scmp.eq.s32.totalorder %s26, 1
      %p221 = por %p219, %p220
      %p222 = scmp.ne.s32.totalorder %s211, %s212
      %p223 = scmp.eq.s32.totalorder %s26, 0
      %p224 = por %p222, %p223
      %p225 = scmp.ne.s32.totalorder %s211, %s212
      %p226 = scmp.eq.s32.totalorder %s27, 1
      %p227 = por %p225, %p226
      %p229 = scmp.ne.s32.totalorder %s212, %s228
      %p230 = scmp.eq.s32.totalorder %s27, 0
      %p231 = por %p229, %p230
      %s232 = ssub.s32 %s21, %s28
      %p233 = scmp.eq.s32.totalorder %s232, 0
      %s235 = sadd.s32 %s234, 1
      %s236 = scalar_select %p233, %s234, %s235
      %p239 = pneg %p233
      %p240 = scmp.eq.s32.totalorder %s21, 1
      %p241 = por %p239, %p240
      %p242 = scmp.ne.s32.totalorder %s234, %s237
      %p243 = scmp.eq.s32.totalorder %s21, 0
      %p244 = por %p242, %p243
      %p245 = scmp.ne.s32.totalorder %s234, %s237
      %p246 = scmp.eq.s32.totalorder %s26, 1
      %p247 = por %p245, %p246
      %p248 = scmp.ne.s32.totalorder %s237, %s238
      %p249 = scmp.eq.s32.totalorder %s26, 0
      %p250 = por %p248, %p249
      %p251 = scmp.ne.s32.totalorder %s237, %s238
      %p252 = scmp.eq.s32.totalorder %s27, 1
      %p253 = por %p251, %p252
      %p255 = scmp.ne.s32.totalorder %s238, %s254
      %p256 = scmp.eq.s32.totalorder %s27, 0
      %p257 = por %p255, %p256
      %s258 = ssub.s32 %s21, %s28
      %p259 = scmp.eq.s32.totalorder %s258, 0
      %s261 = sadd.s32 %s260, 1
      %s262 = scalar_select %p259, %s260, %s261
      %p265 = pneg %p259
      %p266 = scmp.eq.s32.totalorder %s21, 1
      %p267 = por %p265, %p266
      %p268 = scmp.ne.s32.totalorder %s260, %s263
      %p269 = scmp.eq.s32.totalorder %s21, 0
      %p270 = por %p268, %p269
      %p271 = scmp.ne.s32.totalorder %s260, %s263
      %p272 = scmp.eq.s32.totalorder %s26, 1
      %p273 = por %p271, %p272
      %p274 = scmp.ne.s32.totalorder %s263, %s264
      %p275 = scmp.eq.s32.totalorder %s26, 0
      %p276 = por %p274, %p275
      %p277 = scmp.ne.s32.totalorder %s263, %s264
      %p278 = scmp.eq.s32.totalorder %s27, 1
      %p279 = por %p277, %p278
      %p281 = scmp.ne.s32.totalorder %s264, %s280
      %p282 = scmp.eq.s32.totalorder %s27, 0
      %p283 = por %p281, %p282
      %s284 = ssub.s32 %s21, %s28
      %p285 = scmp.eq.s32.totalorder %s284, 0
      %s287 = sadd.s32 %s286, 1
      %s288 = scalar_select %p285, %s286, %s287
      %p291 = pneg %p285
      %p292 = scmp.eq.s32.totalorder %s21, 1
      %p293 = por %p291, %p292
      %p294 = scmp.ne.s32.totalorder %s286, %s289
      %p295 = scmp.eq.s32.totalorder %s21, 0
      %p296 = por %p294, %p295
      %p297 = scmp.ne.s32.totalorder %s286, %s289
      %p298 = scmp.eq.s32.totalorder %s26, 1
      %p299 = por %p297, %p298
      %p300 = scmp.ne.s32.totalorder %s289, %s290
      %p301 = scmp.eq.s32.totalorder %s26, 0
      %p302 = por %p300, %p301
      %p303 = scmp.ne.s32.totalorder %s289, %s290
      %p304 = scmp.eq.s32.totalorder %s27, 1
      %p305 = por %p303, %p304
      %p307 = scmp.ne.s32.totalorder %s290, %s306
      %p308 = scmp.eq.s32.totalorder %s27, 0
      %p309 = por %p307, %p308
      %s310 = ssub.s32 %s21, %s28
      %p311 = scmp.eq.s32.totalorder %s310, 0
      %s313 = sadd.s32 %s312, 1
      %s314 = scalar_select %p311, %s312, %s313
      %p317 = pneg %p311
      %p318 = scmp.eq.s32.totalorder %s21, 1
      %p319 = por %p317, %p318
      %p320 = scmp.ne.s32.totalorder %s312, %s315
      %p321 = scmp.eq.s32.totalorder %s21, 0
      %p322 = por %p320, %p321
      %p323 = scmp.ne.s32.totalorder %s312, %s315
      %p324 = scmp.eq.s32.totalorder %s26, 1
      %p325 = por %p323, %p324
      %p326 = scmp.ne.s32.totalorder %s315, %s316
      %p327 = scmp.eq.s32.totalorder %s26, 0
      %p328 = por %p326, %p327
      %p329 = scmp.ne.s32.totalorder %s315, %s316
      %p330 = scmp.eq.s32.totalorder %s27, 1
      %p331 = por %p329, %p330
      %p333 = scmp.ne.s32.totalorder %s316, %s332
      %p334 = scmp.eq.s32.totalorder %s27, 0
      %p335 = por %p333, %p334
      %s337 = sadd.s32 %s336, 1
      %p340 = scmp.eq.s32.totalorder %s21, 1
      %p341 = scmp.ne.s32.totalorder %s336, %s338
      %p342 = scmp.eq.s32.totalorder %s21, 0
      %p343 = por %p341, %p342
      %p344 = scmp.ne.s32.totalorder %s336, %s338
      %p345 = scmp.eq.s32.totalorder %s26, 1
      %p346 = por %p344, %p345
      %p347 = scmp.ne.s32.totalorder %s338, %s339
      %p348 = scmp.eq.s32.totalorder %s26, 0
      %p349 = por %p347, %p348
      %p350 = scmp.ne.s32.totalorder %s338, %s339
      %p351 = scmp.eq.s32.totalorder %s27, 1
      %p352 = por %p350, %p351
      %p354 = scmp.ne.s32.totalorder %s339, %s353
      %p355 = scmp.eq.s32.totalorder %s27, 0
      %p356 = por %p354, %p355
      %s358 = sadd.s32 %s357, 1
      %p361 = scmp.eq.s32.totalorder %s21, 1
      %p362 = scmp.ne.s32.totalorder %s357, %s359
      %p363 = scmp.eq.s32.totalorder %s21, 0
      %p364 = por %p362, %p363
      %p365 = scmp.ne.s32.totalorder %s357, %s359
      %p366 = scmp.eq.s32.totalorder %s26, 1
      %p367 = por %p365, %p366
      %p368 = scmp.ne.s32.totalorder %s359, %s360
      %p369 = scmp.eq.s32.totalorder %s26, 0
      %p370 = por %p368, %p369
      %p371 = scmp.ne.s32.totalorder %s359, %s360
      %p372 = scmp.eq.s32.totalorder %s27, 1
      %p373 = por %p371, %p372
      %p375 = scmp.ne.s32.totalorder %s360, %s374
      %p376 = scmp.eq.s32.totalorder %s27, 0
      %p377 = por %p375, %p376
      %s379 = sadd.s32 %s378, 1
      %p382 = scmp.eq.s32.totalorder %s21, 1
      %p383 = scmp.ne.s32.totalorder %s378, %s380
      %p384 = scmp.eq.s32.totalorder %s21, 0
      %p385 = por %p383, %p384
      %p386 = scmp.ne.s32.totalorder %s378, %s380
      %p387 = scmp.eq.s32.totalorder %s26, 1
      %p388 = por %p386, %p387
      %p389 = scmp.ne.s32.totalorder %s380, %s381
      %p390 = scmp.eq.s32.totalorder %s26, 0
      %p391 = por %p389, %p390
      %p392 = scmp.ne.s32.totalorder %s380, %s381
      %p393 = scmp.eq.s32.totalorder %s27, 1
      %p394 = por %p392, %p393
      %p396 = scmp.ne.s32.totalorder %s381, %s395
      %p397 = scmp.eq.s32.totalorder %s27, 0
      %p398 = por %p396, %p397
      %p399 = scmp.le.s32.totalorder 1, %s21
      %p400 = scmp.lt.s32.totalorder %s21, 3
      %p401 = pnand %p399, %p400
      %p402 = pneg %p401
      // Predicated region
      $region9: #{tpu_custom_call.1} parent=5 // pred_check
        _
      $region10: #{tpu_custom_call.1} parent=5 // pred_check_branch
        %404 = sbr.rel (%p401) target = $region12
      $region11: #{tpu_custom_call.1} parent=5 // pred_region
        %s405 = ssub.s32 %s21, 1
        // Predicated region
        $region13: #{tpu_custom_call.1} parent=11 // pred_check
          %p406 = pneg %p42
        $region14: #{tpu_custom_call.1} parent=11 // pred_check_branch
          %408 = sbr.rel (%p406) target = $region16
        $region15: #{tpu_custom_call.1} parent=11 // pred_region
          _
        $region16: #{tpu_custom_call.1} parent=11 // pred_fallthru
          _
        // Predicated region
        $region17: #{tpu_custom_call.1} parent=11 // pred_check
          %p409 = pneg %p349
        $region18: #{tpu_custom_call.1} parent=11 // pred_check_branch
          %411 = sbr.rel (%p409) target = $region20
        $region19: #{tpu_custom_call.1} parent=11 // pred_region
          _
        $region20: #{tpu_custom_call.1} parent=11 // pred_fallthru
          _
        // Predicated region
        $region21: #{tpu_custom_call.1} parent=11 // pred_check
          %p412 = pneg %p370
        $region22: #{tpu_custom_call.1} parent=11 // pred_check_branch
          %414 = sbr.rel (%p412) target = $region24
        $region23: #{tpu_custom_call.1} parent=11 // pred_region
          _
        $region24: #{tpu_custom_call.1} parent=11 // pred_fallthru
          _
      $region12: #{tpu_custom_call.1} parent=5 // pred_fallthru
        _
      %p415 = scmp.lt.s32.totalorder %s21, 2
      // Predicated region
      $region25: #{tpu_custom_call.1} parent=5 // pred_check
        %p416 = pneg %p415
      $region26: #{tpu_custom_call.1} parent=5 // pred_check_branch
        %418 = sbr.rel (%p416) target = $region28
      $region27: #{tpu_custom_call.1} parent=5 // pred_region
        // Predicated region
        $region29: #{tpu_custom_call.1} parent=27 // pred_check
          %p419 = pneg %p62
        $region30: #{tpu_custom_call.1} parent=27 // pred_check_branch
          %421 = sbr.rel (%p419) target = $region32
        $region31: #{tpu_custom_call.1} parent=27 // pred_region
          %p422 = scmp.lt.s32.totalorder %s21, 1
          %s423 = scalar_select %p422, %s21, 1
          %s424 = scalar_lea.vmem %s1, %s423
        $region32: #{tpu_custom_call.1} parent=27 // pred_fallthru
          _
        // Predicated region
        $region33: #{tpu_custom_call.1} parent=27 // pred_check
          %p425 = pneg %p88
        $region34: #{tpu_custom_call.1} parent=27 // pred_check_branch
          %427 = sbr.rel (%p425) target = $region36
        $region35: #{tpu_custom_call.1} parent=27 // pred_region
          %p428 = scmp.lt.s32.totalorder %s21, 1
          %s429 = scalar_select %p428, %s21, 1
          %s430 = scalar_lea.vmem %s2, %s429
        $region36: #{tpu_custom_call.1} parent=27 // pred_fallthru
          _
        // Predicated region
        $region37: #{tpu_custom_call.1} parent=27 // pred_check
          %p431 = pneg %p114
        $region38: #{tpu_custom_call.1} parent=27 // pred_check_branch
          %433 = sbr.rel (%p431) target = $region40
        $region39: #{tpu_custom_call.1} parent=27 // pred_region
          %p434 = scmp.lt.s32.totalorder %s21, 1
          %s435 = scalar_select %p434, %s21, 1
          %s436 = smul.addr %s435, 4
          %s437 = smul.addr %s436, 4
          %s438 = scalar_lea.vmem %s3, %s437
        $region40: #{tpu_custom_call.1} parent=27 // pred_fallthru
          _
        // Predicated region
        $region41: #{tpu_custom_call.1} parent=27 // pred_check
          %p439 = pneg %p140
        $region42: #{tpu_custom_call.1} parent=27 // pred_check_branch
          %441 = sbr.rel (%p439) target = $region44
        $region43: #{tpu_custom_call.1} parent=27 // pred_region
          %p442 = scmp.lt.s32.totalorder %s21, 1
          %s443 = scalar_select %p442, %s21, 1
          %s444 = smul.addr %s443, 4
          %s445 = smul.addr %s444, 4
          %s446 = scalar_lea.vmem %s4, %s445
        $region44: #{tpu_custom_call.1} parent=27 // pred_fallthru
          _
        // Predicated region
        $region45: #{tpu_custom_call.1} parent=27 // pred_check
          %p447 = pneg %p166
        $region46: #{tpu_custom_call.1} parent=27 // pred_check_branch
          %449 = sbr.rel (%p447) target = $region48
        $region47: #{tpu_custom_call.1} parent=27 // pred_region
          %p450 = scmp.lt.s32.totalorder %s21, 1
          %s451 = scalar_select %p450, %s21, 1
          %s452 = scalar_lea.vmem %s5, %s451
        $region48: #{tpu_custom_call.1} parent=27 // pred_fallthru
          _
        // Predicated region
        $region49: #{tpu_custom_call.1} parent=27 // pred_check
          %p453 = pneg %p192
        $region50: #{tpu_custom_call.1} parent=27 // pred_check_branch
          %455 = sbr.rel (%p453) target = $region52
        $region51: #{tpu_custom_call.1} parent=27 // pred_region
          %p456 = scmp.lt.s32.totalorder %s21, 1
          %s457 = scalar_select %p456, %s21, 1
          %s458 = scalar_lea.vmem %s6, %s457
        $region52: #{tpu_custom_call.1} parent=27 // pred_fallthru
          _
        // Predicated region
        $region53: #{tpu_custom_call.1} parent=27 // pred_check
          %p459 = pneg %p218
        $region54: #{tpu_custom_call.1} parent=27 // pred_check_branch
          %461 = sbr.rel (%p459) target = $region56
        $region55: #{tpu_custom_call.1} parent=27 // pred_region
          %p462 = scmp.lt.s32.totalorder %s21, 1
          %s463 = scalar_select %p462, %s21, 1
          %s464 = scalar_lea.vmem %s7, %s463
        $region56: #{tpu_custom_call.1} parent=27 // pred_fallthru
          _
        // Predicated region
        $region57: #{tpu_custom_call.1} parent=27 // pred_check
          %p465 = pneg %p244
        $region58: #{tpu_custom_call.1} parent=27 // pred_check_branch
          %467 = sbr.rel (%p465) target = $region60
        $region59: #{tpu_custom_call.1} parent=27 // pred_region
          %p468 = scmp.lt.s32.totalorder %s21, 1
          %s469 = scalar_select %p468, %s21, 1
          %s470 = smul.addr %s469, 4
          %s471 = smul.addr %s470, 4
          %s472 = scalar_lea.vmem %s8, %s471
        $region60: #{tpu_custom_call.1} parent=27 // pred_fallthru
          _
        // Predicated region
        $region61: #{tpu_custom_call.1} parent=27 // pred_check
          %p473 = pneg %p270
        $region62: #{tpu_custom_call.1} parent=27 // pred_check_branch
          %475 = sbr.rel (%p473) target = $region64
        $region63: #{tpu_custom_call.1} parent=27 // pred_region
          %p476 = scmp.lt.s32.totalorder %s21, 1
          %s477 = scalar_select %p476, %s21, 1
          %s478 = scalar_lea.vmem %s9, %s477
        $region64: #{tpu_custom_call.1} parent=27 // pred_fallthru
          _
        // Predicated region
        $region65: #{tpu_custom_call.1} parent=27 // pred_check
          %p479 = pneg %p296
        $region66: #{tpu_custom_call.1} parent=27 // pred_check_branch
          %481 = sbr.rel (%p479) target = $region68
        $region67: #{tpu_custom_call.1} parent=27 // pred_region
          %p482 = scmp.lt.s32.totalorder %s21, 1
          %s483 = scalar_select %p482, %s21, 1
          %s484 = smul.addr %s483, 16
          %s485 = smul.addr %s484, 4
          %s486 = scalar_lea.vmem %s10, %s485
        $region68: #{tpu_custom_call.1} parent=27 // pred_fallthru
          _
        // Predicated region
        $region69: #{tpu_custom_call.1} parent=27 // pred_check
          %p487 = pneg %p322
        $region70: #{tpu_custom_call.1} parent=27 // pred_check_branch
          %489 = sbr.rel (%p487) target = $region72
        $region71: #{tpu_custom_call.1} parent=27 // pred_region
          %p490 = scmp.lt.s32.totalorder %s21, 1
          %s491 = scalar_select %p490, %s21, 1
          %s492 = scalar_lea.vmem %s11, %s491
        $region72: #{tpu_custom_call.1} parent=27 // pred_fallthru
          _
      $region28: #{tpu_custom_call.1} parent=5 // pred_fallthru
        _
      %p493 = scmp.le.s32.totalorder 1, %s21
      %p494 = scmp.lt.s32.totalorder %s21, 3
      %p495 = pnand %p493, %p494
      %p496 = pneg %p495
      // Predicated region
      $region73: #{tpu_custom_call.1} parent=5 // pred_check
        _
      $region74: #{tpu_custom_call.1} parent=5 // pred_check_branch
        %498 = sbr.rel (%p495) target = $region76
      $region75: #{tpu_custom_call.1} parent=5 // pred_region
        %s499 = ssub.s32 %s21, 1
        %p500 = pneg %p42
        %p501 = pneg %p39
        %p502 = scmp.lt.s32.totalorder %s26, 1
        %s503 = scalar_select %p502, %s26, 1
        %s504 = scalar_lea.vmem %s1, %s503
        %p505 = pneg %p68
        %p506 = pneg %p65
        %p507 = scmp.lt.s32.totalorder %s26, 1
        %s508 = scalar_select %p507, %s26, 1
        %s509 = scalar_lea.vmem %s2, %s508
        %p510 = pneg %p94
        %p511 = pneg %p91
        %p512 = scmp.lt.s32.totalorder %s26, 1
        %s513 = scalar_select %p512, %s26, 1
        %s514 = smul.addr %s513, 4
        %s515 = smul.addr %s514, 4
        %s516 = scalar_lea.vmem %s3, %s515
        %p517 = pneg %p120
        %p518 = pneg %p117
        %p519 = scmp.lt.s32.totalorder %s26, 1
        %s520 = scalar_select %p519, %s26, 1
        %s521 = smul.addr %s520, 4
        %s522 = smul.addr %s521, 4
        %s523 = scalar_lea.vmem %s4, %s522
        %p524 = pneg %p146
        %p525 = pneg %p143
        %p526 = scmp.lt.s32.totalorder %s26, 1
        %s527 = scalar_select %p526, %s26, 1
        %s528 = scalar_lea.vmem %s5, %s527
        %p529 = pneg %p172
        %p530 = pneg %p169
        %p531 = scmp.lt.s32.totalorder %s26, 1
        %s532 = scalar_select %p531, %s26, 1
        %s533 = scalar_lea.vmem %s6, %s532
        %p534 = pneg %p198
        %p535 = pneg %p195
        %p536 = scmp.lt.s32.totalorder %s26, 1
        %s537 = scalar_select %p536, %s26, 1
        %s538 = scalar_lea.vmem %s7, %s537
        %p539 = pneg %p224
        %p540 = pneg %p221
        %p541 = scmp.lt.s32.totalorder %s26, 1
        %s542 = scalar_select %p541, %s26, 1
        %s543 = smul.addr %s542, 4
        %s544 = smul.addr %s543, 4
        %s545 = scalar_lea.vmem %s8, %s544
        %p546 = pneg %p250
        %p547 = pneg %p247
        %p548 = scmp.lt.s32.totalorder %s26, 1
        %s549 = scalar_select %p548, %s26, 1
        %s550 = scalar_lea.vmem %s9, %s549
        %p551 = pneg %p276
        %p552 = pneg %p273
        %p553 = scmp.lt.s32.totalorder %s26, 1
        %s554 = scalar_select %p553, %s26, 1
        %s555 = smul.addr %s554, 16
        %s556 = smul.addr %s555, 4
        %s557 = scalar_lea.vmem %s10, %s556
        %p558 = pneg %p302
        %p559 = pneg %p299
        %p560 = scmp.lt.s32.totalorder %s26, 1
        %s561 = scalar_select %p560, %s26, 1
        %s562 = scalar_lea.vmem %s11, %s561
        %p563 = pneg %p328
        %p564 = pneg %p325
        %p565 = pneg %p349
        %p566 = pneg %p346
        %p567 = pneg %p370
        %p568 = pneg %p367
        %p569 = pneg %p391
        %p570 = pneg %p388
        %p571 = scmp.lt.s32.totalorder %s26, 1
        %s572 = scalar_select %p571, %s26, 1
        %s573 = scalar_lea.vmem %s1, %s572
        %p574 = scmp.lt.s32.totalorder %s26, 1
        %s575 = scalar_select %p574, %s26, 1
        %s576 = scalar_lea.vmem %s2, %s575
        %p577 = scmp.lt.s32.totalorder %s26, 1
        %s578 = scalar_select %p577, %s26, 1
        %s579 = smul.addr %s578, 4
        %s580 = smul.addr %s579, 4
        %s581 = scalar_lea.vmem %s3, %s580
        %p582 = scmp.lt.s32.totalorder %s26, 1
        %s583 = scalar_select %p582, %s26, 1
        %s584 = smul.addr %s583, 4
        %s585 = smul.addr %s584, 4
        %s586 = scalar_lea.vmem %s4, %s585
        %p587 = scmp.lt.s32.totalorder %s26, 1
        %s588 = scalar_select %p587, %s26, 1
        %s589 = scalar_lea.vmem %s5, %s588
        %p590 = scmp.lt.s32.totalorder %s26, 1
        %s591 = scalar_select %p590, %s26, 1
        %s592 = scalar_lea.vmem %s6, %s591
        %p593 = scmp.lt.s32.totalorder %s26, 1
        %s594 = scalar_select %p593, %s26, 1
        %s595 = scalar_lea.vmem %s7, %s594
        %p596 = scmp.lt.s32.totalorder %s26, 1
        %s597 = scalar_select %p596, %s26, 1
        %s598 = smul.addr %s597, 4
        %s599 = smul.addr %s598, 4
        %s600 = scalar_lea.vmem %s8, %s599
        %p601 = scmp.lt.s32.totalorder %s26, 1
        %s602 = scalar_select %p601, %s26, 1
        %s603 = scalar_lea.vmem %s9, %s602
        %p604 = scmp.lt.s32.totalorder %s26, 1
        %s605 = scalar_select %p604, %s26, 1
        %s606 = smul.addr %s605, 16
        %s607 = smul.addr %s606, 4
        %s608 = scalar_lea.vmem %s10, %s607
        %p609 = scmp.lt.s32.totalorder %s26, 1
        %s610 = scalar_select %p609, %s26, 1
        %s611 = scalar_lea.vmem %s11, %s610
        %p613 = scmp.eq.s32.totalorder %s26, 0
        // Predicated region
        $region77: #{tpu_custom_call.1} parent=75 // pred_check
          %p614 = pneg %p613
        $region78: #{tpu_custom_call.1} parent=75 // pred_check_branch
          %616 = sbr.rel (%p614) target = $region80
        $region79: #{tpu_custom_call.1} parent=75 // pred_region
          %v617 = vld [vmem:[%s0] sm:$0xff]
          %v618 = vld [vmem:[%s0 + $0x8] sm:$0xff]
          %vm619 = vcmask 261120
          %620 = vst.msk [vmem:[#allocation2] sm:$0xff] %vm619, %v617
          %621 = vst.msk [vmem:[#allocation2 + $0x8] sm:$0xff] %vm619, %v618
          %v622 = vlaneseq
          %v623 = vshrl.u32 %v622, 7
          %v624 = vlaneseq
          %v625 = vand.u32 %v624, 127
          %vm626 = vcmp.gt.s32.totalorder %v625, %v623
          %v627 = vsel %vm626, -1e+30, 0.0
          %vm628 = vcmask 64512
          %629 = vst.msk [vmem:[#allocation3] sm:$0xff] %vm628, %v627
        $region80: #{tpu_custom_call.1} parent=75 // pred_fallthru
          _
        %v630 = vld [vmem:[#allocation2] sm:$0xff]
        %v631 = vld [vmem:[#allocation2 + $0x8] sm:$0xff]
        %v632 = vld [vmem:[%s573] sm:$0x1]
        %v633 = vld [vmem:[%s576] sm:$0x1]
        %vm634 = vcmask 261120
        %v635 = vsel %vm634, %v630, 0.0
        %636 = vadd.xlane.f32.xlu0 %v635
        %v637 = vpop.xlane.xlu0 %636
        %v638 = vsel %vm634, %v631, 0.0
        %639 = vadd.xlane.f32.xlu0 %v638
        %v640 = vpop.xlane.xlu0 %639
        %v641 = vrcp.pop 32.0
        %v642 = vmul.f32 %v637, %v641
        %v643 = vmul.f32 %v640, %v641
        %v644 = vsub.f32 %v630, %v642
        %v645 = vsub.f32 %v631, %v643
        %v646 = vmul.f32 %v644, %v644
        %v647 = vmul.f32 %v645, %v645
        %v648 = vsel %vm634, %v646, 0.0
        %649 = vadd.xlane.f32.xlu0 %v648
        %v650 = vpop.xlane.xlu0 %649
        %v651 = vsel %vm634, %v647, 0.0
        %652 = vadd.xlane.f32.xlu0 %v651
        %v653 = vpop.xlane.xlu0 %652
        %v654 = vmul.f32 %v650, %v641
        %v655 = vmul.f32 %v653, %v641
        %v656 = vadd.f32 %v654, 1e-05
        %v657 = vadd.f32 %v655, 1e-05
        %v658 = vrsqrt.pop %v656
        %v659 = vmul.f32 %v656, %v658
        %vm660 = vcmp.eq.f32.partialorder %v656, inf
        %v661 = vsel %vm660, %v656, %v659
        %vm662 = vcmp.eq.f32.partialorder %v656, 0.0
        %v663 = vand.u32 %v656, 2147483648
        %v664 = vsel %vm662, %v663, %v661
        %v665 = vrsqrt.pop %v657
        %v666 = vmul.f32 %v657, %v665
        %vm667 = vcmp.eq.f32.partialorder %v657, inf
        %v668 = vsel %vm667, %v657, %v666
        %vm669 = vcmp.eq.f32.partialorder %v657, 0.0
        %v670 = vand.u32 %v657, 2147483648
        %v671 = vsel %vm669, %v670, %v668
        %v672 = vrcp.pop %v664
        %v673 = vmul.f32 %v644, %v672
        %v674 = vrcp.pop %v671
        %v675 = vmul.f32 %v645, %v674
        %v677 = vlaneseq
        %v678 = vshrl.u32 %v677, 7
        %v679 = vsub.s32 0, %v678
        %v680 = vrot.slane %v632, %v679
        %v682 = vmul.f32 %v680, %v673
        %v683 = vmul.f32 %v680, %v675
        %v685 = vlaneseq
        %v686 = vshrl.u32 %v685, 7
        %v687 = vsub.s32 0, %v686
        %v688 = vrot.slane %v633, %v687
        %v690 = vadd.f32 %v682, %v688
        %v691 = vadd.f32 %v683, %v688
        %v692 = vld [vmem:[%s581] sm:$0xf]
        %v693 = vld [vmem:[%s581 + $0x4] sm:$0xf]
        %v694 = vld [vmem:[%s581 + $0x8] sm:$0xf]
        %v695 = vld [vmem:[%s581 + $0xc] sm:$0xf]
        %v696 = vpack.c.bf16 %v691, %v690
        %v701 = vunpack.c.l.b16 %v692
        %v702 = vunpack.c.l.b16 %v693
        %v703 = vunpack.c.l.b16 %v694
        %v704 = vunpack.c.l.b16 %v695
        %v705 = vpack.c.b16 %v702, %v701
        %v706 = vpack.c.b16 %v704, %v703
        %v710 = vsel %vm634, %v696, 0
        %712 = vmatprep.subr.bf16.mxu0 0
        %713 = vmatpush1.bf16.msra.mxu0 %v705
        %714 = vmatprep.subr.bf16.mxu0 0
        %715 = vmatpush1.bf16.msra.mxu0 %v706
        %716 = vmatprep.subr.bf16.mxu0 0
        %717 = vmatpush1.bf16.msra.mxu0 0
        %718 = vmatprep.subr.bf16.mxu0 0
        %719 = vmatpush1.bf16.msra.mxu0 0
        %720 = vmatprep.subr.bf16.mxu0 0
        %721 = vmatpush1.bf16.msra.mxu0 0
        %722 = vmatprep.subr.bf16.mxu0 0
        %723 = vmatpush1.bf16.msra.mxu0 0
        %724 = vmatprep.subr.bf16.mxu0 0
        %725 = vmatpush1.bf16.msra.mxu0 0
        %726 = vmatprep.subr.bf16.mxu0 0
        %727 = vmatpush1.bf16.msra.mxu0 0
        %728 = vmatprep.subr.bf16.mxu0 0
        %729 = vmatpush1.bf16.msra.mxu0 0
        %730 = vmatprep.subr.bf16.mxu0 0
        %731 = vmatpush1.bf16.msra.mxu0 0
        %732 = vmatprep.subr.bf16.mxu0 0
        %733 = vmatpush1.bf16.msra.mxu0 0
        %734 = vmatprep.subr.bf16.mxu0 0
        %735 = vmatpush1.bf16.msra.mxu0 0
        %736 = vmatprep.subr.bf16.mxu0 0
        %737 = vmatpush1.bf16.msra.mxu0 0
        %738 = vmatprep.subr.bf16.mxu0 0
        %739 = vmatpush1.bf16.msra.mxu0 0
        %740 = vmatprep.subr.bf16.mxu0 0
        %741 = vmatpush1.bf16.msra.mxu0 0
        %742 = vmatprep.subr.bf16.mxu0 0
        %743 = vmatpush1.bf16.msra.mxu0 0
        %744 = vmatprep.mubr.bf16.mxu0 0
        %745 = vmatmul.mubr.bf16.gmra.mrb[0].mxu0 %v710
        %v746 = vpop.f32.mrb[0].mxu0
        %v747 = vadd.f32 0.0, %v746
        %v748 = vpop.f32.mrb[0].mxu0
        %v749 = vpop.f32.mrb[0].mxu0
        %v750 = vadd.f32 0.0, %v749
        %v751 = vpop.f32.mrb[0].mxu0
        %752 = vdwg.mxu0
        %v753 = vmul.f32 %v747, 0.35355338
        %v754 = vmul.f32 %v750, 0.35355338
        %v755 = vld [vmem:[#allocation3] sm:$0xff]
        %757 = vrot.lane.b32.xlu0 %v753, 120
        %v758 = vpop.permute.xlu0 %757
        %760 = vrot.lane.b32.xlu0 %v753, 112
        %v761 = vpop.permute.xlu0 %760
        %763 = vrot.lane.b32.xlu0 %v753, 104
        %v764 = vpop.permute.xlu0 %763
        %v766 = vcombine.low %v753, %v761
        %v767 = vcombine.high %v753, %v761
        %v769 = vunpack.c.l.s4 1983009808
        %v770 = vunpack.c.0.s8 %v769
        %v771 = vlaneseq
        %v772 = vshrl.u32 %v771, 7
        %v773 = vsub.s32 %v770, %v772
        %v774 = vrot.slane %v766, %v773
        %v776 = vunpack.c.l.s4 1983009808
        %v777 = vunpack.c.0.s8 %v776
        %v778 = vlaneseq
        %v779 = vshrl.u32 %v778, 7
        %v780 = vsub.s32 %v777, %v779
        %v781 = vrot.slane %v767, %v780
        %v782 = vcombine.low %v758, %v764
        %v783 = vcombine.high %v758, %v764
        %v785 = vunpack.c.l.s4 1983009808
        %v786 = vunpack.c.0.s8 %v785
        %v787 = vlaneseq
        %v788 = vshrl.u32 %v787, 7
        %v789 = vsub.s32 %v786, %v788
        %v790 = vrot.slane %v782, %v789
        %v792 = vunpack.c.l.s4 1983009808
        %v793 = vunpack.c.0.s8 %v792
        %v794 = vlaneseq
        %v795 = vshrl.u32 %v794, 7
        %v796 = vsub.s32 %v793, %v795
        %v797 = vrot.slane %v783, %v796
        %v798 = vcombine.low %v774, %v790
        %v799 = vcombine.high %v774, %v790
        %v801 = vunpack.c.l.s4 1934713408
        %v802 = vunpack.c.0.s8 %v801
        %v803 = vlaneseq
        %v804 = vshrl.u32 %v803, 7
        %v805 = vsub.s32 %v802, %v804
        %v806 = vrot.slane %v798, %v805
        %v808 = vunpack.c.l.s4 1934713408
        %v809 = vunpack.c.0.s8 %v808
        %v810 = vlaneseq
        %v811 = vshrl.u32 %v810, 7
        %v812 = vsub.s32 %v809, %v811
        %v813 = vrot.slane %v799, %v812
        %v814 = vcombine.low %v781, %v797
        %v815 = vcombine.high %v781, %v797
        %v817 = vunpack.c.l.s4 1934713408
        %v818 = vunpack.c.0.s8 %v817
        %v819 = vlaneseq
        %v820 = vshrl.u32 %v819, 7
        %v821 = vsub.s32 %v818, %v820
        %v822 = vrot.slane %v814, %v821
        %v824 = vunpack.c.l.s4 1934713408
        %v825 = vunpack.c.0.s8 %v824
        %v826 = vlaneseq
        %v827 = vshrl.u32 %v826, 7
        %v828 = vsub.s32 %v825, %v827
        %v829 = vrot.slane %v815, %v828
        %v830 = vcombine.high %v806, 0.0
        %v831 = vcombine.high %v813, 0.0
        %v832 = vcombine.high %v822, 0.0
        %v833 = vcombine.high %v829, 0.0
        %v834 = vcombine.low %v806, %v813
        %v836 = vunpack.c.l.s4 1983009808
        %v837 = vunpack.c.0.s8 %v836
        %v838 = vlaneseq
        %v839 = vshrl.u32 %v838, 7
        %v840 = vsub.s32 %v837, %v839
        %v841 = vrot.slane %v834, %v840
        %v842 = vcombine.low %v830, %v831
        %v844 = vunpack.c.l.s4 1983009808
        %v845 = vunpack.c.0.s8 %v844
        %v846 = vlaneseq
        %v847 = vshrl.u32 %v846, 7
        %v848 = vsub.s32 %v845, %v847
        %v849 = vrot.slane %v842, %v848
        %v850 = vcombine.low %v822, %v829
        %v852 = vunpack.c.l.s4 1983009808
        %v853 = vunpack.c.0.s8 %v852
        %v854 = vlaneseq
        %v855 = vshrl.u32 %v854, 7
        %v856 = vsub.s32 %v853, %v855
        %v857 = vrot.slane %v850, %v856
        %v858 = vcombine.low %v832, %v833
        %v860 = vunpack.c.l.s4 1983009808
        %v861 = vunpack.c.0.s8 %v860
        %v862 = vlaneseq
        %v863 = vshrl.u32 %v862, 7
        %v864 = vsub.s32 %v861, %v863
        %v865 = vrot.slane %v858, %v864
        %v866 = vcombine.low %v841, %v849
        %v867 = vcombine.high %v841, %v849
        %v869 = vunpack.c.l.s4 1934713408
        %v870 = vunpack.c.0.s8 %v869
        %v871 = vlaneseq
        %v872 = vshrl.u32 %v871, 7
        %v873 = vsub.s32 %v870, %v872
        %v874 = vrot.slane %v866, %v873
        %v876 = vunpack.c.l.s4 1934713408
        %v877 = vunpack.c.0.s8 %v876
        %v878 = vlaneseq
        %v879 = vshrl.u32 %v878, 7
        %v880 = vsub.s32 %v877, %v879
        %v881 = vrot.slane %v867, %v880
        %v882 = vcombine.low %v857, %v865
        %v883 = vcombine.high %v857, %v865
        %v885 = vunpack.c.l.s4 1934713408
        %v886 = vunpack.c.0.s8 %v885
        %v887 = vlaneseq
        %v888 = vshrl.u32 %v887, 7
        %v889 = vsub.s32 %v886, %v888
        %v890 = vrot.slane %v882, %v889
        %v892 = vunpack.c.l.s4 1934713408
        %v893 = vunpack.c.0.s8 %v892
        %v894 = vlaneseq
        %v895 = vshrl.u32 %v894, 7
        %v896 = vsub.s32 %v893, %v895
        %v897 = vrot.slane %v883, %v896
        %v898 = vcombine.low %v874, %v890
        %v899 = vcombine.high %v874, %v890
        %v900 = vcombine.low %v881, %v897
        %v901 = vcombine.high %v881, %v897
        %903 = vrot.lane.b32.xlu0 %v747, 120
        %v904 = vpop.permute.xlu0 %903
        %905 = vrot.lane.b32.xlu0 %v747, 112
        %v906 = vpop.permute.xlu0 %905
        %907 = vrot.lane.b32.xlu0 %v747, 104
        %v908 = vpop.permute.xlu0 %907
        %909 = vrot.lane.b32.xlu0 %v747, 96
        %v910 = vpop.permute.xlu0 %909
        %911 = vrot.lane.b32.xlu0 %v904, 96
        %v912 = vpop.permute.xlu0 %911
        %913 = vrot.lane.b32.xlu0 %v906, 96
        %v914 = vpop.permute.xlu0 %913
        %915 = vrot.lane.b32.xlu0 %v908, 96
        %v916 = vpop.permute.xlu0 %915
        %v921 = vcombine.low %v910, %v914
        %v922 = vcombine.high %v910, %v914
        %v924 = vunpack.c.l.s4 1983009808
        %v925 = vunpack.c.0.s8 %v924
        %v926 = vlaneseq
        %v927 = vshrl.u32 %v926, 7
        %v928 = vsub.s32 %v925, %v927
        %v929 = vrot.slane %v921, %v928
        %v931 = vunpack.c.l.s4 1983009808
        %v932 = vunpack.c.0.s8 %v931
        %v933 = vlaneseq
        %v934 = vshrl.u32 %v933, 7
        %v935 = vsub.s32 %v932, %v934
        %v936 = vrot.slane %v922, %v935
        %v937 = vcombine.low %v912, %v916
        %v938 = vcombine.high %v912, %v916
        %v940 = vunpack.c.l.s4 1983009808
        %v941 = vunpack.c.0.s8 %v940
        %v942 = vlaneseq
        %v943 = vshrl.u32 %v942, 7
        %v944 = vsub.s32 %v941, %v943
        %v945 = vrot.slane %v937, %v944
        %v947 = vunpack.c.l.s4 1983009808
        %v948 = vunpack.c.0.s8 %v947
        %v949 = vlaneseq
        %v950 = vshrl.u32 %v949, 7
        %v951 = vsub.s32 %v948, %v950
        %v952 = vrot.slane %v938, %v951
        %v953 = vcombine.low %v929, %v945
        %v954 = vcombine.high %v929, %v945
        %v956 = vunpack.c.l.s4 1934713408
        %v957 = vunpack.c.0.s8 %v956
        %v958 = vlaneseq
        %v959 = vshrl.u32 %v958, 7
        %v960 = vsub.s32 %v957, %v959
        %v961 = vrot.slane %v953, %v960
        %v963 = vunpack.c.l.s4 1934713408
        %v964 = vunpack.c.0.s8 %v963
        %v965 = vlaneseq
        %v966 = vshrl.u32 %v965, 7
        %v967 = vsub.s32 %v964, %v966
        %v968 = vrot.slane %v954, %v967
        %v969 = vcombine.low %v936, %v952
        %v970 = vcombine.high %v936, %v952
        %v972 = vunpack.c.l.s4 1934713408
        %v973 = vunpack.c.0.s8 %v972
        %v974 = vlaneseq
        %v975 = vshrl.u32 %v974, 7
        %v976 = vsub.s32 %v973, %v975
        %v977 = vrot.slane %v969, %v976
        %v979 = vunpack.c.l.s4 1934713408
        %v980 = vunpack.c.0.s8 %v979
        %v981 = vlaneseq
        %v982 = vshrl.u32 %v981, 7
        %v983 = vsub.s32 %v980, %v982
        %v984 = vrot.slane %v970, %v983
        %v985 = vcombine.high %v961, 0.0
        %v986 = vcombine.high %v968, 0.0
        %v987 = vcombine.high %v977, 0.0
        %v988 = vcombine.high %v984, 0.0
        %v989 = vcombine.low %v961, %v968
        %v991 = vunpack.c.l.s4 1983009808
        %v992 = vunpack.c.0.s8 %v991
        %v993 = vlaneseq
        %v994 = vshrl.u32 %v993, 7
        %v995 = vsub.s32 %v992, %v994
        %v996 = vrot.slane %v989, %v995
        %v997 = vcombine.low %v985, %v986
        %v999 = vunpack.c.l.s4 1983009808
        %v1000 = vunpack.c.0.s8 %v999
        %v1001 = vlaneseq
        %v1002 = vshrl.u32 %v1001, 7
        %v1003 = vsub.s32 %v1000, %v1002
        %v1004 = vrot.slane %v997, %v1003
        %v1005 = vcombine.low %v977, %v984
        %v1007 = vunpack.c.l.s4 1983009808
        %v1008 = vunpack.c.0.s8 %v1007
        %v1009 = vlaneseq
        %v1010 = vshrl.u32 %v1009, 7
        %v1011 = vsub.s32 %v1008, %v1010
        %v1012 = vrot.slane %v1005, %v1011
        %v1013 = vcombine.low %v987, %v988
        %v1015 = vunpack.c.l.s4 1983009808
        %v1016 = vunpack.c.0.s8 %v1015
        %v1017 = vlaneseq
        %v1018 = vshrl.u32 %v1017, 7
        %v1019 = vsub.s32 %v1016, %v1018
        %v1020 = vrot.slane %v1013, %v1019
        %v1021 = vcombine.low %v996, %v1004
        %v1022 = vcombine.high %v996, %v1004
        %v1024 = vunpack.c.l.s4 1934713408
        %v1025 = vunpack.c.0.s8 %v1024
        %v1026 = vlaneseq
        %v1027 = vshrl.u32 %v1026, 7
        %v1028 = vsub.s32 %v1025, %v1027
        %v1029 = vrot.slane %v1021, %v1028
        %v1031 = vunpack.c.l.s4 1934713408
        %v1032 = vunpack.c.0.s8 %v1031
        %v1033 = vlaneseq
        %v1034 = vshrl.u32 %v1033, 7
        %v1035 = vsub.s32 %v1032, %v1034
        %v1036 = vrot.slane %v1022, %v1035
        %v1037 = vcombine.low %v1012, %v1020
        %v1038 = vcombine.high %v1012, %v1020
        %v1040 = vunpack.c.l.s4 1934713408
        %v1041 = vunpack.c.0.s8 %v1040
        %v1042 = vlaneseq
        %v1043 = vshrl.u32 %v1042, 7
        %v1044 = vsub.s32 %v1041, %v1043
        %v1045 = vrot.slane %v1037, %v1044
        %v1047 = vunpack.c.l.s4 1934713408
        %v1048 = vunpack.c.0.s8 %v1047
        %v1049 = vlaneseq
        %v1050 = vshrl.u32 %v1049, 7
        %v1051 = vsub.s32 %v1048, %v1050
        %v1052 = vrot.slane %v1038, %v1051
        %v1053 = vcombine.low %v1029, %v1045
        %v1054 = vcombine.high %v1029, %v1045
        %v1055 = vcombine.low %v1036, %v1052
        %v1056 = vcombine.high %v1036, %v1052
        %1057 = vrot.lane.b32.xlu0 %v747, 64
        %v1058 = vpop.permute.xlu0 %1057
        %1059 = vrot.lane.b32.xlu0 %v904, 64
        %v1060 = vpop.permute.xlu0 %1059
        %1061 = vrot.lane.b32.xlu0 %v906, 64
        %v1062 = vpop.permute.xlu0 %1061
        %1063 = vrot.lane.b32.xlu0 %v908, 64
        %v1064 = vpop.permute.xlu0 %1063
        %v1069 = vcombine.low %v1058, %v1062
        %v1070 = vcombine.high %v1058, %v1062
        %v1072 = vunpack.c.l.s4 1983009808
        %v1073 = vunpack.c.0.s8 %v1072
        %v1074 = vlaneseq
        %v1075 = vshrl.u32 %v1074, 7
        %v1076 = vsub.s32 %v1073, %v1075
        %v1077 = vrot.slane %v1069, %v1076
        %v1079 = vunpack.c.l.s4 1983009808
        %v1080 = vunpack.c.0.s8 %v1079
        %v1081 = vlaneseq
        %v1082 = vshrl.u32 %v1081, 7
        %v1083 = vsub.s32 %v1080, %v1082
        %v1084 = vrot.slane %v1070, %v1083
        %v1085 = vcombine.low %v1060, %v1064
        %v1086 = vcombine.high %v1060, %v1064
        %v1088 = vunpack.c.l.s4 1983009808
        %v1089 = vunpack.c.0.s8 %v1088
        %v1090 = vlaneseq
        %v1091 = vshrl.u32 %v1090, 7
        %v1092 = vsub.s32 %v1089, %v1091
        %v1093 = vrot.slane %v1085, %v1092
        %v1095 = vunpack.c.l.s4 1983009808
        %v1096 = vunpack.c.0.s8 %v1095
        %v1097 = vlaneseq
        %v1098 = vshrl.u32 %v1097, 7
        %v1099 = vsub.s32 %v1096, %v1098
        %v1100 = vrot.slane %v1086, %v1099
        %v1101 = vcombine.low %v1077, %v1093
        %v1102 = vcombine.high %v1077, %v1093
        %v1104 = vunpack.c.l.s4 1934713408
        %v1105 = vunpack.c.0.s8 %v1104
        %v1106 = vlaneseq
        %v1107 = vshrl.u32 %v1106, 7
        %v1108 = vsub.s32 %v1105, %v1107
        %v1109 = vrot.slane %v1101, %v1108
        %v1111 = vunpack.c.l.s4 1934713408
        %v1112 = vunpack.c.0.s8 %v1111
        %v1113 = vlaneseq
        %v1114 = vshrl.u32 %v1113, 7
        %v1115 = vsub.s32 %v1112, %v1114
        %v1116 = vrot.slane %v1102, %v1115
        %v1117 = vcombine.low %v1084, %v1100
        %v1118 = vcombine.high %v1084, %v1100
        %v1120 = vunpack.c.l.s4 1934713408
        %v1121 = vunpack.c.0.s8 %v1120
        %v1122 = vlaneseq
        %v1123 = vshrl.u32 %v1122, 7
        %v1124 = vsub.s32 %v1121, %v1123
        %v1125 = vrot.slane %v1117, %v1124
        %v1127 = vunpack.c.l.s4 1934713408
        %v1128 = vunpack.c.0.s8 %v1127
        %v1129 = vlaneseq
        %v1130 = vshrl.u32 %v1129, 7
        %v1131 = vsub.s32 %v1128, %v1130
        %v1132 = vrot.slane %v1118, %v1131
        %v1133 = vcombine.high %v1109, 0.0
        %v1134 = vcombine.high %v1116, 0.0
        %v1135 = vcombine.high %v1125, 0.0
        %v1136 = vcombine.high %v1132, 0.0
        %v1137 = vcombine.low %v1109, %v1116
        %v1139 = vunpack.c.l.s4 1983009808
        %v1140 = vunpack.c.0.s8 %v1139
        %v1141 = vlaneseq
        %v1142 = vshrl.u32 %v1141, 7
        %v1143 = vsub.s32 %v1140, %v1142
        %v1144 = vrot.slane %v1137, %v1143
        %v1145 = vcombine.low %v1133, %v1134
        %v1147 = vunpack.c.l.s4 1983009808
        %v1148 = vunpack.c.0.s8 %v1147
        %v1149 = vlaneseq
        %v1150 = vshrl.u32 %v1149, 7
        %v1151 = vsub.s32 %v1148, %v1150
        %v1152 = vrot.slane %v1145, %v1151
        %v1153 = vcombine.low %v1125, %v1132
        %v1155 = vunpack.c.l.s4 1983009808
        %v1156 = vunpack.c.0.s8 %v1155
        %v1157 = vlaneseq
        %v1158 = vshrl.u32 %v1157, 7
        %v1159 = vsub.s32 %v1156, %v1158
        %v1160 = vrot.slane %v1153, %v1159
        %v1161 = vcombine.low %v1135, %v1136
        %v1163 = vunpack.c.l.s4 1983009808
        %v1164 = vunpack.c.0.s8 %v1163
        %v1165 = vlaneseq
        %v1166 = vshrl.u32 %v1165, 7
        %v1167 = vsub.s32 %v1164, %v1166
        %v1168 = vrot.slane %v1161, %v1167
        %v1169 = vcombine.low %v1144, %v1152
        %v1170 = vcombine.high %v1144, %v1152
        %v1172 = vunpack.c.l.s4 1934713408
        %v1173 = vunpack.c.0.s8 %v1172
        %v1174 = vlaneseq
        %v1175 = vshrl.u32 %v1174, 7
        %v1176 = vsub.s32 %v1173, %v1175
        %v1177 = vrot.slane %v1169, %v1176
        %v1179 = vunpack.c.l.s4 1934713408
        %v1180 = vunpack.c.0.s8 %v1179
        %v1181 = vlaneseq
        %v1182 = vshrl.u32 %v1181, 7
        %v1183 = vsub.s32 %v1180, %v1182
        %v1184 = vrot.slane %v1170, %v1183
        %v1185 = vcombine.low %v1160, %v1168
        %v1186 = vcombine.high %v1160, %v1168
        %v1188 = vunpack.c.l.s4 1934713408
        %v1189 = vunpack.c.0.s8 %v1188
        %v1190 = vlaneseq
        %v1191 = vshrl.u32 %v1190, 7
        %v1192 = vsub.s32 %v1189, %v1191
        %v1193 = vrot.slane %v1185, %v1192
        %v1195 = vunpack.c.l.s4 1934713408
        %v1196 = vunpack.c.0.s8 %v1195
        %v1197 = vlaneseq
        %v1198 = vshrl.u32 %v1197, 7
        %v1199 = vsub.s32 %v1196, %v1198
        %v1200 = vrot.slane %v1186, %v1199
        %v1201 = vcombine.low %v1177, %v1193
        %v1202 = vcombine.high %v1177, %v1193
        %v1203 = vcombine.low %v1184, %v1200
        %v1204 = vcombine.high %v1184, %v1200
        %v1205 = vpack.c.bf16 %v898, %v898
        %v1206 = vpack.c.bf16 %v899, %v899
        %v1207 = vpack.c.bf16 %v900, %v900
        %v1208 = vpack.c.bf16 %v901, %v901
        %v1209 = vpack.c.bf16 %v1053, %v1053
        %v1210 = vpack.c.bf16 %v1054, %v1054
        %v1211 = vpack.c.bf16 %v1055, %v1055
        %v1212 = vpack.c.bf16 %v1056, %v1056
        %vm1213 = vcmask 64512
        %v1215 = vsel %vm1213, %v1205, 0
        %v1218 = vsel %vm1213, %v1209, 0
        %1220 = vmatprep.subr.bf16.mxu0 0
        %1221 = vmatpush1.bf16.xpose.msra.mxu0 %v1218
        %1222 = vmatprep.subr.bf16.mxu0 0
        %1223 = vmatpush1.bf16.xpose.msra.mxu0 0
        %1224 = vmatprep.subr.bf16.mxu0 0
        %1225 = vmatpush1.bf16.xpose.msra.mxu0 0
        %1226 = vmatprep.subr.bf16.mxu0 0
        %1227 = vmatpush1.bf16.xpose.msra.mxu0 0
        %1228 = vmatprep.subr.bf16.mxu0 0
        %1229 = vmatpush1.bf16.xpose.msra.mxu0 0
        %1230 = vmatprep.subr.bf16.mxu0 0
        %1231 = vmatpush1.bf16.xpose.msra.mxu0 0
        %1232 = vmatprep.subr.bf16.mxu0 0
        %1233 = vmatpush1.bf16.xpose.msra.mxu0 0
        %1234 = vmatprep.subr.bf16.mxu0 0
        %1235 = vmatpush1.bf16.xpose.msra.mxu0 0
        %1236 = vmatprep.subr.bf16.mxu0 0
        %1237 = vmatpush1.bf16.xpose.msra.mxu0 0
        %1238 = vmatprep.subr.bf16.mxu0 0
        %1239 = vmatpush1.bf16.xpose.msra.mxu0 0
        %1240 = vmatprep.subr.bf16.mxu0 0
        %1241 = vmatpush1.bf16.xpose.msra.mxu0 0
        %1242 = vmatprep.subr.bf16.mxu0 0
        %1243 = vmatpush1.bf16.xpose.msra.mxu0 0
        %1244 = vmatprep.subr.bf16.mxu0 0
        %1245 = vmatpush1.bf16.xpose.msra.mxu0 0
        %1246 = vmatprep.subr.bf16.mxu0 0
        %1247 = vmatpush1.bf16.xpose.msra.mxu0 0
        %1248 = vmatprep.subr.bf16.mxu0 0
        %1249 = vmatpush1.bf16.xpose.msra.mxu0 0
        %1250 = vmatprep.subr.bf16.mxu0 0
        %1251 = vmatpush1.bf16.xpose.msra.mxu0 0
        %1252 = vmatprep.mubr.bf16.mxu0 0
        %1253 = vmatmul.mubr.bf16.gmra.mrb[0].mxu0 %v1215
        %v1254 = vpop.f32.mrb[0].mxu0
        %v1255 = vadd.f32 %v755, %v1254
        %v1256 = vpop.f32.mrb[0].mxu0
        %v1257 = vpop.f32.mrb[0].mxu0
        %v1258 = vpop.f32.mrb[0].mxu0
        %1259 = vdwg.mxu0
        %v1261 = vsel %vm1213, %v1206, 0
        %v1264 = vsel %vm1213, %v1210, 0
        %1266 = vmatprep.subr.bf16.mxu0 0
        %1267 = vmatpush1.bf16.xpose.msra.mxu0 %v1264
        %1268 = vmatprep.subr.bf16.mxu0 0
        %1269 = vmatpush1.bf16.xpose.msra.mxu0 0
        %1270 = vmatprep.subr.bf16.mxu0 0
        %1271 = vmatpush1.bf16.xpose.msra.mxu0 0
        %1272 = vmatprep.subr.bf16.mxu0 0
        %1273 = vmatpush1.bf16.xpose.msra.mxu0 0
        %1274 = vmatprep.subr.bf16.mxu0 0
        %1275 = vmatpush1.bf16.xpose.msra.mxu0 0
        %1276 = vmatprep.subr.bf16.mxu0 0
        %1277 = vmatpush1.bf16.xpose.msra.mxu0 0
        %1278 = vmatprep.subr.bf16.mxu0 0
        %1279 = vmatpush1.bf16.xpose.msra.mxu0 0
        %1280 = vmatprep.subr.bf16.mxu0 0
        %1281 = vmatpush1.bf16.xpose.msra.mxu0 0
        %1282 = vmatprep.subr.bf16.mxu0 0
        %1283 = vmatpush1.bf16.xpose.msra.mxu0 0
        %1284 = vmatprep.subr.bf16.mxu0 0
        %1285 = vmatpush1.bf16.xpose.msra.mxu0 0
        %1286 = vmatprep.subr.bf16.mxu0 0
        %1287 = vmatpush1.bf16.xpose.msra.mxu0 0
        %1288 = vmatprep.subr.bf16.mxu0 0
        %1289 = vmatpush1.bf16.xpose.msra.mxu0 0
        %1290 = vmatprep.subr.bf16.mxu0 0
        %1291 = vmatpush1.bf16.xpose.msra.mxu0 0
        %1292 = vmatprep.subr.bf16.mxu0 0
        %1293 = vmatpush1.bf16.xpose.msra.mxu0 0
        %1294 = vmatprep.subr.bf16.mxu0 0
        %1295 = vmatpush1.bf16.xpose.msra.mxu0 0
        %1296 = vmatprep.subr.bf16.mxu0 0
        %1297 = vmatpush1.bf16.xpose.msra.mxu0 0
        %1298 = vmatprep.mubr.bf16.mxu0 0
        %1299 = vmatmul.mubr.bf16.gmra.mrb[0].mxu0 %v1261
        %v1300 = vpop.f32.mrb[0].mxu0
        %v1301 = vadd.f32 %v755, %v1300
        %v1302 = vpop.f32.mrb[0].mxu0
        %v1303 = vpop.f32.mrb[0].mxu0
        %v1304 = vpop.f32.mrb[0].mxu0
        %1305 = vdwg.mxu0
        %v1307 = vsel %vm1213, %v1207, 0
        %v1310 = vsel %vm1213, %v1211, 0
        %1312 = vmatprep.subr.bf16.mxu0 0
        %1313 = vmatpush1.bf16.xpose.msra.mxu0 %v1310
        %1314 = vmatprep.subr.bf16.mxu0 0
        %1315 = vmatpush1.bf16.xpose.msra.mxu0 0
        %1316 = vmatprep.subr.bf16.mxu0 0
        %1317 = vmatpush1.bf16.xpose.msra.mxu0 0
        %1318 = vmatprep.subr.bf16.mxu0 0
        %1319 = vmatpush1.bf16.xpose.msra.mxu0 0
        %1320 = vmatprep.subr.bf16.mxu0 0
        %1321 = vmatpush1.bf16.xpose.msra.mxu0 0
        %1322 = vmatprep.subr.bf16.mxu0 0
        %1323 = vmatpush1.bf16.xpose.msra.mxu0 0
        %1324 = vmatprep.subr.bf16.mxu0 0
        %1325 = vmatpush1.bf16.xpose.msra.mxu0 0
        %1326 = vmatprep.subr.bf16.mxu0 0
        %1327 = vmatpush1.bf16.xpose.msra.mxu0 0
        %1328 = vmatprep.subr.bf16.mxu0 0
        %1329 = vmatpush1.bf16.xpose.msra.mxu0 0
        %1330 = vmatprep.subr.bf16.mxu0 0
        %1331 = vmatpush1.bf16.xpose.msra.mxu0 0
        %1332 = vmatprep.subr.bf16.mxu0 0
        %1333 = vmatpush1.bf16.xpose.msra.mxu0 0
        %1334 = vmatprep.subr.bf16.mxu0 0
        %1335 = vmatpush1.bf16.xpose.msra.mxu0 0
        %1336 = vmatprep.subr.bf16.mxu0 0
        %1337 = vmatpush1.bf16.xpose.msra.mxu0 0
        %1338 = vmatprep.subr.bf16.mxu0 0
        %1339 = vmatpush1.bf16.xpose.msra.mxu0 0
        %1340 = vmatprep.subr.bf16.mxu0 0
        %1341 = vmatpush1.bf16.xpose.msra.mxu0 0
        %1342 = vmatprep.subr.bf16.mxu0 0
        %1343 = vmatpush1.bf16.xpose.msra.mxu0 0
        %1344 = vmatprep.mubr.bf16.mxu0 0
        %1345 = vmatmul.mubr.bf16.gmra.mrb[0].mxu0 %v1307
        %v1346 = vpop.f32.mrb[0].mxu0
        %v1347 = vadd.f32 %v755, %v1346
        %v1348 = vpop.f32.mrb[0].mxu0
        %v1349 = vpop.f32.mrb[0].mxu0
        %v1350 = vpop.f32.mrb[0].mxu0
        %1351 = vdwg.mxu0
        %v1353 = vsel %vm1213, %v1208, 0
        %v1356 = vsel %vm1213, %v1212, 0
        %1358 = vmatprep.subr.bf16.mxu0 0
        %1359 = vmatpush1.bf16.xpose.msra.mxu0 %v1356
        %1360 = vmatprep.subr.bf16.mxu0 0
        %1361 = vmatpush1.bf16.xpose.msra.mxu0 0
        %1362 = vmatprep.subr.bf16.mxu0 0
        %1363 = vmatpush1.bf16.xpose.msra.mxu0 0
        %1364 = vmatprep.subr.bf16.mxu0 0
        %1365 = vmatpush1.bf16.xpose.msra.mxu0 0
        %1366 = vmatprep.subr.bf16.mxu0 0
        %1367 = vmatpush1.bf16.xpose.msra.mxu0 0
        %1368 = vmatprep.subr.bf16.mxu0 0
        %1369 = vmatpush1.bf16.xpose.msra.mxu0 0
        %1370 = vmatprep.subr.bf16.mxu0 0
        %1371 = vmatpush1.bf16.xpose.msra.mxu0 0
        %1372 = vmatprep.subr.bf16.mxu0 0
        %1373 = vmatpush1.bf16.xpose.msra.mxu0 0
        %1374 = vmatprep.subr.bf16.mxu0 0
        %1375 = vmatpush1.bf16.xpose.msra.mxu0 0
        %1376 = vmatprep.subr.bf16.mxu0 0
        %1377 = vmatpush1.bf16.xpose.msra.mxu0 0
        %1378 = vmatprep.subr.bf16.mxu0 0
        %1379 = vmatpush1.bf16.xpose.msra.mxu0 0
        %1380 = vmatprep.subr.bf16.mxu0 0
        %1381 = vmatpush1.bf16.xpose.msra.mxu0 0
        %1382 = vmatprep.subr.bf16.mxu0 0
        %1383 = vmatpush1.bf16.xpose.msra.mxu0 0
        %1384 = vmatprep.subr.bf16.mxu0 0
        %1385 = vmatpush1.bf16.xpose.msra.mxu0 0
        %1386 = vmatprep.subr.bf16.mxu0 0
        %1387 = vmatpush1.bf16.xpose.msra.mxu0 0
        %1388 = vmatprep.subr.bf16.mxu0 0
        %1389 = vmatpush1.bf16.xpose.msra.mxu0 0
        %1390 = vmatprep.mubr.bf16.mxu0 0
        %1391 = vmatmul.mubr.bf16.gmra.mrb[0].mxu0 %v1353
        %v1392 = vpop.f32.mrb[0].mxu0
        %v1393 = vadd.f32 %v755, %v1392
        %v1394 = vpop.f32.mrb[0].mxu0
        %v1395 = vpop.f32.mrb[0].mxu0
        %v1396 = vpop.f32.mrb[0].mxu0
        %1397 = vdwg.mxu0
        %v1398 = vsel %vm1213, %v1255, -inf
        %1399 = vmax.xlane.f32.xlu0 %v1398
        %v1400 = vpop.xlane.xlu0 %1399
        %v1401 = vsel %vm1213, %v1301, -inf
        %1402 = vmax.xlane.f32.xlu0 %v1401
        %v1403 = vpop.xlane.xlu0 %1402
        %v1404 = vsel %vm1213, %v1347, -inf
        %1405 = vmax.xlane.f32.xlu0 %v1404
        %v1406 = vpop.xlane.xlu0 %1405
        %v1407 = vsel %vm1213, %v1393, -inf
        %1408 = vmax.xlane.f32.xlu0 %v1407
        %v1409 = vpop.xlane.xlu0 %1408
        %v1410 = vsub.f32 %v1255, %v1400
        %v1411 = vsub.f32 %v1301, %v1403
        %v1412 = vsub.f32 %v1347, %v1406
        %v1413 = vsub.f32 %v1393, %v1409
        %v1414 = vmul.f32 %v1410, 1.442695
        %v1415 = vpow.pop %v1414
        %v1416 = vmul.f32 %v1411, 1.442695
        %v1417 = vpow.pop %v1416
        %v1418 = vmul.f32 %v1412, 1.442695
        %v1419 = vpow.pop %v1418
        %v1420 = vmul.f32 %v1413, 1.442695
        %v1421 = vpow.pop %v1420
        %v1422 = vsel %vm1213, %v1415, 0.0
        %1423 = vadd.xlane.f32.xlu0 %v1422
        %v1424 = vpop.xlane.xlu0 %1423
        %v1425 = vsel %vm1213, %v1417, 0.0
        %1426 = vadd.xlane.f32.xlu0 %v1425
        %v1427 = vpop.xlane.xlu0 %1426
        %v1428 = vsel %vm1213, %v1419, 0.0
        %1429 = vadd.xlane.f32.xlu0 %v1428
        %v1430 = vpop.xlane.xlu0 %1429
        %v1431 = vsel %vm1213, %v1421, 0.0
        %1432 = vadd.xlane.f32.xlu0 %v1431
        %v1433 = vpop.xlane.xlu0 %1432
        %v1434 = vpack.c.bf16 %v1415, %v1415
        %v1435 = vpack.c.bf16 %v1417, %v1417
        %v1436 = vpack.c.bf16 %v1419, %v1419
        %v1437 = vpack.c.bf16 %v1421, %v1421
        %v1438 = vpack.c.bf16 %v1201, %v1201
        %v1439 = vpack.c.bf16 %v1202, %v1202
        %v1440 = vpack.c.bf16 %v1203, %v1203
        %v1441 = vpack.c.bf16 %v1204, %v1204
        %v1443 = vsel %vm1213, %v1434, 0
        %vm1445 = vcmask 1043456
        %v1447 = vsel %vm1445, %v1438, 0
        %1449 = vmatprep.subr.bf16.mxu0 0
        %1450 = vmatpush1.bf16.msra.mxu0 %v1447
        %1451 = vmatprep.subr.bf16.mxu0 0
        %1452 = vmatpush1.bf16.msra.mxu0 0
        %1453 = vmatprep.subr.bf16.mxu0 0
        %1454 = vmatpush1.bf16.msra.mxu0 0
        %1455 = vmatprep.subr.bf16.mxu0 0
        %1456 = vmatpush1.bf16.msra.mxu0 0
        %1457 = vmatprep.subr.bf16.mxu0 0
        %1458 = vmatpush1.bf16.msra.mxu0 0
        %1459 = vmatprep.subr.bf16.mxu0 0
        %1460 = vmatpush1.bf16.msra.mxu0 0
        %1461 = vmatprep.subr.bf16.mxu0 0
        %1462 = vmatpush1.bf16.msra.mxu0 0
        %1463 = vmatprep.subr.bf16.mxu0 0
        %1464 = vmatpush1.bf16.msra.mxu0 0
        %1465 = vmatprep.subr.bf16.mxu0 0
        %1466 = vmatpush1.bf16.msra.mxu0 0
        %1467 = vmatprep.subr.bf16.mxu0 0
        %1468 = vmatpush1.bf16.msra.mxu0 0
        %1469 = vmatprep.subr.bf16.mxu0 0
        %1470 = vmatpush1.bf16.msra.mxu0 0
        %1471 = vmatprep.subr.bf16.mxu0 0
        %1472 = vmatpush1.bf16.msra.mxu0 0
        %1473 = vmatprep.subr.bf16.mxu0 0
        %1474 = vmatpush1.bf16.msra.mxu0 0
        %1475 = vmatprep.subr.bf16.mxu0 0
        %1476 = vmatpush1.bf16.msra.mxu0 0
        %1477 = vmatprep.subr.bf16.mxu0 0
        %1478 = vmatpush1.bf16.msra.mxu0 0
        %1479 = vmatprep.subr.bf16.mxu0 0
        %1480 = vmatpush1.bf16.msra.mxu0 0
        %1481 = vmatprep.mubr.bf16.mxu0 0
        %1482 = vmatmul.mubr.bf16.gmra.mrb[0].mxu0 %v1443
        %v1483 = vpop.f32.mrb[0].mxu0
        %v1484 = vadd.f32 0.0, %v1483
        %v1485 = vpop.f32.mrb[0].mxu0
        %v1486 = vpop.f32.mrb[0].mxu0
        %v1487 = vpop.f32.mrb[0].mxu0
        %1488 = vdwg.mxu0
        %v1490 = vsel %vm1213, %v1435, 0
        %v1493 = vsel %vm1445, %v1439, 0
        %1495 = vmatprep.subr.bf16.mxu0 0
        %1496 = vmatpush1.bf16.msra.mxu0 %v1493
        %1497 = vmatprep.subr.bf16.mxu0 0
        %1498 = vmatpush1.bf16.msra.mxu0 0
        %1499 = vmatprep.subr.bf16.mxu0 0
        %1500 = vmatpush1.bf16.msra.mxu0 0
        %1501 = vmatprep.subr.bf16.mxu0 0
        %1502 = vmatpush1.bf16.msra.mxu0 0
        %1503 = vmatprep.subr.bf16.mxu0 0
        %1504 = vmatpush1.bf16.msra.mxu0 0
        %1505 = vmatprep.subr.bf16.mxu0 0
        %1506 = vmatpush1.bf16.msra.mxu0 0
        %1507 = vmatprep.subr.bf16.mxu0 0
        %1508 = vmatpush1.bf16.msra.mxu0 0
        %1509 = vmatprep.subr.bf16.mxu0 0
        %1510 = vmatpush1.bf16.msra.mxu0 0
        %1511 = vmatprep.subr.bf16.mxu0 0
        %1512 = vmatpush1.bf16.msra.mxu0 0
        %1513 = vmatprep.subr.bf16.mxu0 0
        %1514 = vmatpush1.bf16.msra.mxu0 0
        %1515 = vmatprep.subr.bf16.mxu0 0
        %1516 = vmatpush1.bf16.msra.mxu0 0
        %1517 = vmatprep.subr.bf16.mxu0 0
        %1518 = vmatpush1.bf16.msra.mxu0 0
        %1519 = vmatprep.subr.bf16.mxu0 0
        %1520 = vmatpush1.bf16.msra.mxu0 0
        %1521 = vmatprep.subr.bf16.mxu0 0
        %1522 = vmatpush1.bf16.msra.mxu0 0
        %1523 = vmatprep.subr.bf16.mxu0 0
        %1524 = vmatpush1.bf16.msra.mxu0 0
        %1525 = vmatprep.subr.bf16.mxu0 0
        %1526 = vmatpush1.bf16.msra.mxu0 0
        %1527 = vmatprep.mubr.bf16.mxu0 0
        %1528 = vmatmul.mubr.bf16.gmra.mrb[0].mxu0 %v1490
        %v1529 = vpop.f32.mrb[0].mxu0
        %v1530 = vadd.f32 0.0, %v1529
        %v1531 = vpop.f32.mrb[0].mxu0
        %v1532 = vpop.f32.mrb[0].mxu0
        %v1533 = vpop.f32.mrb[0].mxu0
        %1534 = vdwg.mxu0
        %v1536 = vsel %vm1213, %v1436, 0
        %v1539 = vsel %vm1445, %v1440, 0
        %1541 = vmatprep.subr.bf16.mxu0 0
        %1542 = vmatpush1.bf16.msra.mxu0 %v1539
        %1543 = vmatprep.subr.bf16.mxu0 0
        %1544 = vmatpush1.bf16.msra.mxu0 0
        %1545 = vmatprep.subr.bf16.mxu0 0
        %1546 = vmatpush1.bf16.msra.mxu0 0
        %1547 = vmatprep.subr.bf16.mxu0 0
        %1548 = vmatpush1.bf16.msra.mxu0 0
        %1549 = vmatprep.subr.bf16.mxu0 0
        %1550 = vmatpush1.bf16.msra.mxu0 0
        %1551 = vmatprep.subr.bf16.mxu0 0
        %1552 = vmatpush1.bf16.msra.mxu0 0
        %1553 = vmatprep.subr.bf16.mxu0 0
        %1554 = vmatpush1.bf16.msra.mxu0 0
        %1555 = vmatprep.subr.bf16.mxu0 0
        %1556 = vmatpush1.bf16.msra.mxu0 0
        %1557 = vmatprep.subr.bf16.mxu0 0
        %1558 = vmatpush1.bf16.msra.mxu0 0
        %1559 = vmatprep.subr.bf16.mxu0 0
        %1560 = vmatpush1.bf16.msra.mxu0 0
        %1561 = vmatprep.subr.bf16.mxu0 0
        %1562 = vmatpush1.bf16.msra.mxu0 0
        %1563 = vmatprep.subr.bf16.mxu0 0
        %1564 = vmatpush1.bf16.msra.mxu0 0
        %1565 = vmatprep.subr.bf16.mxu0 0
        %1566 = vmatpush1.bf16.msra.mxu0 0
        %1567 = vmatprep.subr.bf16.mxu0 0
        %1568 = vmatpush1.bf16.msra.mxu0 0
        %1569 = vmatprep.subr.bf16.mxu0 0
        %1570 = vmatpush1.bf16.msra.mxu0 0
        %1571 = vmatprep.subr.bf16.mxu0 0
        %1572 = vmatpush1.bf16.msra.mxu0 0
        %1573 = vmatprep.mubr.bf16.mxu0 0
        %1574 = vmatmul.mubr.bf16.gmra.mrb[0].mxu0 %v1536
        %v1575 = vpop.f32.mrb[0].mxu0
        %v1576 = vadd.f32 0.0, %v1575
        %v1577 = vpop.f32.mrb[0].mxu0
        %v1578 = vpop.f32.mrb[0].mxu0
        %v1579 = vpop.f32.mrb[0].mxu0
        %1580 = vdwg.mxu0
        %v1582 = vsel %vm1213, %v1437, 0
        %v1585 = vsel %vm1445, %v1441, 0
        %1587 = vmatprep.subr.bf16.mxu0 0
        %1588 = vmatpush1.bf16.msra.mxu0 %v1585
        %1589 = vmatprep.subr.bf16.mxu0 0
        %1590 = vmatpush1.bf16.msra.mxu0 0
        %1591 = vmatprep.subr.bf16.mxu0 0
        %1592 = vmatpush1.bf16.msra.mxu0 0
        %1593 = vmatprep.subr.bf16.mxu0 0
        %1594 = vmatpush1.bf16.msra.mxu0 0
        %1595 = vmatprep.subr.bf16.mxu0 0
        %1596 = vmatpush1.bf16.msra.mxu0 0
        %1597 = vmatprep.subr.bf16.mxu0 0
        %1598 = vmatpush1.bf16.msra.mxu0 0
        %1599 = vmatprep.subr.bf16.mxu0 0
        %1600 = vmatpush1.bf16.msra.mxu0 0
        %1601 = vmatprep.subr.bf16.mxu0 0
        %1602 = vmatpush1.bf16.msra.mxu0 0
        %1603 = vmatprep.subr.bf16.mxu0 0
        %1604 = vmatpush1.bf16.msra.mxu0 0
        %1605 = vmatprep.subr.bf16.mxu0 0
        %1606 = vmatpush1.bf16.msra.mxu0 0
        %1607 = vmatprep.subr.bf16.mxu0 0
        %1608 = vmatpush1.bf16.msra.mxu0 0
        %1609 = vmatprep.subr.bf16.mxu0 0
        %1610 = vmatpush1.bf16.msra.mxu0 0
        %1611 = vmatprep.subr.bf16.mxu0 0
        %1612 = vmatpush1.bf16.msra.mxu0 0
        %1613 = vmatprep.subr.bf16.mxu0 0
        %1614 = vmatpush1.bf16.msra.mxu0 0
        %1615 = vmatprep.subr.bf16.mxu0 0
        %1616 = vmatpush1.bf16.msra.mxu0 0
        %1617 = vmatprep.subr.bf16.mxu0 0
        %1618 = vmatpush1.bf16.msra.mxu0 0
        %1619 = vmatprep.mubr.bf16.mxu0 0
        %1620 = vmatmul.mubr.bf16.gmra.mrb[0].mxu0 %v1582
        %v1621 = vpop.f32.mrb[0].mxu0
        %v1622 = vadd.f32 0.0, %v1621
        %v1623 = vpop.f32.mrb[0].mxu0
        %v1624 = vpop.f32.mrb[0].mxu0
        %v1625 = vpop.f32.mrb[0].mxu0
        %1626 = vdwg.mxu0
        %v1627 = vrcp.pop %v1424
        %v1628 = vrcp.pop %v1427
        %v1629 = vrcp.pop %v1430
        %v1630 = vrcp.pop %v1433
        %v1631 = vmul.f32 %v1484, %v1627
        %v1632 = vmul.f32 %v1530, %v1628
        %v1633 = vmul.f32 %v1576, %v1629
        %v1634 = vmul.f32 %v1622, %v1630
        %v1635 = vcombine.low %v1631, %v1633
        %v1636 = vcombine.high %v1631, %v1633
        %v1638 = vunpack.c.l.s4 1983009808
        %v1639 = vunpack.c.0.s8 %v1638
        %v1640 = vlaneseq
        %v1641 = vshrl.u32 %v1640, 7
        %v1642 = vsub.s32 %v1639, %v1641
        %v1643 = vrot.slane %v1635, %v1642
        %v1645 = vunpack.c.l.s4 1983009808
        %v1646 = vunpack.c.0.s8 %v1645
        %v1647 = vlaneseq
        %v1648 = vshrl.u32 %v1647, 7
        %v1649 = vsub.s32 %v1646, %v1648
        %v1650 = vrot.slane %v1636, %v1649
        %v1651 = vcombine.low %v1632, %v1634
        %v1652 = vcombine.high %v1632, %v1634
        %v1654 = vunpack.c.l.s4 1983009808
        %v1655 = vunpack.c.0.s8 %v1654
        %v1656 = vlaneseq
        %v1657 = vshrl.u32 %v1656, 7
        %v1658 = vsub.s32 %v1655, %v1657
        %v1659 = vrot.slane %v1651, %v1658
        %v1661 = vunpack.c.l.s4 1983009808
        %v1662 = vunpack.c.0.s8 %v1661
        %v1663 = vlaneseq
        %v1664 = vshrl.u32 %v1663, 7
        %v1665 = vsub.s32 %v1662, %v1664
        %v1666 = vrot.slane %v1652, %v1665
        %v1667 = vcombine.low %v1643, %v1659
        %v1668 = vcombine.high %v1643, %v1659
        %v1670 = vunpack.c.l.s4 1934713408
        %v1671 = vunpack.c.0.s8 %v1670
        %v1672 = vlaneseq
        %v1673 = vshrl.u32 %v1672, 7
        %v1674 = vsub.s32 %v1671, %v1673
        %v1675 = vrot.slane %v1667, %v1674
        %v1677 = vunpack.c.l.s4 1934713408
        %v1678 = vunpack.c.0.s8 %v1677
        %v1679 = vlaneseq
        %v1680 = vshrl.u32 %v1679, 7
        %v1681 = vsub.s32 %v1678, %v1680
        %v1682 = vrot.slane %v1668, %v1681
        %v1683 = vcombine.low %v1650, %v1666
        %v1684 = vcombine.high %v1650, %v1666
        %v1686 = vunpack.c.l.s4 1934713408
        %v1687 = vunpack.c.0.s8 %v1686
        %v1688 = vlaneseq
        %v1689 = vshrl.u32 %v1688, 7
        %v1690 = vsub.s32 %v1687, %v1689
        %v1691 = vrot.slane %v1683, %v1690
        %v1693 = vunpack.c.l.s4 1934713408
        %v1694 = vunpack.c.0.s8 %v1693
        %v1695 = vlaneseq
        %v1696 = vshrl.u32 %v1695, 7
        %v1697 = vsub.s32 %v1694, %v1696
        %v1698 = vrot.slane %v1684, %v1697
        %v1699 = vcombine.high %v1675, 0.0
        %v1700 = vcombine.high %v1682, 0.0
        %v1701 = vcombine.high %v1691, 0.0
        %v1702 = vcombine.high %v1698, 0.0
        %v1703 = vcombine.low %v1675, %v1682
        %v1705 = vunpack.c.l.s4 1983009808
        %v1706 = vunpack.c.0.s8 %v1705
        %v1707 = vlaneseq
        %v1708 = vshrl.u32 %v1707, 7
        %v1709 = vsub.s32 %v1706, %v1708
        %v1710 = vrot.slane %v1703, %v1709
        %v1711 = vcombine.low %v1699, %v1700
        %v1713 = vunpack.c.l.s4 1983009808
        %v1714 = vunpack.c.0.s8 %v1713
        %v1715 = vlaneseq
        %v1716 = vshrl.u32 %v1715, 7
        %v1717 = vsub.s32 %v1714, %v1716
        %v1718 = vrot.slane %v1711, %v1717
        %v1719 = vcombine.low %v1691, %v1698
        %v1721 = vunpack.c.l.s4 1983009808
        %v1722 = vunpack.c.0.s8 %v1721
        %v1723 = vlaneseq
        %v1724 = vshrl.u32 %v1723, 7
        %v1725 = vsub.s32 %v1722, %v1724
        %v1726 = vrot.slane %v1719, %v1725
        %v1727 = vcombine.low %v1701, %v1702
        %v1729 = vunpack.c.l.s4 1983009808
        %v1730 = vunpack.c.0.s8 %v1729
        %v1731 = vlaneseq
        %v1732 = vshrl.u32 %v1731, 7
        %v1733 = vsub.s32 %v1730, %v1732
        %v1734 = vrot.slane %v1727, %v1733
        %v1735 = vcombine.low %v1710, %v1718
        %v1736 = vcombine.high %v1710, %v1718
        %v1738 = vunpack.c.l.s4 1934713408
        %v1739 = vunpack.c.0.s8 %v1738
        %v1740 = vlaneseq
        %v1741 = vshrl.u32 %v1740, 7
        %v1742 = vsub.s32 %v1739, %v1741
        %v1743 = vrot.slane %v1735, %v1742
        %v1745 = vunpack.c.l.s4 1934713408
        %v1746 = vunpack.c.0.s8 %v1745
        %v1747 = vlaneseq
        %v1748 = vshrl.u32 %v1747, 7
        %v1749 = vsub.s32 %v1746, %v1748
        %v1750 = vrot.slane %v1736, %v1749
        %v1751 = vcombine.low %v1726, %v1734
        %v1752 = vcombine.high %v1726, %v1734
        %v1754 = vunpack.c.l.s4 1934713408
        %v1755 = vunpack.c.0.s8 %v1754
        %v1756 = vlaneseq
        %v1757 = vshrl.u32 %v1756, 7
        %v1758 = vsub.s32 %v1755, %v1757
        %v1759 = vrot.slane %v1751, %v1758
        %v1761 = vunpack.c.l.s4 1934713408
        %v1762 = vunpack.c.0.s8 %v1761
        %v1763 = vlaneseq
        %v1764 = vshrl.u32 %v1763, 7
        %v1765 = vsub.s32 %v1762, %v1764
        %v1766 = vrot.slane %v1752, %v1765
        %v1767 = vcombine.low %v1743, %v1759
        %v1768 = vcombine.high %v1743, %v1759
        %v1769 = vcombine.low %v1750, %v1766
        %v1770 = vcombine.high %v1750, %v1766
        %1772 = vrot.lane.b32.xlu0 %v1768, 8
        %v1773 = vpop.permute.xlu0 %1772
        %1776 = vrot.lane.b32.xlu0 %v1769, 16
        %v1777 = vpop.permute.xlu0 %1776
        %1780 = vrot.lane.b32.xlu0 %v1770, 24
        %v1781 = vpop.permute.xlu0 %1780
        %v1783 = vsel %vm1213, %v1767, %v1773
        %vm1784 = vcmask 130048
        %v1785 = vsel %vm1784, %v1783, %v1777
        %vm1786 = vcmask 195584
        %v1787 = vsel %vm1786, %v1785, %v1781
        %1789 = vrot.lane.b32.xlu0 %v754, 120
        %v1790 = vpop.permute.xlu0 %1789
        %1792 = vrot.lane.b32.xlu0 %v754, 112
        %v1793 = vpop.permute.xlu0 %1792
        %1795 = vrot.lane.b32.xlu0 %v754, 104
        %v1796 = vpop.permute.xlu0 %1795
        %v1798 = vcombine.low %v754, %v1793
        %v1799 = vcombine.high %v754, %v1793
        %v1801 = vunpack.c.l.s4 1983009808
        %v1802 = vunpack.c.0.s8 %v1801
        %v1803 = vlaneseq
        %v1804 = vshrl.u32 %v1803, 7
        %v1805 = vsub.s32 %v1802, %v1804
        %v1806 = vrot.slane %v1798, %v1805
        %v1808 = vunpack.c.l.s4 1983009808
        %v1809 = vunpack.c.0.s8 %v1808
        %v1810 = vlaneseq
        %v1811 = vshrl.u32 %v1810, 7
        %v1812 = vsub.s32 %v1809, %v1811
        %v1813 = vrot.slane %v1799, %v1812
        %v1814 = vcombine.low %v1790, %v1796
        %v1815 = vcombine.high %v1790, %v1796
        %v1817 = vunpack.c.l.s4 1983009808
        %v1818 = vunpack.c.0.s8 %v1817
        %v1819 = vlaneseq
        %v1820 = vshrl.u32 %v1819, 7
        %v1821 = vsub.s32 %v1818, %v1820
        %v1822 = vrot.slane %v1814, %v1821
        %v1824 = vunpack.c.l.s4 1983009808
        %v1825 = vunpack.c.0.s8 %v1824
        %v1826 = vlaneseq
        %v1827 = vshrl.u32 %v1826, 7
        %v1828 = vsub.s32 %v1825, %v1827
        %v1829 = vrot.slane %v1815, %v1828
        %v1830 = vcombine.low %v1806, %v1822
        %v1831 = vcombine.high %v1806, %v1822
        %v1833 = vunpack.c.l.s4 1934713408
        %v1834 = vunpack.c.0.s8 %v1833
        %v1835 = vlaneseq
        %v1836 = vshrl.u32 %v1835, 7
        %v1837 = vsub.s32 %v1834, %v1836
        %v1838 = vrot.slane %v1830, %v1837
        %v1840 = vunpack.c.l.s4 1934713408
        %v1841 = vunpack.c.0.s8 %v1840
        %v1842 = vlaneseq
        %v1843 = vshrl.u32 %v1842, 7
        %v1844 = vsub.s32 %v1841, %v1843
        %v1845 = vrot.slane %v1831, %v1844
        %v1846 = vcombine.low %v1813, %v1829
        %v1847 = vcombine.high %v1813, %v1829
        %v1849 = vunpack.c.l.s4 1934713408
        %v1850 = vunpack.c.0.s8 %v1849
        %v1851 = vlaneseq
        %v1852 = vshrl.u32 %v1851, 7
        %v1853 = vsub.s32 %v1850, %v1852
        %v1854 = vrot.slane %v1846, %v1853
        %v1856 = vunpack.c.l.s4 1934713408
        %v1857 = vunpack.c.0.s8 %v1856
        %v1858 = vlaneseq
        %v1859 = vshrl.u32 %v1858, 7
        %v1860 = vsub.s32 %v1857, %v1859
        %v1861 = vrot.slane %v1847, %v1860
        %v1862 = vcombine.high %v1838, 0.0
        %v1863 = vcombine.high %v1845, 0.0
        %v1864 = vcombine.high %v1854, 0.0
        %v1865 = vcombine.high %v1861, 0.0
        %v1866 = vcombine.low %v1838, %v1845
        %v1868 = vunpack.c.l.s4 1983009808
        %v1869 = vunpack.c.0.s8 %v1868
        %v1870 = vlaneseq
        %v1871 = vshrl.u32 %v1870, 7
        %v1872 = vsub.s32 %v1869, %v1871
        %v1873 = vrot.slane %v1866, %v1872
        %v1874 = vcombine.low %v1862, %v1863
        %v1876 = vunpack.c.l.s4 1983009808
        %v1877 = vunpack.c.0.s8 %v1876
        %v1878 = vlaneseq
        %v1879 = vshrl.u32 %v1878, 7
        %v1880 = vsub.s32 %v1877, %v1879
        %v1881 = vrot.slane %v1874, %v1880
        %v1882 = vcombine.low %v1854, %v1861
        %v1884 = vunpack.c.l.s4 1983009808
        %v1885 = vunpack.c.0.s8 %v1884
        %v1886 = vlaneseq
        %v1887 = vshrl.u32 %v1886, 7
        %v1888 = vsub.s32 %v1885, %v1887
        %v1889 = vrot.slane %v1882, %v1888
        %v1890 = vcombine.low %v1864, %v1865
        %v1892 = vunpack.c.l.s4 1983009808
        %v1893 = vunpack.c.0.s8 %v1892
        %v1894 = vlaneseq
        %v1895 = vshrl.u32 %v1894, 7
        %v1896 = vsub.s32 %v1893, %v1895
        %v1897 = vrot.slane %v1890, %v1896
        %v1898 = vcombine.low %v1873, %v1881
        %v1899 = vcombine.high %v1873, %v1881
        %v1901 = vunpack.c.l.s4 1934713408
        %v1902 = vunpack.c.0.s8 %v1901
        %v1903 = vlaneseq
        %v1904 = vshrl.u32 %v1903, 7
        %v1905 = vsub.s32 %v1902, %v1904
        %v1906 = vrot.slane %v1898, %v1905
        %v1908 = vunpack.c.l.s4 1934713408
        %v1909 = vunpack.c.0.s8 %v1908
        %v1910 = vlaneseq
        %v1911 = vshrl.u32 %v1910, 7
        %v1912 = vsub.s32 %v1909, %v1911
        %v1913 = vrot.slane %v1899, %v1912
        %v1914 = vcombine.low %v1889, %v1897
        %v1915 = vcombine.high %v1889, %v1897
        %v1917 = vunpack.c.l.s4 1934713408
        %v1918 = vunpack.c.0.s8 %v1917
        %v1919 = vlaneseq
        %v1920 = vshrl.u32 %v1919, 7
        %v1921 = vsub.s32 %v1918, %v1920
        %v1922 = vrot.slane %v1914, %v1921
        %v1924 = vunpack.c.l.s4 1934713408
        %v1925 = vunpack.c.0.s8 %v1924
        %v1926 = vlaneseq
        %v1927 = vshrl.u32 %v1926, 7
        %v1928 = vsub.s32 %v1925, %v1927
        %v1929 = vrot.slane %v1915, %v1928
        %v1930 = vcombine.low %v1906, %v1922
        %v1931 = vcombine.high %v1906, %v1922
        %v1932 = vcombine.low %v1913, %v1929
        %v1933 = vcombine.high %v1913, %v1929
        %1935 = vrot.lane.b32.xlu0 %v750, 120
        %v1936 = vpop.permute.xlu0 %1935
        %1937 = vrot.lane.b32.xlu0 %v750, 112
        %v1938 = vpop.permute.xlu0 %1937
        %1939 = vrot.lane.b32.xlu0 %v750, 104
        %v1940 = vpop.permute.xlu0 %1939
        %1941 = vrot.lane.b32.xlu0 %v750, 96
        %v1942 = vpop.permute.xlu0 %1941
        %1943 = vrot.lane.b32.xlu0 %v1936, 96
        %v1944 = vpop.permute.xlu0 %1943
        %1945 = vrot.lane.b32.xlu0 %v1938, 96
        %v1946 = vpop.permute.xlu0 %1945
        %1947 = vrot.lane.b32.xlu0 %v1940, 96
        %v1948 = vpop.permute.xlu0 %1947
        %v1953 = vcombine.low %v1942, %v1946
        %v1954 = vcombine.high %v1942, %v1946
        %v1956 = vunpack.c.l.s4 1983009808
        %v1957 = vunpack.c.0.s8 %v1956
        %v1958 = vlaneseq
        %v1959 = vshrl.u32 %v1958, 7
        %v1960 = vsub.s32 %v1957, %v1959
        %v1961 = vrot.slane %v1953, %v1960
        %v1963 = vunpack.c.l.s4 1983009808
        %v1964 = vunpack.c.0.s8 %v1963
        %v1965 = vlaneseq
        %v1966 = vshrl.u32 %v1965, 7
        %v1967 = vsub.s32 %v1964, %v1966
        %v1968 = vrot.slane %v1954, %v1967
        %v1969 = vcombine.low %v1944, %v1948
        %v1970 = vcombine.high %v1944, %v1948
        %v1972 = vunpack.c.l.s4 1983009808
        %v1973 = vunpack.c.0.s8 %v1972
        %v1974 = vlaneseq
        %v1975 = vshrl.u32 %v1974, 7
        %v1976 = vsub.s32 %v1973, %v1975
        %v1977 = vrot.slane %v1969, %v1976
        %v1979 = vunpack.c.l.s4 1983009808
        %v1980 = vunpack.c.0.s8 %v1979
        %v1981 = vlaneseq
        %v1982 = vshrl.u32 %v1981, 7
        %v1983 = vsub.s32 %v1980, %v1982
        %v1984 = vrot.slane %v1970, %v1983
        %v1985 = vcombine.low %v1961, %v1977
        %v1986 = vcombine.high %v1961, %v1977
        %v1988 = vunpack.c.l.s4 1934713408
        %v1989 = vunpack.c.0.s8 %v1988
        %v1990 = vlaneseq
        %v1991 = vshrl.u32 %v1990, 7
        %v1992 = vsub.s32 %v1989, %v1991
        %v1993 = vrot.slane %v1985, %v1992
        %v1995 = vunpack.c.l.s4 1934713408
        %v1996 = vunpack.c.0.s8 %v1995
        %v1997 = vlaneseq
        %v1998 = vshrl.u32 %v1997, 7
        %v1999 = vsub.s32 %v1996, %v1998
        %v2000 = vrot.slane %v1986, %v1999
        %v2001 = vcombine.low %v1968, %v1984
        %v2002 = vcombine.high %v1968, %v1984
        %v2004 = vunpack.c.l.s4 1934713408
        %v2005 = vunpack.c.0.s8 %v2004
        %v2006 = vlaneseq
        %v2007 = vshrl.u32 %v2006, 7
        %v2008 = vsub.s32 %v2005, %v2007
        %v2009 = vrot.slane %v2001, %v2008
        %v2011 = vunpack.c.l.s4 1934713408
        %v2012 = vunpack.c.0.s8 %v2011
        %v2013 = vlaneseq
        %v2014 = vshrl.u32 %v2013, 7
        %v2015 = vsub.s32 %v2012, %v2014
        %v2016 = vrot.slane %v2002, %v2015
        %v2017 = vcombine.high %v1993, 0.0
        %v2018 = vcombine.high %v2000, 0.0
        %v2019 = vcombine.high %v2009, 0.0
        %v2020 = vcombine.high %v2016, 0.0
        %v2021 = vcombine.low %v1993, %v2000
        %v2023 = vunpack.c.l.s4 1983009808
        %v2024 = vunpack.c.0.s8 %v2023
        %v2025 = vlaneseq
        %v2026 = vshrl.u32 %v2025, 7
        %v2027 = vsub.s32 %v2024, %v2026
        %v2028 = vrot.slane %v2021, %v2027
        %v2029 = vcombine.low %v2017, %v2018
        %v2031 = vunpack.c.l.s4 1983009808
        %v2032 = vunpack.c.0.s8 %v2031
        %v2033 = vlaneseq
        %v2034 = vshrl.u32 %v2033, 7
        %v2035 = vsub.s32 %v2032, %v2034
        %v2036 = vrot.slane %v2029, %v2035
        %v2037 = vcombine.low %v2009, %v2016
        %v2039 = vunpack.c.l.s4 1983009808
        %v2040 = vunpack.c.0.s8 %v2039
        %v2041 = vlaneseq
        %v2042 = vshrl.u32 %v2041, 7
        %v2043 = vsub.s32 %v2040, %v2042
        %v2044 = vrot.slane %v2037, %v2043
        %v2045 = vcombine.low %v2019, %v2020
        %v2047 = vunpack.c.l.s4 1983009808
        %v2048 = vunpack.c.0.s8 %v2047
        %v2049 = vlaneseq
        %v2050 = vshrl.u32 %v2049, 7
        %v2051 = vsub.s32 %v2048, %v2050
        %v2052 = vrot.slane %v2045, %v2051
        %v2053 = vcombine.low %v2028, %v2036
        %v2054 = vcombine.high %v2028, %v2036
        %v2056 = vunpack.c.l.s4 1934713408
        %v2057 = vunpack.c.0.s8 %v2056
        %v2058 = vlaneseq
        %v2059 = vshrl.u32 %v2058, 7
        %v2060 = vsub.s32 %v2057, %v2059
        %v2061 = vrot.slane %v2053, %v2060
        %v2063 = vunpack.c.l.s4 1934713408
        %v2064 = vunpack.c.0.s8 %v2063
        %v2065 = vlaneseq
        %v2066 = vshrl.u32 %v2065, 7
        %v2067 = vsub.s32 %v2064, %v2066
        %v2068 = vrot.slane %v2054, %v2067
        %v2069 = vcombine.low %v2044, %v2052
        %v2070 = vcombine.high %v2044, %v2052
        %v2072 = vunpack.c.l.s4 1934713408
        %v2073 = vunpack.c.0.s8 %v2072
        %v2074 = vlaneseq
        %v2075 = vshrl.u32 %v2074, 7
        %v2076 = vsub.s32 %v2073, %v2075
        %v2077 = vrot.slane %v2069, %v2076
        %v2079 = vunpack.c.l.s4 1934713408
        %v2080 = vunpack.c.0.s8 %v2079
        %v2081 = vlaneseq
        %v2082 = vshrl.u32 %v2081, 7
        %v2083 = vsub.s32 %v2080, %v2082
        %v2084 = vrot.slane %v2070, %v2083
        %v2085 = vcombine.low %v2061, %v2077
        %v2086 = vcombine.high %v2061, %v2077
        %v2087 = vcombine.low %v2068, %v2084
        %v2088 = vcombine.high %v2068, %v2084
        %2089 = vrot.lane.b32.xlu0 %v750, 64
        %v2090 = vpop.permute.xlu0 %2089
        %2091 = vrot.lane.b32.xlu0 %v1936, 64
        %v2092 = vpop.permute.xlu0 %2091
        %2093 = vrot.lane.b32.xlu0 %v1938, 64
        %v2094 = vpop.permute.xlu0 %2093
        %2095 = vrot.lane.b32.xlu0 %v1940, 64
        %v2096 = vpop.permute.xlu0 %2095
        %v2101 = vcombine.low %v2090, %v2094
        %v2102 = vcombine.high %v2090, %v2094
        %v2104 = vunpack.c.l.s4 1983009808
        %v2105 = vunpack.c.0.s8 %v2104
        %v2106 = vlaneseq
        %v2107 = vshrl.u32 %v2106, 7
        %v2108 = vsub.s32 %v2105, %v2107
        %v2109 = vrot.slane %v2101, %v2108
        %v2111 = vunpack.c.l.s4 1983009808
        %v2112 = vunpack.c.0.s8 %v2111
        %v2113 = vlaneseq
        %v2114 = vshrl.u32 %v2113, 7
        %v2115 = vsub.s32 %v2112, %v2114
        %v2116 = vrot.slane %v2102, %v2115
        %v2117 = vcombine.low %v2092, %v2096
        %v2118 = vcombine.high %v2092, %v2096
        %v2120 = vunpack.c.l.s4 1983009808
        %v2121 = vunpack.c.0.s8 %v2120
        %v2122 = vlaneseq
        %v2123 = vshrl.u32 %v2122, 7
        %v2124 = vsub.s32 %v2121, %v2123
        %v2125 = vrot.slane %v2117, %v2124
        %v2127 = vunpack.c.l.s4 1983009808
        %v2128 = vunpack.c.0.s8 %v2127
        %v2129 = vlaneseq
        %v2130 = vshrl.u32 %v2129, 7
        %v2131 = vsub.s32 %v2128, %v2130
        %v2132 = vrot.slane %v2118, %v2131
        %v2133 = vcombine.low %v2109, %v2125
        %v2134 = vcombine.high %v2109, %v2125
        %v2136 = vunpack.c.l.s4 1934713408
        %v2137 = vunpack.c.0.s8 %v2136
        %v2138 = vlaneseq
        %v2139 = vshrl.u32 %v2138, 7
        %v2140 = vsub.s32 %v2137, %v2139
        %v2141 = vrot.slane %v2133, %v2140
        %v2143 = vunpack.c.l.s4 1934713408
        %v2144 = vunpack.c.0.s8 %v2143
        %v2145 = vlaneseq
        %v2146 = vshrl.u32 %v2145, 7
        %v2147 = vsub.s32 %v2144, %v2146
        %v2148 = vrot.slane %v2134, %v2147
        %v2149 = vcombine.low %v2116, %v2132
        %v2150 = vcombine.high %v2116, %v2132
        %v2152 = vunpack.c.l.s4 1934713408
        %v2153 = vunpack.c.0.s8 %v2152
        %v2154 = vlaneseq
        %v2155 = vshrl.u32 %v2154, 7
        %v2156 = vsub.s32 %v2153, %v2155
        %v2157 = vrot.slane %v2149, %v2156
        %v2159 = vunpack.c.l.s4 1934713408
        %v2160 = vunpack.c.0.s8 %v2159
        %v2161 = vlaneseq
        %v2162 = vshrl.u32 %v2161, 7
        %v2163 = vsub.s32 %v2160, %v2162
        %v2164 = vrot.slane %v2150, %v2163
        %v2165 = vcombine.high %v2141, 0.0
        %v2166 = vcombine.high %v2148, 0.0
        %v2167 = vcombine.high %v2157, 0.0
        %v2168 = vcombine.high %v2164, 0.0
        %v2169 = vcombine.low %v2141, %v2148
        %v2171 = vunpack.c.l.s4 1983009808
        %v2172 = vunpack.c.0.s8 %v2171
        %v2173 = vlaneseq
        %v2174 = vshrl.u32 %v2173, 7
        %v2175 = vsub.s32 %v2172, %v2174
        %v2176 = vrot.slane %v2169, %v2175
        %v2177 = vcombine.low %v2165, %v2166
        %v2179 = vunpack.c.l.s4 1983009808
        %v2180 = vunpack.c.0.s8 %v2179
        %v2181 = vlaneseq
        %v2182 = vshrl.u32 %v2181, 7
        %v2183 = vsub.s32 %v2180, %v2182
        %v2184 = vrot.slane %v2177, %v2183
        %v2185 = vcombine.low %v2157, %v2164
        %v2187 = vunpack.c.l.s4 1983009808
        %v2188 = vunpack.c.0.s8 %v2187
        %v2189 = vlaneseq
        %v2190 = vshrl.u32 %v2189, 7
        %v2191 = vsub.s32 %v2188, %v2190
        %v2192 = vrot.slane %v2185, %v2191
        %v2193 = vcombine.low %v2167, %v2168
        %v2195 = vunpack.c.l.s4 1983009808
        %v2196 = vunpack.c.0.s8 %v2195
        %v2197 = vlaneseq
        %v2198 = vshrl.u32 %v2197, 7
        %v2199 = vsub.s32 %v2196, %v2198
        %v2200 = vrot.slane %v2193, %v2199
        %v2201 = vcombine.low %v2176, %v2184
        %v2202 = vcombine.high %v2176, %v2184
        %v2204 = vunpack.c.l.s4 1934713408
        %v2205 = vunpack.c.0.s8 %v2204
        %v2206 = vlaneseq
        %v2207 = vshrl.u32 %v2206, 7
        %v2208 = vsub.s32 %v2205, %v2207
        %v2209 = vrot.slane %v2201, %v2208
        %v2211 = vunpack.c.l.s4 1934713408
        %v2212 = vunpack.c.0.s8 %v2211
        %v2213 = vlaneseq
        %v2214 = vshrl.u32 %v2213, 7
        %v2215 = vsub.s32 %v2212, %v2214
        %v2216 = vrot.slane %v2202, %v2215
        %v2217 = vcombine.low %v2192, %v2200
        %v2218 = vcombine.high %v2192, %v2200
        %v2220 = vunpack.c.l.s4 1934713408
        %v2221 = vunpack.c.0.s8 %v2220
        %v2222 = vlaneseq
        %v2223 = vshrl.u32 %v2222, 7
        %v2224 = vsub.s32 %v2221, %v2223
        %v2225 = vrot.slane %v2217, %v2224
        %v2227 = vunpack.c.l.s4 1934713408
        %v2228 = vunpack.c.0.s8 %v2227
        %v2229 = vlaneseq
        %v2230 = vshrl.u32 %v2229, 7
        %v2231 = vsub.s32 %v2228, %v2230
        %v2232 = vrot.slane %v2218, %v2231
        %v2233 = vcombine.low %v2209, %v2225
        %v2234 = vcombine.high %v2209, %v2225
        %v2235 = vcombine.low %v2216, %v2232
        %v2236 = vcombine.high %v2216, %v2232
        %v2237 = vpack.c.bf16 %v1930, %v1930
        %v2238 = vpack.c.bf16 %v1931, %v1931
        %v2239 = vpack.c.bf16 %v1932, %v1932
        %v2240 = vpack.c.bf16 %v1933, %v1933
        %v2241 = vpack.c.bf16 %v2085, %v2085
        %v2242 = vpack.c.bf16 %v2086, %v2086
        %v2243 = vpack.c.bf16 %v2087, %v2087
        %v2244 = vpack.c.bf16 %v2088, %v2088
        %v2246 = vsel %vm1213, %v2237, 0
        %v2249 = vsel %vm1213, %v2241, 0
        %2251 = vmatprep.subr.bf16.mxu0 0
        %2252 = vmatpush1.bf16.xpose.msra.mxu0 %v2249
        %2253 = vmatprep.subr.bf16.mxu0 0
        %2254 = vmatpush1.bf16.xpose.msra.mxu0 0
        %2255 = vmatprep.subr.bf16.mxu0 0
        %2256 = vmatpush1.bf16.xpose.msra.mxu0 0
        %2257 = vmatprep.subr.bf16.mxu0 0
        %2258 = vmatpush1.bf16.xpose.msra.mxu0 0
        %2259 = vmatprep.subr.bf16.mxu0 0
        %2260 = vmatpush1.bf16.xpose.msra.mxu0 0
        %2261 = vmatprep.subr.bf16.mxu0 0
        %2262 = vmatpush1.bf16.xpose.msra.mxu0 0
        %2263 = vmatprep.subr.bf16.mxu0 0
        %2264 = vmatpush1.bf16.xpose.msra.mxu0 0
        %2265 = vmatprep.subr.bf16.mxu0 0
        %2266 = vmatpush1.bf16.xpose.msra.mxu0 0
        %2267 = vmatprep.subr.bf16.mxu0 0
        %2268 = vmatpush1.bf16.xpose.msra.mxu0 0
        %2269 = vmatprep.subr.bf16.mxu0 0
        %2270 = vmatpush1.bf16.xpose.msra.mxu0 0
        %2271 = vmatprep.subr.bf16.mxu0 0
        %2272 = vmatpush1.bf16.xpose.msra.mxu0 0
        %2273 = vmatprep.subr.bf16.mxu0 0
        %2274 = vmatpush1.bf16.xpose.msra.mxu0 0
        %2275 = vmatprep.subr.bf16.mxu0 0
        %2276 = vmatpush1.bf16.xpose.msra.mxu0 0
        %2277 = vmatprep.subr.bf16.mxu0 0
        %2278 = vmatpush1.bf16.xpose.msra.mxu0 0
        %2279 = vmatprep.subr.bf16.mxu0 0
        %2280 = vmatpush1.bf16.xpose.msra.mxu0 0
        %2281 = vmatprep.subr.bf16.mxu0 0
        %2282 = vmatpush1.bf16.xpose.msra.mxu0 0
        %2283 = vmatprep.mubr.bf16.mxu0 0
        %2284 = vmatmul.mubr.bf16.gmra.mrb[0].mxu0 %v2246
        %v2285 = vpop.f32.mrb[0].mxu0
        %v2286 = vadd.f32 %v755, %v2285
        %v2287 = vpop.f32.mrb[0].mxu0
        %v2288 = vpop.f32.mrb[0].mxu0
        %v2289 = vpop.f32.mrb[0].mxu0
        %2290 = vdwg.mxu0
        %v2292 = vsel %vm1213, %v2238, 0
        %v2295 = vsel %vm1213, %v2242, 0
        %2297 = vmatprep.subr.bf16.mxu0 0
        %2298 = vmatpush1.bf16.xpose.msra.mxu0 %v2295
        %2299 = vmatprep.subr.bf16.mxu0 0
        %2300 = vmatpush1.bf16.xpose.msra.mxu0 0
        %2301 = vmatprep.subr.bf16.mxu0 0
        %2302 = vmatpush1.bf16.xpose.msra.mxu0 0
        %2303 = vmatprep.subr.bf16.mxu0 0
        %2304 = vmatpush1.bf16.xpose.msra.mxu0 0
        %2305 = vmatprep.subr.bf16.mxu0 0
        %2306 = vmatpush1.bf16.xpose.msra.mxu0 0
        %2307 = vmatprep.subr.bf16.mxu0 0
        %2308 = vmatpush1.bf16.xpose.msra.mxu0 0
        %2309 = vmatprep.subr.bf16.mxu0 0
        %2310 = vmatpush1.bf16.xpose.msra.mxu0 0
        %2311 = vmatprep.subr.bf16.mxu0 0
        %2312 = vmatpush1.bf16.xpose.msra.mxu0 0
        %2313 = vmatprep.subr.bf16.mxu0 0
        %2314 = vmatpush1.bf16.xpose.msra.mxu0 0
        %2315 = vmatprep.subr.bf16.mxu0 0
        %2316 = vmatpush1.bf16.xpose.msra.mxu0 0
        %2317 = vmatprep.subr.bf16.mxu0 0
        %2318 = vmatpush1.bf16.xpose.msra.mxu0 0
        %2319 = vmatprep.subr.bf16.mxu0 0
        %2320 = vmatpush1.bf16.xpose.msra.mxu0 0
        %2321 = vmatprep.subr.bf16.mxu0 0
        %2322 = vmatpush1.bf16.xpose.msra.mxu0 0
        %2323 = vmatprep.subr.bf16.mxu0 0
        %2324 = vmatpush1.bf16.xpose.msra.mxu0 0
        %2325 = vmatprep.subr.bf16.mxu0 0
        %2326 = vmatpush1.bf16.xpose.msra.mxu0 0
        %2327 = vmatprep.subr.bf16.mxu0 0
        %2328 = vmatpush1.bf16.xpose.msra.mxu0 0
        %2329 = vmatprep.mubr.bf16.mxu0 0
        %2330 = vmatmul.mubr.bf16.gmra.mrb[0].mxu0 %v2292
        %v2331 = vpop.f32.mrb[0].mxu0
        %v2332 = vadd.f32 %v755, %v2331
        %v2333 = vpop.f32.mrb[0].mxu0
        %v2334 = vpop.f32.mrb[0].mxu0
        %v2335 = vpop.f32.mrb[0].mxu0
        %2336 = vdwg.mxu0
        %v2338 = vsel %vm1213, %v2239, 0
        %v2341 = vsel %vm1213, %v2243, 0
        %2343 = vmatprep.subr.bf16.mxu0 0
        %2344 = vmatpush1.bf16.xpose.msra.mxu0 %v2341
        %2345 = vmatprep.subr.bf16.mxu0 0
        %2346 = vmatpush1.bf16.xpose.msra.mxu0 0
        %2347 = vmatprep.subr.bf16.mxu0 0
        %2348 = vmatpush1.bf16.xpose.msra.mxu0 0
        %2349 = vmatprep.subr.bf16.mxu0 0
        %2350 = vmatpush1.bf16.xpose.msra.mxu0 0
        %2351 = vmatprep.subr.bf16.mxu0 0
        %2352 = vmatpush1.bf16.xpose.msra.mxu0 0
        %2353 = vmatprep.subr.bf16.mxu0 0
        %2354 = vmatpush1.bf16.xpose.msra.mxu0 0
        %2355 = vmatprep.subr.bf16.mxu0 0
        %2356 = vmatpush1.bf16.xpose.msra.mxu0 0
        %2357 = vmatprep.subr.bf16.mxu0 0
        %2358 = vmatpush1.bf16.xpose.msra.mxu0 0
        %2359 = vmatprep.subr.bf16.mxu0 0
        %2360 = vmatpush1.bf16.xpose.msra.mxu0 0
        %2361 = vmatprep.subr.bf16.mxu0 0
        %2362 = vmatpush1.bf16.xpose.msra.mxu0 0
        %2363 = vmatprep.subr.bf16.mxu0 0
        %2364 = vmatpush1.bf16.xpose.msra.mxu0 0
        %2365 = vmatprep.subr.bf16.mxu0 0
        %2366 = vmatpush1.bf16.xpose.msra.mxu0 0
        %2367 = vmatprep.subr.bf16.mxu0 0
        %2368 = vmatpush1.bf16.xpose.msra.mxu0 0
        %2369 = vmatprep.subr.bf16.mxu0 0
        %2370 = vmatpush1.bf16.xpose.msra.mxu0 0
        %2371 = vmatprep.subr.bf16.mxu0 0
        %2372 = vmatpush1.bf16.xpose.msra.mxu0 0
        %2373 = vmatprep.subr.bf16.mxu0 0
        %2374 = vmatpush1.bf16.xpose.msra.mxu0 0
        %2375 = vmatprep.mubr.bf16.mxu0 0
        %2376 = vmatmul.mubr.bf16.gmra.mrb[0].mxu0 %v2338
        %v2377 = vpop.f32.mrb[0].mxu0
        %v2378 = vadd.f32 %v755, %v2377
        %v2379 = vpop.f32.mrb[0].mxu0
        %v2380 = vpop.f32.mrb[0].mxu0
        %v2381 = vpop.f32.mrb[0].mxu0
        %2382 = vdwg.mxu0
        %v2384 = vsel %vm1213, %v2240, 0
        %v2387 = vsel %vm1213, %v2244, 0
        %2389 = vmatprep.subr.bf16.mxu0 0
        %2390 = vmatpush1.bf16.xpose.msra.mxu0 %v2387
        %2391 = vmatprep.subr.bf16.mxu0 0
        %2392 = vmatpush1.bf16.xpose.msra.mxu0 0
        %2393 = vmatprep.subr.bf16.mxu0 0
        %2394 = vmatpush1.bf16.xpose.msra.mxu0 0
        %2395 = vmatprep.subr.bf16.mxu0 0
        %2396 = vmatpush1.bf16.xpose.msra.mxu0 0
        %2397 = vmatprep.subr.bf16.mxu0 0
        %2398 = vmatpush1.bf16.xpose.msra.mxu0 0
        %2399 = vmatprep.subr.bf16.mxu0 0
        %2400 = vmatpush1.bf16.xpose.msra.mxu0 0
        %2401 = vmatprep.subr.bf16.mxu0 0
        %2402 = vmatpush1.bf16.xpose.msra.mxu0 0
        %2403 = vmatprep.subr.bf16.mxu0 0
        %2404 = vmatpush1.bf16.xpose.msra.mxu0 0
        %2405 = vmatprep.subr.bf16.mxu0 0
        %2406 = vmatpush1.bf16.xpose.msra.mxu0 0
        %2407 = vmatprep.subr.bf16.mxu0 0
        %2408 = vmatpush1.bf16.xpose.msra.mxu0 0
        %2409 = vmatprep.subr.bf16.mxu0 0
        %2410 = vmatpush1.bf16.xpose.msra.mxu0 0
        %2411 = vmatprep.subr.bf16.mxu0 0
        %2412 = vmatpush1.bf16.xpose.msra.mxu0 0
        %2413 = vmatprep.subr.bf16.mxu0 0
        %2414 = vmatpush1.bf16.xpose.msra.mxu0 0
        %2415 = vmatprep.subr.bf16.mxu0 0
        %2416 = vmatpush1.bf16.xpose.msra.mxu0 0
        %2417 = vmatprep.subr.bf16.mxu0 0
        %2418 = vmatpush1.bf16.xpose.msra.mxu0 0
        %2419 = vmatprep.subr.bf16.mxu0 0
        %2420 = vmatpush1.bf16.xpose.msra.mxu0 0
        %2421 = vmatprep.mubr.bf16.mxu0 0
        %2422 = vmatmul.mubr.bf16.gmra.mrb[0].mxu0 %v2384
        %v2423 = vpop.f32.mrb[0].mxu0
        %v2424 = vadd.f32 %v755, %v2423
        %v2425 = vpop.f32.mrb[0].mxu0
        %v2426 = vpop.f32.mrb[0].mxu0
        %v2427 = vpop.f32.mrb[0].mxu0
        %2428 = vdwg.mxu0
        %v2429 = vsel %vm1213, %v2286, -inf
        %2430 = vmax.xlane.f32.xlu0 %v2429
        %v2431 = vpop.xlane.xlu0 %2430
        %v2432 = vsel %vm1213, %v2332, -inf
        %2433 = vmax.xlane.f32.xlu0 %v2432
        %v2434 = vpop.xlane.xlu0 %2433
        %v2435 = vsel %vm1213, %v2378, -inf
        %2436 = vmax.xlane.f32.xlu0 %v2435
        %v2437 = vpop.xlane.xlu0 %2436
        %v2438 = vsel %vm1213, %v2424, -inf
        %2439 = vmax.xlane.f32.xlu0 %v2438
        %v2440 = vpop.xlane.xlu0 %2439
        %v2441 = vsub.f32 %v2286, %v2431
        %v2442 = vsub.f32 %v2332, %v2434
        %v2443 = vsub.f32 %v2378, %v2437
        %v2444 = vsub.f32 %v2424, %v2440
        %v2445 = vmul.f32 %v2441, 1.442695
        %v2446 = vpow.pop %v2445
        %v2447 = vmul.f32 %v2442, 1.442695
        %v2448 = vpow.pop %v2447
        %v2449 = vmul.f32 %v2443, 1.442695
        %v2450 = vpow.pop %v2449
        %v2451 = vmul.f32 %v2444, 1.442695
        %v2452 = vpow.pop %v2451
        %v2453 = vsel %vm1213, %v2446, 0.0
        %2454 = vadd.xlane.f32.xlu0 %v2453
        %v2455 = vpop.xlane.xlu0 %2454
        %v2456 = vsel %vm1213, %v2448, 0.0
        %2457 = vadd.xlane.f32.xlu0 %v2456
        %v2458 = vpop.xlane.xlu0 %2457
        %v2459 = vsel %vm1213, %v2450, 0.0
        %2460 = vadd.xlane.f32.xlu0 %v2459
        %v2461 = vpop.xlane.xlu0 %2460
        %v2462 = vsel %vm1213, %v2452, 0.0
        %2463 = vadd.xlane.f32.xlu0 %v2462
        %v2464 = vpop.xlane.xlu0 %2463
        %v2465 = vpack.c.bf16 %v2446, %v2446
        %v2466 = vpack.c.bf16 %v2448, %v2448
        %v2467 = vpack.c.bf16 %v2450, %v2450
        %v2468 = vpack.c.bf16 %v2452, %v2452
        %v2469 = vpack.c.bf16 %v2233, %v2233
        %v2470 = vpack.c.bf16 %v2234, %v2234
        %v2471 = vpack.c.bf16 %v2235, %v2235
        %v2472 = vpack.c.bf16 %v2236, %v2236
        %v2474 = vsel %vm1213, %v2465, 0
        %v2477 = vsel %vm1445, %v2469, 0
        %2479 = vmatprep.subr.bf16.mxu0 0
        %2480 = vmatpush1.bf16.msra.mxu0 %v2477
        %2481 = vmatprep.subr.bf16.mxu0 0
        %2482 = vmatpush1.bf16.msra.mxu0 0
        %2483 = vmatprep.subr.bf16.mxu0 0
        %2484 = vmatpush1.bf16.msra.mxu0 0
        %2485 = vmatprep.subr.bf16.mxu0 0
        %2486 = vmatpush1.bf16.msra.mxu0 0
        %2487 = vmatprep.subr.bf16.mxu0 0
        %2488 = vmatpush1.bf16.msra.mxu0 0
        %2489 = vmatprep.subr.bf16.mxu0 0
        %2490 = vmatpush1.bf16.msra.mxu0 0
        %2491 = vmatprep.subr.bf16.mxu0 0
        %2492 = vmatpush1.bf16.msra.mxu0 0
        %2493 = vmatprep.subr.bf16.mxu0 0
        %2494 = vmatpush1.bf16.msra.mxu0 0
        %2495 = vmatprep.subr.bf16.mxu0 0
        %2496 = vmatpush1.bf16.msra.mxu0 0
        %2497 = vmatprep.subr.bf16.mxu0 0
        %2498 = vmatpush1.bf16.msra.mxu0 0
        %2499 = vmatprep.subr.bf16.mxu0 0
        %2500 = vmatpush1.bf16.msra.mxu0 0
        %2501 = vmatprep.subr.bf16.mxu0 0
        %2502 = vmatpush1.bf16.msra.mxu0 0
        %2503 = vmatprep.subr.bf16.mxu0 0
        %2504 = vmatpush1.bf16.msra.mxu0 0
        %2505 = vmatprep.subr.bf16.mxu0 0
        %2506 = vmatpush1.bf16.msra.mxu0 0
        %2507 = vmatprep.subr.bf16.mxu0 0
        %2508 = vmatpush1.bf16.msra.mxu0 0
        %2509 = vmatprep.subr.bf16.mxu0 0
        %2510 = vmatpush1.bf16.msra.mxu0 0
        %2511 = vmatprep.mubr.bf16.mxu0 0
        %2512 = vmatmul.mubr.bf16.gmra.mrb[0].mxu0 %v2474
        %v2513 = vpop.f32.mrb[0].mxu0
        %v2514 = vadd.f32 0.0, %v2513
        %v2515 = vpop.f32.mrb[0].mxu0
        %v2516 = vpop.f32.mrb[0].mxu0
        %v2517 = vpop.f32.mrb[0].mxu0
        %2518 = vdwg.mxu0
        %v2520 = vsel %vm1213, %v2466, 0
        %v2523 = vsel %vm1445, %v2470, 0
        %2525 = vmatprep.subr.bf16.mxu0 0
        %2526 = vmatpush1.bf16.msra.mxu0 %v2523
        %2527 = vmatprep.subr.bf16.mxu0 0
        %2528 = vmatpush1.bf16.msra.mxu0 0
        %2529 = vmatprep.subr.bf16.mxu0 0
        %2530 = vmatpush1.bf16.msra.mxu0 0
        %2531 = vmatprep.subr.bf16.mxu0 0
        %2532 = vmatpush1.bf16.msra.mxu0 0
        %2533 = vmatprep.subr.bf16.mxu0 0
        %2534 = vmatpush1.bf16.msra.mxu0 0
        %2535 = vmatprep.subr.bf16.mxu0 0
        %2536 = vmatpush1.bf16.msra.mxu0 0
        %2537 = vmatprep.subr.bf16.mxu0 0
        %2538 = vmatpush1.bf16.msra.mxu0 0
        %2539 = vmatprep.subr.bf16.mxu0 0
        %2540 = vmatpush1.bf16.msra.mxu0 0
        %2541 = vmatprep.subr.bf16.mxu0 0
        %2542 = vmatpush1.bf16.msra.mxu0 0
        %2543 = vmatprep.subr.bf16.mxu0 0
        %2544 = vmatpush1.bf16.msra.mxu0 0
        %2545 = vmatprep.subr.bf16.mxu0 0
        %2546 = vmatpush1.bf16.msra.mxu0 0
        %2547 = vmatprep.subr.bf16.mxu0 0
        %2548 = vmatpush1.bf16.msra.mxu0 0
        %2549 = vmatprep.subr.bf16.mxu0 0
        %2550 = vmatpush1.bf16.msra.mxu0 0
        %2551 = vmatprep.subr.bf16.mxu0 0
        %2552 = vmatpush1.bf16.msra.mxu0 0
        %2553 = vmatprep.subr.bf16.mxu0 0
        %2554 = vmatpush1.bf16.msra.mxu0 0
        %2555 = vmatprep.subr.bf16.mxu0 0
        %2556 = vmatpush1.bf16.msra.mxu0 0
        %2557 = vmatprep.mubr.bf16.mxu0 0
        %2558 = vmatmul.mubr.bf16.gmra.mrb[0].mxu0 %v2520
        %v2559 = vpop.f32.mrb[0].mxu0
        %v2560 = vadd.f32 0.0, %v2559
        %v2561 = vpop.f32.mrb[0].mxu0
        %v2562 = vpop.f32.mrb[0].mxu0
        %v2563 = vpop.f32.mrb[0].mxu0
        %2564 = vdwg.mxu0
        %v2566 = vsel %vm1213, %v2467, 0
        %v2569 = vsel %vm1445, %v2471, 0
        %2571 = vmatprep.subr.bf16.mxu0 0
        %2572 = vmatpush1.bf16.msra.mxu0 %v2569
        %2573 = vmatprep.subr.bf16.mxu0 0
        %2574 = vmatpush1.bf16.msra.mxu0 0
        %2575 = vmatprep.subr.bf16.mxu0 0
        %2576 = vmatpush1.bf16.msra.mxu0 0
        %2577 = vmatprep.subr.bf16.mxu0 0
        %2578 = vmatpush1.bf16.msra.mxu0 0
        %2579 = vmatprep.subr.bf16.mxu0 0
        %2580 = vmatpush1.bf16.msra.mxu0 0
        %2581 = vmatprep.subr.bf16.mxu0 0
        %2582 = vmatpush1.bf16.msra.mxu0 0
        %2583 = vmatprep.subr.bf16.mxu0 0
        %2584 = vmatpush1.bf16.msra.mxu0 0
        %2585 = vmatprep.subr.bf16.mxu0 0
        %2586 = vmatpush1.bf16.msra.mxu0 0
        %2587 = vmatprep.subr.bf16.mxu0 0
        %2588 = vmatpush1.bf16.msra.mxu0 0
        %2589 = vmatprep.subr.bf16.mxu0 0
        %2590 = vmatpush1.bf16.msra.mxu0 0
        %2591 = vmatprep.subr.bf16.mxu0 0
        %2592 = vmatpush1.bf16.msra.mxu0 0
        %2593 = vmatprep.subr.bf16.mxu0 0
        %2594 = vmatpush1.bf16.msra.mxu0 0
        %2595 = vmatprep.subr.bf16.mxu0 0
        %2596 = vmatpush1.bf16.msra.mxu0 0
        %2597 = vmatprep.subr.bf16.mxu0 0
        %2598 = vmatpush1.bf16.msra.mxu0 0
        %2599 = vmatprep.subr.bf16.mxu0 0
        %2600 = vmatpush1.bf16.msra.mxu0 0
        %2601 = vmatprep.subr.bf16.mxu0 0
        %2602 = vmatpush1.bf16.msra.mxu0 0
        %2603 = vmatprep.mubr.bf16.mxu0 0
        %2604 = vmatmul.mubr.bf16.gmra.mrb[0].mxu0 %v2566
        %v2605 = vpop.f32.mrb[0].mxu0
        %v2606 = vadd.f32 0.0, %v2605
        %v2607 = vpop.f32.mrb[0].mxu0
        %v2608 = vpop.f32.mrb[0].mxu0
        %v2609 = vpop.f32.mrb[0].mxu0
        %2610 = vdwg.mxu0
        %v2612 = vsel %vm1213, %v2468, 0
        %v2615 = vsel %vm1445, %v2472, 0
        %2617 = vmatprep.subr.bf16.mxu0 0
        %2618 = vmatpush1.bf16.msra.mxu0 %v2615
        %2619 = vmatprep.subr.bf16.mxu0 0
        %2620 = vmatpush1.bf16.msra.mxu0 0
        %2621 = vmatprep.subr.bf16.mxu0 0
        %2622 = vmatpush1.bf16.msra.mxu0 0
        %2623 = vmatprep.subr.bf16.mxu0 0
        %2624 = vmatpush1.bf16.msra.mxu0 0
        %2625 = vmatprep.subr.bf16.mxu0 0
        %2626 = vmatpush1.bf16.msra.mxu0 0
        %2627 = vmatprep.subr.bf16.mxu0 0
        %2628 = vmatpush1.bf16.msra.mxu0 0
        %2629 = vmatprep.subr.bf16.mxu0 0
        %2630 = vmatpush1.bf16.msra.mxu0 0
        %2631 = vmatprep.subr.bf16.mxu0 0
        %2632 = vmatpush1.bf16.msra.mxu0 0
        %2633 = vmatprep.subr.bf16.mxu0 0
        %2634 = vmatpush1.bf16.msra.mxu0 0
        %2635 = vmatprep.subr.bf16.mxu0 0
        %2636 = vmatpush1.bf16.msra.mxu0 0
        %2637 = vmatprep.subr.bf16.mxu0 0
        %2638 = vmatpush1.bf16.msra.mxu0 0
        %2639 = vmatprep.subr.bf16.mxu0 0
        %2640 = vmatpush1.bf16.msra.mxu0 0
        %2641 = vmatprep.subr.bf16.mxu0 0
        %2642 = vmatpush1.bf16.msra.mxu0 0
        %2643 = vmatprep.subr.bf16.mxu0 0
        %2644 = vmatpush1.bf16.msra.mxu0 0
        %2645 = vmatprep.subr.bf16.mxu0 0
        %2646 = vmatpush1.bf16.msra.mxu0 0
        %2647 = vmatprep.subr.bf16.mxu0 0
        %2648 = vmatpush1.bf16.msra.mxu0 0
        %2649 = vmatprep.mubr.bf16.mxu0 0
        %2650 = vmatmul.mubr.bf16.gmra.mrb[0].mxu0 %v2612
        %v2651 = vpop.f32.mrb[0].mxu0
        %v2652 = vadd.f32 0.0, %v2651
        %v2653 = vpop.f32.mrb[0].mxu0
        %v2654 = vpop.f32.mrb[0].mxu0
        %v2655 = vpop.f32.mrb[0].mxu0
        %2656 = vdwg.mxu0
        %v2657 = vrcp.pop %v2455
        %v2658 = vrcp.pop %v2458
        %v2659 = vrcp.pop %v2461
        %v2660 = vrcp.pop %v2464
        %v2661 = vmul.f32 %v2514, %v2657
        %v2662 = vmul.f32 %v2560, %v2658
        %v2663 = vmul.f32 %v2606, %v2659
        %v2664 = vmul.f32 %v2652, %v2660
        %v2665 = vcombine.low %v2661, %v2663
        %v2666 = vcombine.high %v2661, %v2663
        %v2668 = vunpack.c.l.s4 1983009808
        %v2669 = vunpack.c.0.s8 %v2668
        %v2670 = vlaneseq
        %v2671 = vshrl.u32 %v2670, 7
        %v2672 = vsub.s32 %v2669, %v2671
        %v2673 = vrot.slane %v2665, %v2672
        %v2675 = vunpack.c.l.s4 1983009808
        %v2676 = vunpack.c.0.s8 %v2675
        %v2677 = vlaneseq
        %v2678 = vshrl.u32 %v2677, 7
        %v2679 = vsub.s32 %v2676, %v2678
        %v2680 = vrot.slane %v2666, %v2679
        %v2681 = vcombine.low %v2662, %v2664
        %v2682 = vcombine.high %v2662, %v2664
        %v2684 = vunpack.c.l.s4 1983009808
        %v2685 = vunpack.c.0.s8 %v2684
        %v2686 = vlaneseq
        %v2687 = vshrl.u32 %v2686, 7
        %v2688 = vsub.s32 %v2685, %v2687
        %v2689 = vrot.slane %v2681, %v2688
        %v2691 = vunpack.c.l.s4 1983009808
        %v2692 = vunpack.c.0.s8 %v2691
        %v2693 = vlaneseq
        %v2694 = vshrl.u32 %v2693, 7
        %v2695 = vsub.s32 %v2692, %v2694
        %v2696 = vrot.slane %v2682, %v2695
        %v2697 = vcombine.low %v2673, %v2689
        %v2698 = vcombine.high %v2673, %v2689
        %v2700 = vunpack.c.l.s4 1934713408
        %v2701 = vunpack.c.0.s8 %v2700
        %v2702 = vlaneseq
        %v2703 = vshrl.u32 %v2702, 7
        %v2704 = vsub.s32 %v2701, %v2703
        %v2705 = vrot.slane %v2697, %v2704
        %v2707 = vunpack.c.l.s4 1934713408
        %v2708 = vunpack.c.0.s8 %v2707
        %v2709 = vlaneseq
        %v2710 = vshrl.u32 %v2709, 7
        %v2711 = vsub.s32 %v2708, %v2710
        %v2712 = vrot.slane %v2698, %v2711
        %v2713 = vcombine.low %v2680, %v2696
        %v2714 = vcombine.high %v2680, %v2696
        %v2716 = vunpack.c.l.s4 1934713408
        %v2717 = vunpack.c.0.s8 %v2716
        %v2718 = vlaneseq
        %v2719 = vshrl.u32 %v2718, 7
        %v2720 = vsub.s32 %v2717, %v2719
        %v2721 = vrot.slane %v2713, %v2720
        %v2723 = vunpack.c.l.s4 1934713408
        %v2724 = vunpack.c.0.s8 %v2723
        %v2725 = vlaneseq
        %v2726 = vshrl.u32 %v2725, 7
        %v2727 = vsub.s32 %v2724, %v2726
        %v2728 = vrot.slane %v2714, %v2727
        %v2729 = vcombine.high %v2705, 0.0
        %v2730 = vcombine.high %v2712, 0.0
        %v2731 = vcombine.high %v2721, 0.0
        %v2732 = vcombine.high %v2728, 0.0
        %v2733 = vcombine.low %v2705, %v2712
        %v2735 = vunpack.c.l.s4 1983009808
        %v2736 = vunpack.c.0.s8 %v2735
        %v2737 = vlaneseq
        %v2738 = vshrl.u32 %v2737, 7
        %v2739 = vsub.s32 %v2736, %v2738
        %v2740 = vrot.slane %v2733, %v2739
        %v2741 = vcombine.low %v2729, %v2730
        %v2743 = vunpack.c.l.s4 1983009808
        %v2744 = vunpack.c.0.s8 %v2743
        %v2745 = vlaneseq
        %v2746 = vshrl.u32 %v2745, 7
        %v2747 = vsub.s32 %v2744, %v2746
        %v2748 = vrot.slane %v2741, %v2747
        %v2749 = vcombine.low %v2721, %v2728
        %v2751 = vunpack.c.l.s4 1983009808
        %v2752 = vunpack.c.0.s8 %v2751
        %v2753 = vlaneseq
        %v2754 = vshrl.u32 %v2753, 7
        %v2755 = vsub.s32 %v2752, %v2754
        %v2756 = vrot.slane %v2749, %v2755
        %v2757 = vcombine.low %v2731, %v2732
        %v2759 = vunpack.c.l.s4 1983009808
        %v2760 = vunpack.c.0.s8 %v2759
        %v2761 = vlaneseq
        %v2762 = vshrl.u32 %v2761, 7
        %v2763 = vsub.s32 %v2760, %v2762
        %v2764 = vrot.slane %v2757, %v2763
        %v2765 = vcombine.low %v2740, %v2748
        %v2766 = vcombine.high %v2740, %v2748
        %v2768 = vunpack.c.l.s4 1934713408
        %v2769 = vunpack.c.0.s8 %v2768
        %v2770 = vlaneseq
        %v2771 = vshrl.u32 %v2770, 7
        %v2772 = vsub.s32 %v2769, %v2771
        %v2773 = vrot.slane %v2765, %v2772
        %v2775 = vunpack.c.l.s4 1934713408
        %v2776 = vunpack.c.0.s8 %v2775
        %v2777 = vlaneseq
        %v2778 = vshrl.u32 %v2777, 7
        %v2779 = vsub.s32 %v2776, %v2778
        %v2780 = vrot.slane %v2766, %v2779
        %v2781 = vcombine.low %v2756, %v2764
        %v2782 = vcombine.high %v2756, %v2764
        %v2784 = vunpack.c.l.s4 1934713408
        %v2785 = vunpack.c.0.s8 %v2784
        %v2786 = vlaneseq
        %v2787 = vshrl.u32 %v2786, 7
        %v2788 = vsub.s32 %v2785, %v2787
        %v2789 = vrot.slane %v2781, %v2788
        %v2791 = vunpack.c.l.s4 1934713408
        %v2792 = vunpack.c.0.s8 %v2791
        %v2793 = vlaneseq
        %v2794 = vshrl.u32 %v2793, 7
        %v2795 = vsub.s32 %v2792, %v2794
        %v2796 = vrot.slane %v2782, %v2795
        %v2797 = vcombine.low %v2773, %v2789
        %v2798 = vcombine.high %v2773, %v2789
        %v2799 = vcombine.low %v2780, %v2796
        %v2800 = vcombine.high %v2780, %v2796
        %2802 = vrot.lane.b32.xlu0 %v2798, 8
        %v2803 = vpop.permute.xlu0 %2802
        %2806 = vrot.lane.b32.xlu0 %v2799, 16
        %v2807 = vpop.permute.xlu0 %2806
        %2810 = vrot.lane.b32.xlu0 %v2800, 24
        %v2811 = vpop.permute.xlu0 %2810
        %v2813 = vsel %vm1213, %v2797, %v2803
        %v2814 = vsel %vm1784, %v2813, %v2807
        %v2815 = vsel %vm1786, %v2814, %v2811
        %v2816 = vld [vmem:[%s586] sm:$0xf]
        %v2817 = vld [vmem:[%s586 + $0x4] sm:$0xf]
        %v2818 = vld [vmem:[%s586 + $0x8] sm:$0xf]
        %v2819 = vld [vmem:[%s586 + $0xc] sm:$0xf]
        %v2820 = vpack.c.bf16 %v2815, %v1787
        %v2825 = vunpack.c.l.b16 %v2816
        %v2826 = vunpack.c.l.b16 %v2817
        %v2827 = vunpack.c.l.b16 %v2818
        %v2828 = vunpack.c.l.b16 %v2819
        %v2829 = vpack.c.b16 %v2826, %v2825
        %v2830 = vpack.c.b16 %v2828, %v2827
        %v2834 = vsel %vm634, %v2820, 0
        %2836 = vmatprep.subr.bf16.mxu0 0
        %2837 = vmatpush1.bf16.msra.mxu0 %v2829
        %2838 = vmatprep.subr.bf16.mxu0 0
        %2839 = vmatpush1.bf16.msra.mxu0 %v2830
        %2840 = vmatprep.subr.bf16.mxu0 0
        %2841 = vmatpush1.bf16.msra.mxu0 0
        %2842 = vmatprep.subr.bf16.mxu0 0
        %2843 = vmatpush1.bf16.msra.mxu0 0
        %2844 = vmatprep.subr.bf16.mxu0 0
        %2845 = vmatpush1.bf16.msra.mxu0 0
        %2846 = vmatprep.subr.bf16.mxu0 0
        %2847 = vmatpush1.bf16.msra.mxu0 0
        %2848 = vmatprep.subr.bf16.mxu0 0
        %2849 = vmatpush1.bf16.msra.mxu0 0
        %2850 = vmatprep.subr.bf16.mxu0 0
        %2851 = vmatpush1.bf16.msra.mxu0 0
        %2852 = vmatprep.subr.bf16.mxu0 0
        %2853 = vmatpush1.bf16.msra.mxu0 0
        %2854 = vmatprep.subr.bf16.mxu0 0
        %2855 = vmatpush1.bf16.msra.mxu0 0
        %2856 = vmatprep.subr.bf16.mxu0 0
        %2857 = vmatpush1.bf16.msra.mxu0 0
        %2858 = vmatprep.subr.bf16.mxu0 0
        %2859 = vmatpush1.bf16.msra.mxu0 0
        %2860 = vmatprep.subr.bf16.mxu0 0
        %2861 = vmatpush1.bf16.msra.mxu0 0
        %2862 = vmatprep.subr.bf16.mxu0 0
        %2863 = vmatpush1.bf16.msra.mxu0 0
        %2864 = vmatprep.subr.bf16.mxu0 0
        %2865 = vmatpush1.bf16.msra.mxu0 0
        %2866 = vmatprep.subr.bf16.mxu0 0
        %2867 = vmatpush1.bf16.msra.mxu0 0
        %2868 = vmatprep.mubr.bf16.mxu0 0
        %2869 = vmatmul.mubr.bf16.gmra.mrb[0].mxu0 %v2834
        %v2870 = vpop.f32.mrb[0].mxu0
        %v2871 = vadd.f32 0.0, %v2870
        %v2872 = vpop.f32.mrb[0].mxu0
        %v2873 = vpop.f32.mrb[0].mxu0
        %v2874 = vadd.f32 0.0, %v2873
        %v2875 = vpop.f32.mrb[0].mxu0
        %2876 = vdwg.mxu0
        %v2877 = vadd.f32 %v630, %v2871
        %v2878 = vadd.f32 %v631, %v2874
        %v2879 = vld [vmem:[%s589] sm:$0x1]
        %v2881 = vlaneseq
        %v2882 = vshrl.u32 %v2881, 7
        %v2883 = vsub.s32 0, %v2882
        %v2884 = vrot.slane %v2879, %v2883
        %v2886 = vadd.f32 %v2877, %v2884
        %v2887 = vadd.f32 %v2878, %v2884
        %v2888 = vld [vmem:[%s592] sm:$0x1]
        %v2889 = vld [vmem:[%s595] sm:$0x1]
        %v2890 = vsel %vm634, %v2886, 0.0
        %2891 = vadd.xlane.f32.xlu0 %v2890
        %v2892 = vpop.xlane.xlu0 %2891
        %v2893 = vsel %vm634, %v2887, 0.0
        %2894 = vadd.xlane.f32.xlu0 %v2893
        %v2895 = vpop.xlane.xlu0 %2894
        %v2896 = vmul.f32 %v2892, %v641
        %v2897 = vmul.f32 %v2895, %v641
        %v2898 = vsub.f32 %v2886, %v2896
        %v2899 = vsub.f32 %v2887, %v2897
        %v2900 = vmul.f32 %v2898, %v2898
        %v2901 = vmul.f32 %v2899, %v2899
        %v2902 = vsel %vm634, %v2900, 0.0
        %2903 = vadd.xlane.f32.xlu0 %v2902
        %v2904 = vpop.xlane.xlu0 %2903
        %v2905 = vsel %vm634, %v2901, 0.0
        %2906 = vadd.xlane.f32.xlu0 %v2905
        %v2907 = vpop.xlane.xlu0 %2906
        %v2908 = vmul.f32 %v2904, %v641
        %v2909 = vmul.f32 %v2907, %v641
        %v2910 = vadd.f32 %v2908, 1e-05
        %v2911 = vadd.f32 %v2909, 1e-05
        %v2912 = vrsqrt.pop %v2910
        %v2913 = vmul.f32 %v2910, %v2912
        %vm2914 = vcmp.eq.f32.partialorder %v2910, inf
        %v2915 = vsel %vm2914, %v2910, %v2913
        %vm2916 = vcmp.eq.f32.partialorder %v2910, 0.0
        %v2917 = vand.u32 %v2910, 2147483648
        %v2918 = vsel %vm2916, %v2917, %v2915
        %v2919 = vrsqrt.pop %v2911
        %v2920 = vmul.f32 %v2911, %v2919
        %vm2921 = vcmp.eq.f32.partialorder %v2911, inf
        %v2922 = vsel %vm2921, %v2911, %v2920
        %vm2923 = vcmp.eq.f32.partialorder %v2911, 0.0
        %v2924 = vand.u32 %v2911, 2147483648
        %v2925 = vsel %vm2923, %v2924, %v2922
        %v2926 = vrcp.pop %v2918
        %v2927 = vmul.f32 %v2898, %v2926
        %v2928 = vrcp.pop %v2925
        %v2929 = vmul.f32 %v2899, %v2928
        %v2931 = vlaneseq
        %v2932 = vshrl.u32 %v2931, 7
        %v2933 = vsub.s32 0, %v2932
        %v2934 = vrot.slane %v2888, %v2933
        %v2936 = vmul.f32 %v2934, %v2927
        %v2937 = vmul.f32 %v2934, %v2929
        %v2939 = vlaneseq
        %v2940 = vshrl.u32 %v2939, 7
        %v2941 = vsub.s32 0, %v2940
        %v2942 = vrot.slane %v2889, %v2941
        %v2944 = vadd.f32 %v2936, %v2942
        %v2945 = vadd.f32 %v2937, %v2942
        %v2946 = vld [vmem:[%s600] sm:$0xf]
        %v2947 = vld [vmem:[%s600 + $0x4] sm:$0xf]
        %v2948 = vld [vmem:[%s600 + $0x8] sm:$0xf]
        %v2949 = vld [vmem:[%s600 + $0xc] sm:$0xf]
        %v2950 = vpack.c.bf16 %v2945, %v2944
        %v2951 = vld [vmem:[%s603] sm:$0x1]
        %v2953 = vlaneseq
        %v2954 = vshrl.u32 %v2953, 7
        %v2955 = vsub.s32 0, %v2954
        %v2956 = vrot.slane %v2951, %v2955
        %v2962 = vunpack.c.l.b16 %v2946
        %v2963 = vunpack.c.l.b16 %v2947
        %v2964 = vunpack.c.l.b16 %v2948
        %v2965 = vunpack.c.l.b16 %v2949
        %v2966 = vpack.c.b16 %v2963, %v2962
        %v2967 = vpack.c.b16 %v2965, %v2964
        %v2971 = vsel %vm634, %v2950, 0
        %2973 = vmatprep.subr.bf16.mxu0 0
        %2974 = vmatpush1.bf16.msra.mxu0 %v2966
        %2975 = vmatprep.subr.bf16.mxu0 0
        %2976 = vmatpush1.bf16.msra.mxu0 %v2967
        %2977 = vmatprep.subr.bf16.mxu0 0
        %2978 = vmatpush1.bf16.msra.mxu0 0
        %2979 = vmatprep.subr.bf16.mxu0 0
        %2980 = vmatpush1.bf16.msra.mxu0 0
        %2981 = vmatprep.subr.bf16.mxu0 0
        %2982 = vmatpush1.bf16.msra.mxu0 0
        %2983 = vmatprep.subr.bf16.mxu0 0
        %2984 = vmatpush1.bf16.msra.mxu0 0
        %2985 = vmatprep.subr.bf16.mxu0 0
        %2986 = vmatpush1.bf16.msra.mxu0 0
        %2987 = vmatprep.subr.bf16.mxu0 0
        %2988 = vmatpush1.bf16.msra.mxu0 0
        %2989 = vmatprep.subr.bf16.mxu0 0
        %2990 = vmatpush1.bf16.msra.mxu0 0
        %2991 = vmatprep.subr.bf16.mxu0 0
        %2992 = vmatpush1.bf16.msra.mxu0 0
        %2993 = vmatprep.subr.bf16.mxu0 0
        %2994 = vmatpush1.bf16.msra.mxu0 0
        %2995 = vmatprep.subr.bf16.mxu0 0
        %2996 = vmatpush1.bf16.msra.mxu0 0
        %2997 = vmatprep.subr.bf16.mxu0 0
        %2998 = vmatpush1.bf16.msra.mxu0 0
        %2999 = vmatprep.subr.bf16.mxu0 0
        %3000 = vmatpush1.bf16.msra.mxu0 0
        %3001 = vmatprep.subr.bf16.mxu0 0
        %3002 = vmatpush1.bf16.msra.mxu0 0
        %3003 = vmatprep.subr.bf16.mxu0 0
        %3004 = vmatpush1.bf16.msra.mxu0 0
        %3005 = vmatprep.mubr.bf16.mxu0 0
        %3006 = vmatmul.mubr.bf16.gmra.mrb[0].mxu0 %v2971
        %v3007 = vpop.f32.mrb[0].mxu0
        %v3008 = vadd.f32 %v2956, %v3007
        %v3009 = vpop.f32.mrb[0].mxu0
        %v3010 = vpop.f32.mrb[0].mxu0
        %v3011 = vadd.f32 %v2956, %v3010
        %v3012 = vpop.f32.mrb[0].mxu0
        %3013 = vdwg.mxu0
        %v3014 = vmul.f32 %v3008, 0.5
        %v3015 = vmul.f32 %v3011, 0.5
        %v3016 = vmul.f32 %v3008, %v3008
        %v3017 = vmul.f32 %v3011, %v3011
        %v3018 = vmul.f32 %v3016, %v3008
        %v3019 = vmul.f32 %v3017, %v3011
        %v3020 = vmul.f32 %v3018, 0.044715
        %v3021 = vmul.f32 %v3019, 0.044715
        %v3022 = vadd.f32 %v3008, %v3020
        %v3023 = vadd.f32 %v3011, %v3021
        %v3024 = vmul.f32 %v3022, 0.7978845
        %v3025 = vmul.f32 %v3023, 0.7978845
        %v3026 = vtanh.pop %v3024
        %v3027 = vtanh.pop %v3025
        %v3028 = vadd.f32 %v3026, 1.0
        %v3029 = vadd.f32 %v3027, 1.0
        %v3030 = vmul.f32 %v3014, %v3028
        %v3031 = vmul.f32 %v3015, %v3029
        %v3032 = vld [vmem:[%s608] sm:$0xf]
        %v3033 = vld [vmem:[%s608 + $0x4] sm:$0xf]
        %v3034 = vld [vmem:[%s608 + $0x8] sm:$0xf]
        %v3035 = vld [vmem:[%s608 + $0xc] sm:$0xf]
        %v3036 = vld [vmem:[%s608 + $0x10] sm:$0xf]
        %v3037 = vld [vmem:[%s608 + $0x14] sm:$0xf]
        %v3038 = vld [vmem:[%s608 + $0x18] sm:$0xf]
        %v3039 = vld [vmem:[%s608 + $0x1c] sm:$0xf]
        %v3040 = vld [vmem:[%s608 + $0x20] sm:$0xf]
        %v3041 = vld [vmem:[%s608 + $0x24] sm:$0xf]
        %v3042 = vld [vmem:[%s608 + $0x28] sm:$0xf]
        %v3043 = vld [vmem:[%s608 + $0x2c] sm:$0xf]
        %v3044 = vld [vmem:[%s608 + $0x30] sm:$0xf]
        %v3045 = vld [vmem:[%s608 + $0x34] sm:$0xf]
        %v3046 = vld [vmem:[%s608 + $0x38] sm:$0xf]
        %v3047 = vld [vmem:[%s608 + $0x3c] sm:$0xf]
        %v3048 = vpack.c.bf16 %v3031, %v3030
        %v3065 = vunpack.c.l.b16 %v3032
        %v3066 = vunpack.c.l.b16 %v3033
        %v3067 = vunpack.c.l.b16 %v3034
        %v3068 = vunpack.c.l.b16 %v3035
        %v3069 = vunpack.c.l.b16 %v3036
        %v3070 = vunpack.c.l.b16 %v3037
        %v3071 = vunpack.c.l.b16 %v3038
        %v3072 = vunpack.c.l.b16 %v3039
        %v3073 = vunpack.c.l.b16 %v3040
        %v3074 = vunpack.c.l.b16 %v3041
        %v3075 = vunpack.c.l.b16 %v3042
        %v3076 = vunpack.c.l.b16 %v3043
        %v3077 = vunpack.c.l.b16 %v3044
        %v3078 = vunpack.c.l.b16 %v3045
        %v3079 = vunpack.c.l.b16 %v3046
        %v3080 = vunpack.c.l.b16 %v3047
        %v3081 = vpack.c.b16 %v3066, %v3065
        %v3082 = vpack.c.b16 %v3068, %v3067
        %v3083 = vpack.c.b16 %v3070, %v3069
        %v3084 = vpack.c.b16 %v3072, %v3071
        %v3085 = vpack.c.b16 %v3074, %v3073
        %v3086 = vpack.c.b16 %v3076, %v3075
        %v3087 = vpack.c.b16 %v3078, %v3077
        %v3088 = vpack.c.b16 %v3080, %v3079
        %3097 = vmatprep.subr.bf16.mxu0 0
        %3098 = vmatpush1.bf16.msra.mxu0 %v3081
        %3099 = vmatprep.subr.bf16.mxu0 0
        %3100 = vmatpush1.bf16.msra.mxu0 %v3082
        %3101 = vmatprep.subr.bf16.mxu0 0
        %3102 = vmatpush1.bf16.msra.mxu0 %v3083
        %3103 = vmatprep.subr.bf16.mxu0 0
        %3104 = vmatpush1.bf16.msra.mxu0 %v3084
        %3105 = vmatprep.subr.bf16.mxu0 0
        %3106 = vmatpush1.bf16.msra.mxu0 %v3085
        %3107 = vmatprep.subr.bf16.mxu0 0
        %3108 = vmatpush1.bf16.msra.mxu0 %v3086
        %3109 = vmatprep.subr.bf16.mxu0 0
        %3110 = vmatpush1.bf16.msra.mxu0 %v3087
        %3111 = vmatprep.subr.bf16.mxu0 0
        %3112 = vmatpush1.bf16.msra.mxu0 %v3088
        %3113 = vmatprep.subr.bf16.mxu0 0
        %3114 = vmatpush1.bf16.msra.mxu0 0
        %3115 = vmatprep.subr.bf16.mxu0 0
        %3116 = vmatpush1.bf16.msra.mxu0 0
        %3117 = vmatprep.subr.bf16.mxu0 0
        %3118 = vmatpush1.bf16.msra.mxu0 0
        %3119 = vmatprep.subr.bf16.mxu0 0
        %3120 = vmatpush1.bf16.msra.mxu0 0
        %3121 = vmatprep.subr.bf16.mxu0 0
        %3122 = vmatpush1.bf16.msra.mxu0 0
        %3123 = vmatprep.subr.bf16.mxu0 0
        %3124 = vmatpush1.bf16.msra.mxu0 0
        %3125 = vmatprep.subr.bf16.mxu0 0
        %3126 = vmatpush1.bf16.msra.mxu0 0
        %3127 = vmatprep.subr.bf16.mxu0 0
        %3128 = vmatpush1.bf16.msra.mxu0 0
        %3129 = vmatprep.mubr.bf16.mxu0 0
        %3130 = vmatmul.mubr.bf16.gmra.mrb[0].mxu0 %v3048
        %v3131 = vpop.f32.mrb[0].mxu0
        %v3132 = vadd.f32 0.0, %v3131
        %v3133 = vpop.f32.mrb[0].mxu0
        %v3134 = vpop.f32.mrb[0].mxu0
        %v3135 = vadd.f32 0.0, %v3134
        %v3136 = vpop.f32.mrb[0].mxu0
        %3137 = vdwg.mxu0
        %v3138 = vadd.f32 %v2886, %v3132
        %v3139 = vadd.f32 %v2887, %v3135
        %v3140 = vld [vmem:[%s611] sm:$0x1]
        %v3142 = vlaneseq
        %v3143 = vshrl.u32 %v3142, 7
        %v3144 = vsub.s32 0, %v3143
        %v3145 = vrot.slane %v3140, %v3144
        %v3147 = vadd.f32 %v3138, %v3145
        %v3148 = vadd.f32 %v3139, %v3145
        %3149 = vst.msk [vmem:[#allocation2] sm:$0xff] %vm634, %v3147
        %3150 = vst.msk [vmem:[#allocation2 + $0x8] sm:$0xff] %vm634, %v3148
        %p3151 = scmp.eq.s32.totalorder %s26, 1
        // Predicated region
        $region81: #{tpu_custom_call.1} parent=75 // pred_check
          %p3152 = pneg %p3151
        $region82: #{tpu_custom_call.1} parent=75 // pred_check_branch
          %3154 = sbr.rel (%p3152) target = $region84
        $region83: #{tpu_custom_call.1} parent=75 // pred_region
          %v3155 = vld [vmem:[%s12] sm:$0x1]
          %v3156 = vld [vmem:[%s13] sm:$0x1]
          %v3157 = vsel %vm634, %v3147, 0.0
          %3158 = vadd.xlane.f32.xlu0 %v3157
          %v3159 = vpop.xlane.xlu0 %3158
          %v3160 = vsel %vm634, %v3148, 0.0
          %3161 = vadd.xlane.f32.xlu0 %v3160
          %v3162 = vpop.xlane.xlu0 %3161
          %v3163 = vmul.f32 %v3159, %v641
          %v3164 = vmul.f32 %v3162, %v641
          %v3165 = vsub.f32 %v3147, %v3163
          %v3166 = vsub.f32 %v3148, %v3164
          %v3167 = vmul.f32 %v3165, %v3165
          %v3168 = vmul.f32 %v3166, %v3166
          %v3169 = vsel %vm634, %v3167, 0.0
          %3170 = vadd.xlane.f32.xlu0 %v3169
          %v3171 = vpop.xlane.xlu0 %3170
          %v3172 = vsel %vm634, %v3168, 0.0
          %3173 = vadd.xlane.f32.xlu0 %v3172
          %v3174 = vpop.xlane.xlu0 %3173
          %v3175 = vmul.f32 %v3171, %v641
          %v3176 = vmul.f32 %v3174, %v641
          %v3177 = vadd.f32 %v3175, 1e-05
          %v3178 = vadd.f32 %v3176, 1e-05
          %v3179 = vrsqrt.pop %v3177
          %v3180 = vmul.f32 %v3177, %v3179
          %vm3181 = vcmp.eq.f32.partialorder %v3177, inf
          %v3182 = vsel %vm3181, %v3177, %v3180
          %vm3183 = vcmp.eq.f32.partialorder %v3177, 0.0
          %v3184 = vand.u32 %v3177, 2147483648
          %v3185 = vsel %vm3183, %v3184, %v3182
          %v3186 = vrsqrt.pop %v3178
          %v3187 = vmul.f32 %v3178, %v3186
          %vm3188 = vcmp.eq.f32.partialorder %v3178, inf
          %v3189 = vsel %vm3188, %v3178, %v3187
          %vm3190 = vcmp.eq.f32.partialorder %v3178, 0.0
          %v3191 = vand.u32 %v3178, 2147483648
          %v3192 = vsel %vm3190, %v3191, %v3189
          %v3193 = vrcp.pop %v3185
          %v3194 = vmul.f32 %v3165, %v3193
          %v3195 = vrcp.pop %v3192
          %v3196 = vmul.f32 %v3166, %v3195
          %v3198 = vlaneseq
          %v3199 = vshrl.u32 %v3198, 7
          %v3200 = vsub.s32 0, %v3199
          %v3201 = vrot.slane %v3155, %v3200
          %v3203 = vmul.f32 %v3201, %v3194
          %v3204 = vmul.f32 %v3201, %v3196
          %v3206 = vlaneseq
          %v3207 = vshrl.u32 %v3206, 7
          %v3208 = vsub.s32 0, %v3207
          %v3209 = vrot.slane %v3156, %v3208
          %v3211 = vadd.f32 %v3203, %v3209
          %v3212 = vadd.f32 %v3204, %v3209
          %v3213 = vpack.c.bf16 %v3211, %v3211
          %v3214 = vpack.c.bf16 %v3212, %v3212
          %vm3215 = vcmask 257024
          %3216 = vst.msk [vmem:[#allocation4] sm:$0xf] %vm3215, %v3213
          %3217 = vst.msk [vmem:[#allocation4 + $0x4] sm:$0xf] %vm3215, %v3214
        $region84: #{tpu_custom_call.1} parent=75 // pred_fallthru
          _
        // Predicated region
        $region85: #{tpu_custom_call.1} parent=75 // pred_check
          %p3218 = pneg %p388
        $region86: #{tpu_custom_call.1} parent=75 // pred_check_branch
          %3220 = sbr.rel (%p3218) target = $region88
        $region87: #{tpu_custom_call.1} parent=75 // pred_region
          %s3222 = ssub.s32 128, 128
          %3223 = vsyncadd [#allocation5], %s3222
          %s3224 = sshll.u32 [#allocation4], 4
          %s3225 = int_to_ptr.vmem [resolvable:$true] %s3224
          %3230 = dma.vmem_to_hbm [thread:$0]  %s3225, 128, %s14, [#allocation5], 64, 64, 4
        $region88: #{tpu_custom_call.1} parent=75 // pred_fallthru
          _
        // Predicated region
        $region89: #{tpu_custom_call.1} parent=75 // pred_check
          %p3231 = pneg %p388
        $region90: #{tpu_custom_call.1} parent=75 // pred_check_branch
          %3233 = sbr.rel (%p3231) target = $region92
        $region91: #{tpu_custom_call.1} parent=75 // pred_region
          %3234 = dma.done [#allocation5], 128
        $region92: #{tpu_custom_call.1} parent=75 // pred_fallthru
          _
      $region76: #{tpu_custom_call.1} parent=5 // pred_fallthru
        _
      %p3235 = scmp.le.s32.totalorder 2, %s21
      // Predicated region
      $region93: #{tpu_custom_call.1} parent=5 // pred_check
        %p3236 = pneg %p3235
      $region94: #{tpu_custom_call.1} parent=5 // pred_check_branch
        %3238 = sbr.rel (%p3236) target = $region96
      $region95: #{tpu_custom_call.1} parent=5 // pred_region
        %s3239 = ssub.s32 %s21, 2
      $region96: #{tpu_custom_call.1} parent=5 // pred_fallthru
        _
    $region6: #{tpu_custom_call.1} parent=1 // loop_footer
      %s25 = sadd.s32 1, %s21
    $region7: #{tpu_custom_call.1} parent=1 // loop_footer_branch
      %20 = sbr.rel target = $region3
    $region8: #{tpu_custom_call.1} parent=1 // loop_exit
      _
    %3240 = vsyncpa [#allocation5], 1
    %s3241 = scalar_lea.sflag [#allocation5], 1
    %3242 = vsyncpa %s3241, 1

</llo_original>
